<compile_context>
chip_gen: v7x
topology: tpu7x:2x2x1
jax: 0.10.0
libtpu: 0.0.40
codegen_flags: <defaults>
</compile_context>

<pallas_src>
import numpy as np
import jax
import jax.numpy as jnp
from jax.experimental import pallas as pl
from jax.experimental.pallas import tpu as pltpu

_BN_EPS = 1e-5


def _ccb_kernel(x_ref, w1_ref, b1_ref, w2_ref, b2_ref, o_ref,
                xpad_ref, hpad_ref, p1_ref, p2_ref):
    """Fused CCB block for a (Bt, H, W) tile of images.

    x_ref   : (Bt, H, W, Cin)       bf16 input tile (NHWC)
    w1_ref  : (9*Cin, Cout)         bf16 conv1 weights, rows ordered (ky, kx, ci)
    b1_ref  : (1, Cout)             f32 conv1 bias
    w2_ref  : (9*Cout, Cout)        bf16 conv2 weights with BN scale folded in
    b2_ref  : (1, Cout)             f32 conv2 bias + BN bias (folded)
    o_ref   : (Bt, H, W*Cout)       f32 lane-dense output tile
    xpad_ref: (Bt, H+2, W+2, Cin)   f32 scratch: spatially padded conv1 input
    hpad_ref: (Bt, H+2, W+2, Cout)  f32 scratch: spatially padded conv1 output
    p1_ref  : (Bt*H*W, 9*Cin)       bf16 scratch: conv1 im2col patches
    p2_ref  : (Bt*H*W, 9*Cout)      bf16 scratch: conv2 im2col patches
    """
    Bt, H, W, Cin = x_ref.shape
    Cout = w1_ref.shape[1]
    M = Bt * H * W

    # Zero only the 1-pixel halo each step (the interior is fully overwritten
    # below).  Not gated on program_id: scratch is per-TensorCore under megacore.
    for pad_ref, c in ((xpad_ref, Cin), (hpad_ref, Cout)):
        pad_ref[:, 0:1, :, :] = jnp.zeros((Bt, 1, W + 2, c), jnp.float32)
        pad_ref[:, H + 1:H + 2, :, :] = jnp.zeros((Bt, 1, W + 2, c), jnp.float32)
        pad_ref[:, 1:H + 1, 0:1, :] = jnp.zeros((Bt, H, 1, c), jnp.float32)
        pad_ref[:, 1:H + 1, W + 1:W + 2, :] = jnp.zeros((Bt, H, 1, c), jnp.float32)

    # ---- conv1 (3x3, pad 1): im2col -> one MXU matmul -> bias -> ReLU --------
    xpad_ref[:, 1:H + 1, 1:W + 1, :] = x_ref[...].astype(jnp.float32)
    for k in range(9):
        ky, kx = divmod(k, 3)
        p1_ref[:, k * Cin:(k + 1) * Cin] = (
            xpad_ref[:, ky:ky + H, kx:kx + W, :].astype(jnp.bfloat16)
            .reshape(M, Cin))
    h = jnp.dot(p1_ref[...], w1_ref[...], preferred_element_type=jnp.float32)
    h = jnp.maximum(h + b1_ref[...], 0.0)                         # (M, Cout) f32

    # ---- conv2 (3x3, pad 1) + folded bias/BatchNorm + ReLU -------------------
    hpad_ref[:, 1:H + 1, 1:W + 1, :] = h.reshape(Bt, H, W, Cout)
    for k in range(9):
        ky, kx = divmod(k, 3)
        p2_ref[:, k * Cout:(k + 1) * Cout] = (
            hpad_ref[:, ky:ky + H, kx:kx + W, :].astype(jnp.bfloat16)
            .reshape(M, Cout))
    y = jnp.dot(p2_ref[...], w2_ref[...], preferred_element_type=jnp.float32)
    y = jnp.maximum(y + b2_ref[...], 0.0)                         # (M, Cout) f32

    # ---- lane-dense store: (M, Cout) -> (Bt, H, W*Cout) ----------------------
    y4 = y.reshape(Bt, H, W, Cout)
    o_ref[...] = jnp.concatenate([y4[:, :, w, :] for w in range(W)], axis=-1)


def ccb_forward_nhwc(x_nhwc, w1_hwio, b1, w2_hwio, b2, gamma, beta,
                     run_mean, run_var, *, block_b=None):
    """relu(conv1(x)); relu(bn(conv2(.))), eval-mode BN.  NHWC in / NHWC out."""
    B, H, W, Cin = x_nhwc.shape
    Cout = w1_hwio.shape[-1]

    if block_b is None:
        # Fatten the matmul M dim (= block_b*H*W) while keeping >= 2 grid steps
        # so both TensorCores get work under megacore (v7x).
        block_b = 1
        while (B % (block_b * 2) == 0 and B // (block_b * 2) >= 2
               and block_b * H * W < 1024):
            block_b *= 2
    assert B % block_b == 0, (B, block_b)
    bt = block_b

    # bf16 MXU inputs, f32 accumulation / post-matmul math.
    x = x_nhwc.astype(jnp.bfloat16)
    w1_2d = w1_hwio.reshape(9 * Cin, Cout).astype(jnp.bfloat16)
    b1_2d = b1.reshape(1, Cout).astype(jnp.float32)

    # Fold conv2 bias + eval-mode BatchNorm into the conv2 weights / one bias:
    #   bn(z) = z*s + (beta - mean*s),   s = gamma / sqrt(var + eps)
    #   bn(conv2(h) + b2) = conv2_{w2*s}(h) + (b2*s + beta - mean*s)
    s = gamma.astype(jnp.float32) / jnp.sqrt(run_var.astype(jnp.float32) + _BN_EPS)
    w2f = (w2_hwio.astype(jnp.float32) * s[None, None, None, :]
           ).reshape(9 * Cout, Cout).astype(jnp.bfloat16)
    b2f = (b2.astype(jnp.float32) * s + beta.astype(jnp.float32)
           - run_mean.astype(jnp.float32) * s).reshape(1, Cout)

    flops = 2 * B * H * W * 9 * (Cin * Cout + Cout * Cout)
    bytes_accessed = (2 * x.size + 2 * (w1_2d.size + w2f.size)
                      + 4 * (b1_2d.size + b2f.size) + 4 * B * H * W * Cout)

    y = pl.pallas_call(
        _ccb_kernel,
        out_shape=jax.ShapeDtypeStruct((B, H, W * Cout), jnp.float32),
        grid_spec=pltpu.PrefetchScalarGridSpec(
            num_scalar_prefetch=0,
            grid=(B // bt,),
            in_specs=[
                pl.BlockSpec((bt, H, W, Cin), lambda b: (b, 0, 0, 0)),
                pl.BlockSpec((9 * Cin, Cout), lambda b: (0, 0)),
                pl.BlockSpec((1, Cout), lambda b: (0, 0)),
                pl.BlockSpec((9 * Cout, Cout), lambda b: (0, 0)),
                pl.BlockSpec((1, Cout), lambda b: (0, 0)),
            ],
            out_specs=pl.BlockSpec((bt, H, W * Cout), lambda b: (b, 0, 0)),
            scratch_shapes=[
                pltpu.VMEM((bt, H + 2, W + 2, Cin), jnp.float32),
                pltpu.VMEM((bt, H + 2, W + 2, Cout), jnp.float32),
                pltpu.VMEM((bt * H * W, 9 * Cin), jnp.bfloat16),
                pltpu.VMEM((bt * H * W, 9 * Cout), jnp.bfloat16),
            ],
        ),
        compiler_params=pltpu.CompilerParams(
            dimension_semantics=("parallel",),
            # 32 MiB fits every generation (v7x physical VMEM is 64 MiB).
            vmem_limit_bytes=32 * 1024 * 1024,
        ),
        cost_estimate=pl.CostEstimate(
            flops=flops, transcendentals=0, bytes_accessed=bytes_accessed),
    )(x, w1_2d, b1_2d, w2f, b2f)

    return y.reshape(B, H, W, Cout)


def ccb_forward(x_nchw, w1_hwio, b1, w2_hwio, b2, gamma, beta, run_mean, run_var):
    """NCHW compatibility wrapper matching the PyTorch module's layout.

    Note: the NCHW<->NHWC transposes cost an extra HBM round-trip of the
    activations; prefer ccb_forward_nhwc at the API boundary when possible.
    """
    x_nhwc = jnp.transpose(x_nchw, (0, 2, 3, 1))
    y_nhwc = ccb_forward_nhwc(x_nhwc, w1_hwio, b1, w2_hwio, b2,
                              gamma, beta, run_mean, run_var)
    return jnp.transpose(y_nhwc, (0, 3, 1, 2))


def _reference_forward(x_nchw, w1_hwio, b1, w2_hwio, b2, gamma, beta,
                       run_mean, run_var):
    """Pure-JAX f32 reference (eval-mode BN) for correctness checking."""
    dn = ('NHWC', 'HWIO', 'NHWC')
    x = jnp.transpose(x_nchw, (0, 2, 3, 1)).astype(jnp.float32)
    y = jax.lax.conv_general_dilated(x, w1_hwio, (1, 1), 'SAME',
                                     dimension_numbers=dn,
                                     precision=jax.lax.Precision.HIGHEST)
    y = jax.nn.relu(y + b1)
    y = jax.lax.conv_general_dilated(y, w2_hwio, (1, 1), 'SAME',
                                     dimension_numbers=dn,
                                     precision=jax.lax.Precision.HIGHEST)
    y = y + b2
    y = (y - run_mean) / jnp.sqrt(run_var + _BN_EPS) * gamma + beta
    y = jax.nn.relu(y)
    return jnp.transpose(y, (0, 3, 1, 2))


if __name__ == "__main__":
    B, Cin, Cout, H, W = 2, 4, 8, 16, 16

    keys = jax.random.split(jax.random.PRNGKey(0), 9)
    x = jax.random.normal(keys[0], (B, Cin, H, W), jnp.float32)
    w1 = 0.25 * jax.random.normal(keys[1], (3, 3, Cin, Cout), jnp.float32)
    b1 = 0.10 * jax.random.normal(keys[2], (Cout,), jnp.float32)
    w2 = 0.25 * jax.random.normal(keys[3], (3, 3, Cout, Cout), jnp.float32)
    b2 = 0.10 * jax.random.normal(keys[4], (Cout,), jnp.float32)
    gamma = 1.0 + 0.1 * jax.random.normal(keys[5], (Cout,), jnp.float32)
    beta = 0.1 * jax.random.normal(keys[6], (Cout,), jnp.float32)
    run_mean = 0.1 * jax.random.normal(keys[7], (Cout,), jnp.float32)
    run_var = 0.5 + jax.nn.softplus(jax.random.normal(keys[8], (Cout,), jnp.float32))

    out = jax.jit(ccb_forward)(x, w1, b1, w2, b2, gamma, beta, run_mean, run_var)
    out = jax.block_until_ready(out)

    ref = _reference_forward(x, w1, b1, w2, b2, gamma, beta, run_mean, run_var)
    assert out.shape == (B, Cout, H, W), out.shape
    # bf16 MXU inputs vs f32 HIGHEST reference -> loosened tolerance.
    np.testing.assert_allclose(np.asarray(out), np.asarray(ref),
                               rtol=5e-2, atol=5e-2)
    print("KERNEL_OK")
</pallas_src>

<mosaic_0001>
module attributes {stable_mosaic.version = 11 : i64} {
  func.func @_ccb_kernel(%arg0: i32, %arg1: memref<1x16x16x4xbf16, #tpu.memory_space<vmem>>, %arg2: memref<36x8xbf16, #tpu.memory_space<vmem>>, %arg3: memref<1x8xf32, #tpu.memory_space<vmem>>, %arg4: memref<72x8xbf16, #tpu.memory_space<vmem>>, %arg5: memref<1x8xf32, #tpu.memory_space<vmem>>, %arg6: memref<1x16x128xf32, #tpu.memory_space<vmem>>, %arg7: memref<1x18x18x4xf32, #tpu.memory_space<vmem>>, %arg8: memref<1x18x18x8xf32, #tpu.memory_space<vmem>>, %arg9: memref<256x36xbf16, #tpu.memory_space<vmem>>, %arg10: memref<256x72xbf16, #tpu.memory_space<vmem>>) attributes {dimension_semantics = [#tpu.dimension_semantics<parallel>], iteration_bounds = array<i64: 2>, scalar_prefetch = 0 : i64, scratch_operands = 4 : i64, tpu.core_type = #tpu.core_type<tc>, window_params = [{transform_indices = @transform_0, window_bounds = array<i64: 1, 16, 16, 4>}, {pipeline_mode = #tpu.pipeline_mode<synchronous>, transform_indices = @transform_1, window_bounds = array<i64: 36, 8>}, {pipeline_mode = #tpu.pipeline_mode<synchronous>, transform_indices = @transform_2, window_bounds = array<i64: 1, 8>}, {pipeline_mode = #tpu.pipeline_mode<synchronous>, transform_indices = @transform_3, window_bounds = array<i64: 72, 8>}, {pipeline_mode = #tpu.pipeline_mode<synchronous>, transform_indices = @transform_4, window_bounds = array<i64: 1, 8>}, {transform_indices = @transform_5, window_bounds = array<i64: 1, 16, 128>}]} {
    %cst = arith.constant 0.000000e+00 : f32
    %0 = vector.broadcast %cst : f32 to vector<1x1x18x4xf32>
    %c0 = arith.constant 0 : index
    %c0_0 = arith.constant 0 : index
    %c0_1 = arith.constant 0 : index
    %c0_2 = arith.constant 0 : index
    %1 = vector.load %arg7[%c0, %c0_0, %c0_1, %c0_2] : memref<1x18x18x4xf32, #tpu.memory_space<vmem>>, vector<1x1x18x4xf32>
    tpu.vector_store %arg7[%c0, %c0_0, %c0_1, %c0_2], %0 {strides = array<i32>} : memref<1x18x18x4xf32, #tpu.memory_space<vmem>>, vector<1x1x18x4xf32>,
    %cst_3 = arith.constant 0.000000e+00 : f32
    %2 = vector.broadcast %cst_3 : f32 to vector<1x1x18x4xf32>
    %c0_4 = arith.constant 0 : index
    %c17 = arith.constant 17 : index
    %c0_5 = arith.constant 0 : index
    %c0_6 = arith.constant 0 : index
    %3 = vector.load %arg7[%c0_4, %c17, %c0_5, %c0_6] : memref<1x18x18x4xf32, #tpu.memory_space<vmem>>, vector<1x1x18x4xf32>
    tpu.vector_store %arg7[%c0_4, %c17, %c0_5, %c0_6], %2 {strides = array<i32>} : memref<1x18x18x4xf32, #tpu.memory_space<vmem>>, vector<1x1x18x4xf32>,
    %cst_7 = arith.constant 0.000000e+00 : f32
    %4 = vector.broadcast %cst_7 : f32 to vector<1x16x1x4xf32>
    %c0_8 = arith.constant 0 : index
    %c1 = arith.constant 1 : index
    %c0_9 = arith.constant 0 : index
    %c0_10 = arith.constant 0 : index
    %5 = vector.load %arg7[%c0_8, %c1, %c0_9, %c0_10] : memref<1x18x18x4xf32, #tpu.memory_space<vmem>>, vector<1x16x1x4xf32>
    tpu.vector_store %arg7[%c0_8, %c1, %c0_9, %c0_10], %4 {strides = array<i32>} : memref<1x18x18x4xf32, #tpu.memory_space<vmem>>, vector<1x16x1x4xf32>,
    %cst_11 = arith.constant 0.000000e+00 : f32
    %6 = vector.broadcast %cst_11 : f32 to vector<1x16x1x4xf32>
    %c0_12 = arith.constant 0 : index
    %c1_13 = arith.constant 1 : index
    %c17_14 = arith.constant 17 : index
    %c0_15 = arith.constant 0 : index
    %7 = vector.load %arg7[%c0_12, %c1_13, %c17_14, %c0_15] : memref<1x18x18x4xf32, #tpu.memory_space<vmem>>, vector<1x16x1x4xf32>
    tpu.vector_store %arg7[%c0_12, %c1_13, %c17_14, %c0_15], %6 {strides = array<i32>} : memref<1x18x18x4xf32, #tpu.memory_space<vmem>>, vector<1x16x1x4xf32>,
    %cst_16 = arith.constant 0.000000e+00 : f32
    %8 = vector.broadcast %cst_16 : f32 to vector<1x1x18x8xf32>
    %c0_17 = arith.constant 0 : index
    %c0_18 = arith.constant 0 : index
    %c0_19 = arith.constant 0 : index
    %c0_20 = arith.constant 0 : index
    %9 = vector.load %arg8[%c0_17, %c0_18, %c0_19, %c0_20] : memref<1x18x18x8xf32, #tpu.memory_space<vmem>>, vector<1x1x18x8xf32>
    tpu.vector_store %arg8[%c0_17, %c0_18, %c0_19, %c0_20], %8 {strides = array<i32>} : memref<1x18x18x8xf32, #tpu.memory_space<vmem>>, vector<1x1x18x8xf32>,
    %cst_21 = arith.constant 0.000000e+00 : f32
    %10 = vector.broadcast %cst_21 : f32 to vector<1x1x18x8xf32>
    %c0_22 = arith.constant 0 : index
    %c17_23 = arith.constant 17 : index
    %c0_24 = arith.constant 0 : index
    %c0_25 = arith.constant 0 : index
    %11 = vector.load %arg8[%c0_22, %c17_23, %c0_24, %c0_25] : memref<1x18x18x8xf32, #tpu.memory_space<vmem>>, vector<1x1x18x8xf32>
    tpu.vector_store %arg8[%c0_22, %c17_23, %c0_24, %c0_25], %10 {strides = array<i32>} : memref<1x18x18x8xf32, #tpu.memory_space<vmem>>, vector<1x1x18x8xf32>,
    %cst_26 = arith.constant 0.000000e+00 : f32
    %12 = vector.broadcast %cst_26 : f32 to vector<1x16x1x8xf32>
    %c0_27 = arith.constant 0 : index
    %c1_28 = arith.constant 1 : index
    %c0_29 = arith.constant 0 : index
    %c0_30 = arith.constant 0 : index
    %13 = vector.load %arg8[%c0_27, %c1_28, %c0_29, %c0_30] : memref<1x18x18x8xf32, #tpu.memory_space<vmem>>, vector<1x16x1x8xf32>
    tpu.vector_store %arg8[%c0_27, %c1_28, %c0_29, %c0_30], %12 {strides = array<i32>} : memref<1x18x18x8xf32, #tpu.memory_space<vmem>>, vector<1x16x1x8xf32>,
    %cst_31 = arith.constant 0.000000e+00 : f32
    %14 = vector.broadcast %cst_31 : f32 to vector<1x16x1x8xf32>
    %c0_32 = arith.constant 0 : index
    %c1_33 = arith.constant 1 : index
    %c17_34 = arith.constant 17 : index
    %c0_35 = arith.constant 0 : index
    %15 = vector.load %arg8[%c0_32, %c1_33, %c17_34, %c0_35] : memref<1x18x18x8xf32, #tpu.memory_space<vmem>>, vector<1x16x1x8xf32>
    tpu.vector_store %arg8[%c0_32, %c1_33, %c17_34, %c0_35], %14 {strides = array<i32>} : memref<1x18x18x8xf32, #tpu.memory_space<vmem>>, vector<1x16x1x8xf32>,
    %c0_36 = arith.constant 0 : index
    %c0_37 = arith.constant 0 : index
    %c0_38 = arith.constant 0 : index
    %c0_39 = arith.constant 0 : index
    %16 = vector.load %arg1[%c0_36, %c0_37, %c0_38, %c0_39] : memref<1x16x16x4xbf16, #tpu.memory_space<vmem>>, vector<1x16x16x4xbf16>
    %17 = arith.extf %16 : vector<1x16x16x4xbf16> to vector<1x16x16x4xf32>
    %c0_40 = arith.constant 0 : index
    %c1_41 = arith.constant 1 : index
    %c1_42 = arith.constant 1 : index
    %c0_43 = arith.constant 0 : index
    %18 = vector.load %arg7[%c0_40, %c1_41, %c1_42, %c0_43] : memref<1x18x18x4xf32, #tpu.memory_space<vmem>>, vector<1x16x16x4xf32>
    tpu.vector_store %arg7[%c0_40, %c1_41, %c1_42, %c0_43], %17 {strides = array<i32>} : memref<1x18x18x4xf32, #tpu.memory_space<vmem>>, vector<1x16x16x4xf32>,
    %c0_44 = arith.constant 0 : index
    %c0_45 = arith.constant 0 : index
    %c0_46 = arith.constant 0 : index
    %c0_47 = arith.constant 0 : index
    %19 = vector.load %arg7[%c0_44, %c0_45, %c0_46, %c0_47] : memref<1x18x18x4xf32, #tpu.memory_space<vmem>>, vector<1x16x16x4xf32>
    %20 = arith.truncf %19 : vector<1x16x16x4xf32> to vector<1x16x16x4xbf16>
    %21 = vector.shape_cast %20 : vector<1x16x16x4xbf16> to vector<256x4xbf16>
    %c0_48 = arith.constant 0 : index
    %c0_49 = arith.constant 0 : index
    %22 = vector.load %arg9[%c0_48, %c0_49] : memref<256x36xbf16, #tpu.memory_space<vmem>>, vector<256x4xbf16>
    tpu.vector_store %arg9[%c0_48, %c0_49], %21 {strides = array<i32>} : memref<256x36xbf16, #tpu.memory_space<vmem>>, vector<256x4xbf16>,
    %c0_50 = arith.constant 0 : index
    %c0_51 = arith.constant 0 : index
    %c1_52 = arith.constant 1 : index
    %c0_53 = arith.constant 0 : index
    %23 = vector.load %arg7[%c0_50, %c0_51, %c1_52, %c0_53] : memref<1x18x18x4xf32, #tpu.memory_space<vmem>>, vector<1x16x16x4xf32>
    %24 = arith.truncf %23 : vector<1x16x16x4xf32> to vector<1x16x16x4xbf16>
    %25 = vector.shape_cast %24 : vector<1x16x16x4xbf16> to vector<256x4xbf16>
    %c0_54 = arith.constant 0 : index
    %c4 = arith.constant 4 : index
    %26 = vector.load %arg9[%c0_54, %c4] : memref<256x36xbf16, #tpu.memory_space<vmem>>, vector<256x4xbf16>
    tpu.vector_store %arg9[%c0_54, %c4], %25 {strides = array<i32>} : memref<256x36xbf16, #tpu.memory_space<vmem>>, vector<256x4xbf16>,
    %c0_55 = arith.constant 0 : index
    %c0_56 = arith.constant 0 : index
    %c2 = arith.constant 2 : index
    %c0_57 = arith.constant 0 : index
    %27 = vector.load %arg7[%c0_55, %c0_56, %c2, %c0_57] : memref<1x18x18x4xf32, #tpu.memory_space<vmem>>, vector<1x16x16x4xf32>
    %28 = arith.truncf %27 : vector<1x16x16x4xf32> to vector<1x16x16x4xbf16>
    %29 = vector.shape_cast %28 : vector<1x16x16x4xbf16> to vector<256x4xbf16>
    %c0_58 = arith.constant 0 : index
    %c8 = arith.constant 8 : index
    %30 = vector.load %arg9[%c0_58, %c8] : memref<256x36xbf16, #tpu.memory_space<vmem>>, vector<256x4xbf16>
    tpu.vector_store %arg9[%c0_58, %c8], %29 {strides = array<i32>} : memref<256x36xbf16, #tpu.memory_space<vmem>>, vector<256x4xbf16>,
    %c0_59 = arith.constant 0 : index
    %c1_60 = arith.constant 1 : index
    %c0_61 = arith.constant 0 : index
    %c0_62 = arith.constant 0 : index
    %31 = vector.load %arg7[%c0_59, %c1_60, %c0_61, %c0_62] : memref<1x18x18x4xf32, #tpu.memory_space<vmem>>, vector<1x16x16x4xf32>
    %32 = arith.truncf %31 : vector<1x16x16x4xf32> to vector<1x16x16x4xbf16>
    %33 = vector.shape_cast %32 : vector<1x16x16x4xbf16> to vector<256x4xbf16>
    %c0_63 = arith.constant 0 : index
    %c12 = arith.constant 12 : index
    %34 = vector.load %arg9[%c0_63, %c12] : memref<256x36xbf16, #tpu.memory_space<vmem>>, vector<256x4xbf16>
    tpu.vector_store %arg9[%c0_63, %c12], %33 {strides = array<i32>} : memref<256x36xbf16, #tpu.memory_space<vmem>>, vector<256x4xbf16>,
    %c0_64 = arith.constant 0 : index
    %c1_65 = arith.constant 1 : index
    %c1_66 = arith.constant 1 : index
    %c0_67 = arith.constant 0 : index
    %35 = vector.load %arg7[%c0_64, %c1_65, %c1_66, %c0_67] : memref<1x18x18x4xf32, #tpu.memory_space<vmem>>, vector<1x16x16x4xf32>
    %36 = arith.truncf %35 : vector<1x16x16x4xf32> to vector<1x16x16x4xbf16>
    %37 = vector.shape_cast %36 : vector<1x16x16x4xbf16> to vector<256x4xbf16>
    %c0_68 = arith.constant 0 : index
    %c16 = arith.constant 16 : index
    %38 = vector.load %arg9[%c0_68, %c16] : memref<256x36xbf16, #tpu.memory_space<vmem>>, vector<256x4xbf16>
    tpu.vector_store %arg9[%c0_68, %c16], %37 {strides = array<i32>} : memref<256x36xbf16, #tpu.memory_space<vmem>>, vector<256x4xbf16>,
    %c0_69 = arith.constant 0 : index
    %c1_70 = arith.constant 1 : index
    %c2_71 = arith.constant 2 : index
    %c0_72 = arith.constant 0 : index
    %39 = vector.load %arg7[%c0_69, %c1_70, %c2_71, %c0_72] : memref<1x18x18x4xf32, #tpu.memory_space<vmem>>, vector<1x16x16x4xf32>
    %40 = arith.truncf %39 : vector<1x16x16x4xf32> to vector<1x16x16x4xbf16>
    %41 = vector.shape_cast %40 : vector<1x16x16x4xbf16> to vector<256x4xbf16>
    %c0_73 = arith.constant 0 : index
    %c20 = arith.constant 20 : index
    %42 = vector.load %arg9[%c0_73, %c20] : memref<256x36xbf16, #tpu.memory_space<vmem>>, vector<256x4xbf16>
    tpu.vector_store %arg9[%c0_73, %c20], %41 {strides = array<i32>} : memref<256x36xbf16, #tpu.memory_space<vmem>>, vector<256x4xbf16>,
    %c0_74 = arith.constant 0 : index
    %c2_75 = arith.constant 2 : index
    %c0_76 = arith.constant 0 : index
    %c0_77 = arith.constant 0 : index
    %43 = vector.load %arg7[%c0_74, %c2_75, %c0_76, %c0_77] : memref<1x18x18x4xf32, #tpu.memory_space<vmem>>, vector<1x16x16x4xf32>
    %44 = arith.truncf %43 : vector<1x16x16x4xf32> to vector<1x16x16x4xbf16>
    %45 = vector.shape_cast %44 : vector<1x16x16x4xbf16> to vector<256x4xbf16>
    %c0_78 = arith.constant 0 : index
    %c24 = arith.constant 24 : index
    %46 = vector.load %arg9[%c0_78, %c24] : memref<256x36xbf16, #tpu.memory_space<vmem>>, vector<256x4xbf16>
    tpu.vector_store %arg9[%c0_78, %c24], %45 {strides = array<i32>} : memref<256x36xbf16, #tpu.memory_space<vmem>>, vector<256x4xbf16>,
    %c0_79 = arith.constant 0 : index
    %c2_80 = arith.constant 2 : index
    %c1_81 = arith.constant 1 : index
    %c0_82 = arith.constant 0 : index
    %47 = vector.load %arg7[%c0_79, %c2_80, %c1_81, %c0_82] : memref<1x18x18x4xf32, #tpu.memory_space<vmem>>, vector<1x16x16x4xf32>
    %48 = arith.truncf %47 : vector<1x16x16x4xf32> to vector<1x16x16x4xbf16>
    %49 = vector.shape_cast %48 : vector<1x16x16x4xbf16> to vector<256x4xbf16>
    %c0_83 = arith.constant 0 : index
    %c28 = arith.constant 28 : index
    %50 = vector.load %arg9[%c0_83, %c28] : memref<256x36xbf16, #tpu.memory_space<vmem>>, vector<256x4xbf16>
    tpu.vector_store %arg9[%c0_83, %c28], %49 {strides = array<i32>} : memref<256x36xbf16, #tpu.memory_space<vmem>>, vector<256x4xbf16>,
    %c0_84 = arith.constant 0 : index
    %c2_85 = arith.constant 2 : index
    %c2_86 = arith.constant 2 : index
    %c0_87 = arith.constant 0 : index
    %51 = vector.load %arg7[%c0_84, %c2_85, %c2_86, %c0_87] : memref<1x18x18x4xf32, #tpu.memory_space<vmem>>, vector<1x16x16x4xf32>
    %52 = arith.truncf %51 : vector<1x16x16x4xf32> to vector<1x16x16x4xbf16>
    %53 = vector.shape_cast %52 : vector<1x16x16x4xbf16> to vector<256x4xbf16>
    %c0_88 = arith.constant 0 : index
    %c32 = arith.constant 32 : index
    %54 = vector.load %arg9[%c0_88, %c32] : memref<256x36xbf16, #tpu.memory_space<vmem>>, vector<256x4xbf16>
    tpu.vector_store %arg9[%c0_88, %c32], %53 {strides = array<i32>} : memref<256x36xbf16, #tpu.memory_space<vmem>>, vector<256x4xbf16>,
    %c0_89 = arith.constant 0 : index
    %c0_90 = arith.constant 0 : index
    %55 = vector.load %arg9[%c0_89, %c0_90] : memref<256x36xbf16, #tpu.memory_space<vmem>>, vector<256x36xbf16>
    %c0_91 = arith.constant 0 : index
    %c0_92 = arith.constant 0 : index
    %56 = vector.load %arg2[%c0_91, %c0_92] : memref<36x8xbf16, #tpu.memory_space<vmem>>, vector<36x8xbf16>
    %cst_93 = arith.constant dense<0.000000e+00> : vector<256x8xf32>
    %57 = tpu.matmul %55, %56, %cst_93 {dimension_numbers = #tpu.dot_dimension_numbers<[1], [0], [0], [1], [0, 0, 1, 1], [], []>} : vector<256x36xbf16>, vector<36x8xbf16>, vector<256x8xf32> -> vector<256x8xf32>
    %c0_94 = arith.constant 0 : index
    %c0_95 = arith.constant 0 : index
    %58 = vector.load %arg3[%c0_94, %c0_95] : memref<1x8xf32, #tpu.memory_space<vmem>>, vector<1x8xf32>
    %59 = vector.broadcast %58 : vector<1x8xf32> to vector<256x8xf32>
    %60 = arith.addf %57, %59 : vector<256x8xf32>
    %cst_96 = arith.constant 0.000000e+00 : f32
    %61 = vector.broadcast %cst_96 : f32 to vector<256x8xf32>
    %62 = arith.maximumf %60, %61 : vector<256x8xf32>
    %63 = vector.shape_cast %62 : vector<256x8xf32> to vector<1x16x16x8xf32>
    %c0_97 = arith.constant 0 : index
    %c1_98 = arith.constant 1 : index
    %c1_99 = arith.constant 1 : index
    %c0_100 = arith.constant 0 : index
    %64 = vector.load %arg8[%c0_97, %c1_98, %c1_99, %c0_100] : memref<1x18x18x8xf32, #tpu.memory_space<vmem>>, vector<1x16x16x8xf32>
    tpu.vector_store %arg8[%c0_97, %c1_98, %c1_99, %c0_100], %63 {strides = array<i32>} : memref<1x18x18x8xf32, #tpu.memory_space<vmem>>, vector<1x16x16x8xf32>,
    %c0_101 = arith.constant 0 : index
    %c0_102 = arith.constant 0 : index
    %c0_103 = arith.constant 0 : index
    %c0_104 = arith.constant 0 : index
    %65 = vector.load %arg8[%c0_101, %c0_102, %c0_103, %c0_104] : memref<1x18x18x8xf32, #tpu.memory_space<vmem>>, vector<1x16x16x8xf32>
    %66 = arith.truncf %65 : vector<1x16x16x8xf32> to vector<1x16x16x8xbf16>
    %67 = vector.shape_cast %66 : vector<1x16x16x8xbf16> to vector<256x8xbf16>
    %c0_105 = arith.constant 0 : index
    %c0_106 = arith.constant 0 : index
    %68 = vector.load %arg10[%c0_105, %c0_106] : memref<256x72xbf16, #tpu.memory_space<vmem>>, vector<256x8xbf16>
    tpu.vector_store %arg10[%c0_105, %c0_106], %67 {strides = array<i32>} : memref<256x72xbf16, #tpu.memory_space<vmem>>, vector<256x8xbf16>,
    %c0_107 = arith.constant 0 : index
    %c0_108 = arith.constant 0 : index
    %c1_109 = arith.constant 1 : index
    %c0_110 = arith.constant 0 : index
    %69 = vector.load %arg8[%c0_107, %c0_108, %c1_109, %c0_110] : memref<1x18x18x8xf32, #tpu.memory_space<vmem>>, vector<1x16x16x8xf32>
    %70 = arith.truncf %69 : vector<1x16x16x8xf32> to vector<1x16x16x8xbf16>
    %71 = vector.shape_cast %70 : vector<1x16x16x8xbf16> to vector<256x8xbf16>
    %c0_111 = arith.constant 0 : index
    %c8_112 = arith.constant 8 : index
    %72 = vector.load %arg10[%c0_111, %c8_112] : memref<256x72xbf16, #tpu.memory_space<vmem>>, vector<256x8xbf16>
    tpu.vector_store %arg10[%c0_111, %c8_112], %71 {strides = array<i32>} : memref<256x72xbf16, #tpu.memory_space<vmem>>, vector<256x8xbf16>,
    %c0_113 = arith.constant 0 : index
    %c0_114 = arith.constant 0 : index
    %c2_115 = arith.constant 2 : index
    %c0_116 = arith.constant 0 : index
    %73 = vector.load %arg8[%c0_113, %c0_114, %c2_115, %c0_116] : memref<1x18x18x8xf32, #tpu.memory_space<vmem>>, vector<1x16x16x8xf32>
    %74 = arith.truncf %73 : vector<1x16x16x8xf32> to vector<1x16x16x8xbf16>
    %75 = vector.shape_cast %74 : vector<1x16x16x8xbf16> to vector<256x8xbf16>
    %c0_117 = arith.constant 0 : index
    %c16_118 = arith.constant 16 : index
    %76 = vector.load %arg10[%c0_117, %c16_118] : memref<256x72xbf16, #tpu.memory_space<vmem>>, vector<256x8xbf16>
    tpu.vector_store %arg10[%c0_117, %c16_118], %75 {strides = array<i32>} : memref<256x72xbf16, #tpu.memory_space<vmem>>, vector<256x8xbf16>,
    %c0_119 = arith.constant 0 : index
    %c1_120 = arith.constant 1 : index
    %c0_121 = arith.constant 0 : index
    %c0_122 = arith.constant 0 : index
    %77 = vector.load %arg8[%c0_119, %c1_120, %c0_121, %c0_122] : memref<1x18x18x8xf32, #tpu.memory_space<vmem>>, vector<1x16x16x8xf32>
    %78 = arith.truncf %77 : vector<1x16x16x8xf32> to vector<1x16x16x8xbf16>
    %79 = vector.shape_cast %78 : vector<1x16x16x8xbf16> to vector<256x8xbf16>
    %c0_123 = arith.constant 0 : index
    %c24_124 = arith.constant 24 : index
    %80 = vector.load %arg10[%c0_123, %c24_124] : memref<256x72xbf16, #tpu.memory_space<vmem>>, vector<256x8xbf16>
    tpu.vector_store %arg10[%c0_123, %c24_124], %79 {strides = array<i32>} : memref<256x72xbf16, #tpu.memory_space<vmem>>, vector<256x8xbf16>,
    %c0_125 = arith.constant 0 : index
    %c1_126 = arith.constant 1 : index
    %c1_127 = arith.constant 1 : index
    %c0_128 = arith.constant 0 : index
    %81 = vector.load %arg8[%c0_125, %c1_126, %c1_127, %c0_128] : memref<1x18x18x8xf32, #tpu.memory_space<vmem>>, vector<1x16x16x8xf32>
    %82 = arith.truncf %81 : vector<1x16x16x8xf32> to vector<1x16x16x8xbf16>
    %83 = vector.shape_cast %82 : vector<1x16x16x8xbf16> to vector<256x8xbf16>
    %c0_129 = arith.constant 0 : index
    %c32_130 = arith.constant 32 : index
    %84 = vector.load %arg10[%c0_129, %c32_130] : memref<256x72xbf16, #tpu.memory_space<vmem>>, vector<256x8xbf16>
    tpu.vector_store %arg10[%c0_129, %c32_130], %83 {strides = array<i32>} : memref<256x72xbf16, #tpu.memory_space<vmem>>, vector<256x8xbf16>,
    %c0_131 = arith.constant 0 : index
    %c1_132 = arith.constant 1 : index
    %c2_133 = arith.constant 2 : index
    %c0_134 = arith.constant 0 : index
    %85 = vector.load %arg8[%c0_131, %c1_132, %c2_133, %c0_134] : memref<1x18x18x8xf32, #tpu.memory_space<vmem>>, vector<1x16x16x8xf32>
    %86 = arith.truncf %85 : vector<1x16x16x8xf32> to vector<1x16x16x8xbf16>
    %87 = vector.shape_cast %86 : vector<1x16x16x8xbf16> to vector<256x8xbf16>
    %c0_135 = arith.constant 0 : index
    %c40 = arith.constant 40 : index
    %88 = vector.load %arg10[%c0_135, %c40] : memref<256x72xbf16, #tpu.memory_space<vmem>>, vector<256x8xbf16>
    tpu.vector_store %arg10[%c0_135, %c40], %87 {strides = array<i32>} : memref<256x72xbf16, #tpu.memory_space<vmem>>, vector<256x8xbf16>,
    %c0_136 = arith.constant 0 : index
    %c2_137 = arith.constant 2 : index
    %c0_138 = arith.constant 0 : index
    %c0_139 = arith.constant 0 : index
    %89 = vector.load %arg8[%c0_136, %c2_137, %c0_138, %c0_139] : memref<1x18x18x8xf32, #tpu.memory_space<vmem>>, vector<1x16x16x8xf32>
    %90 = arith.truncf %89 : vector<1x16x16x8xf32> to vector<1x16x16x8xbf16>
    %91 = vector.shape_cast %90 : vector<1x16x16x8xbf16> to vector<256x8xbf16>
    %c0_140 = arith.constant 0 : index
    %c48 = arith.constant 48 : index
    %92 = vector.load %arg10[%c0_140, %c48] : memref<256x72xbf16, #tpu.memory_space<vmem>>, vector<256x8xbf16>
    tpu.vector_store %arg10[%c0_140, %c48], %91 {strides = array<i32>} : memref<256x72xbf16, #tpu.memory_space<vmem>>, vector<256x8xbf16>,
    %c0_141 = arith.constant 0 : index
    %c2_142 = arith.constant 2 : index
    %c1_143 = arith.constant 1 : index
    %c0_144 = arith.constant 0 : index
    %93 = vector.load %arg8[%c0_141, %c2_142, %c1_143, %c0_144] : memref<1x18x18x8xf32, #tpu.memory_space<vmem>>, vector<1x16x16x8xf32>
    %94 = arith.truncf %93 : vector<1x16x16x8xf32> to vector<1x16x16x8xbf16>
    %95 = vector.shape_cast %94 : vector<1x16x16x8xbf16> to vector<256x8xbf16>
    %c0_145 = arith.constant 0 : index
    %c56 = arith.constant 56 : index
    %96 = vector.load %arg10[%c0_145, %c56] : memref<256x72xbf16, #tpu.memory_space<vmem>>, vector<256x8xbf16>
    tpu.vector_store %arg10[%c0_145, %c56], %95 {strides = array<i32>} : memref<256x72xbf16, #tpu.memory_space<vmem>>, vector<256x8xbf16>,
    %c0_146 = arith.constant 0 : index
    %c2_147 = arith.constant 2 : index
    %c2_148 = arith.constant 2 : index
    %c0_149 = arith.constant 0 : index
    %97 = vector.load %arg8[%c0_146, %c2_147, %c2_148, %c0_149] : memref<1x18x18x8xf32, #tpu.memory_space<vmem>>, vector<1x16x16x8xf32>
    %98 = arith.truncf %97 : vector<1x16x16x8xf32> to vector<1x16x16x8xbf16>
    %99 = vector.shape_cast %98 : vector<1x16x16x8xbf16> to vector<256x8xbf16>
    %c0_150 = arith.constant 0 : index
    %c64 = arith.constant 64 : index
    %100 = vector.load %arg10[%c0_150, %c64] : memref<256x72xbf16, #tpu.memory_space<vmem>>, vector<256x8xbf16>
    tpu.vector_store %arg10[%c0_150, %c64], %99 {strides = array<i32>} : memref<256x72xbf16, #tpu.memory_space<vmem>>, vector<256x8xbf16>,
    %c0_151 = arith.constant 0 : index
    %c0_152 = arith.constant 0 : index
    %101 = vector.load %arg10[%c0_151, %c0_152] : memref<256x72xbf16, #tpu.memory_space<vmem>>, vector<256x72xbf16>
    %c0_153 = arith.constant 0 : index
    %c0_154 = arith.constant 0 : index
    %102 = vector.load %arg4[%c0_153, %c0_154] : memref<72x8xbf16, #tpu.memory_space<vmem>>, vector<72x8xbf16>
    %cst_155 = arith.constant dense<0.000000e+00> : vector<256x8xf32>
    %103 = tpu.matmul %101, %102, %cst_155 {dimension_numbers = #tpu.dot_dimension_numbers<[1], [0], [0], [1], [0, 0, 1, 1], [], []>} : vector<256x72xbf16>, vector<72x8xbf16>, vector<256x8xf32> -> vector<256x8xf32>
    %c0_156 = arith.constant 0 : index
    %c0_157 = arith.constant 0 : index
    %104 = vector.load %arg5[%c0_156, %c0_157] : memref<1x8xf32, #tpu.memory_space<vmem>>, vector<1x8xf32>
    %105 = vector.broadcast %104 : vector<1x8xf32> to vector<256x8xf32>
    %106 = arith.addf %103, %105 : vector<256x8xf32>
    %cst_158 = arith.constant 0.000000e+00 : f32
    %107 = vector.broadcast %cst_158 : f32 to vector<256x8xf32>
    %108 = arith.maximumf %106, %107 : vector<256x8xf32>
    %109 = vector.shape_cast %108 : vector<256x8xf32> to vector<1x16x16x8xf32>
    %110 = vector.extract_strided_slice %109 {offsets = [0, 0, 0, 0], sizes = [1, 16, 1, 8], strides = [1, 1, 1, 1]} : vector<1x16x16x8xf32> to vector<1x16x1x8xf32>
    %111 = vector.shape_cast %110 : vector<1x16x1x8xf32> to vector<1x16x8xf32>
    %112 = vector.extract_strided_slice %109 {offsets = [0, 0, 1, 0], sizes = [1, 16, 1, 8], strides = [1, 1, 1, 1]} : vector<1x16x16x8xf32> to vector<1x16x1x8xf32>
    %113 = vector.shape_cast %112 : vector<1x16x1x8xf32> to vector<1x16x8xf32>
    %114 = vector.extract_strided_slice %109 {offsets = [0, 0, 2, 0], sizes = [1, 16, 1, 8], strides = [1, 1, 1, 1]} : vector<1x16x16x8xf32> to vector<1x16x1x8xf32>
    %115 = vector.shape_cast %114 : vector<1x16x1x8xf32> to vector<1x16x8xf32>
    %116 = vector.extract_strided_slice %109 {offsets = [0, 0, 3, 0], sizes = [1, 16, 1, 8], strides = [1, 1, 1, 1]} : vector<1x16x16x8xf32> to vector<1x16x1x8xf32>
    %117 = vector.shape_cast %116 : vector<1x16x1x8xf32> to vector<1x16x8xf32>
    %118 = vector.extract_strided_slice %109 {offsets = [0, 0, 4, 0], sizes = [1, 16, 1, 8], strides = [1, 1, 1, 1]} : vector<1x16x16x8xf32> to vector<1x16x1x8xf32>
    %119 = vector.shape_cast %118 : vector<1x16x1x8xf32> to vector<1x16x8xf32>
    %120 = vector.extract_strided_slice %109 {offsets = [0, 0, 5, 0], sizes = [1, 16, 1, 8], strides = [1, 1, 1, 1]} : vector<1x16x16x8xf32> to vector<1x16x1x8xf32>
    %121 = vector.shape_cast %120 : vector<1x16x1x8xf32> to vector<1x16x8xf32>
    %122 = vector.extract_strided_slice %109 {offsets = [0, 0, 6, 0], sizes = [1, 16, 1, 8], strides = [1, 1, 1, 1]} : vector<1x16x16x8xf32> to vector<1x16x1x8xf32>
    %123 = vector.shape_cast %122 : vector<1x16x1x8xf32> to vector<1x16x8xf32>
    %124 = vector.extract_strided_slice %109 {offsets = [0, 0, 7, 0], sizes = [1, 16, 1, 8], strides = [1, 1, 1, 1]} : vector<1x16x16x8xf32> to vector<1x16x1x8xf32>
    %125 = vector.shape_cast %124 : vector<1x16x1x8xf32> to vector<1x16x8xf32>
    %126 = vector.extract_strided_slice %109 {offsets = [0, 0, 8, 0], sizes = [1, 16, 1, 8], strides = [1, 1, 1, 1]} : vector<1x16x16x8xf32> to vector<1x16x1x8xf32>
    %127 = vector.shape_cast %126 : vector<1x16x1x8xf32> to vector<1x16x8xf32>
    %128 = vector.extract_strided_slice %109 {offsets = [0, 0, 9, 0], sizes = [1, 16, 1, 8], strides = [1, 1, 1, 1]} : vector<1x16x16x8xf32> to vector<1x16x1x8xf32>
    %129 = vector.shape_cast %128 : vector<1x16x1x8xf32> to vector<1x16x8xf32>
    %130 = vector.extract_strided_slice %109 {offsets = [0, 0, 10, 0], sizes = [1, 16, 1, 8], strides = [1, 1, 1, 1]} : vector<1x16x16x8xf32> to vector<1x16x1x8xf32>
    %131 = vector.shape_cast %130 : vector<1x16x1x8xf32> to vector<1x16x8xf32>
    %132 = vector.extract_strided_slice %109 {offsets = [0, 0, 11, 0], sizes = [1, 16, 1, 8], strides = [1, 1, 1, 1]} : vector<1x16x16x8xf32> to vector<1x16x1x8xf32>
    %133 = vector.shape_cast %132 : vector<1x16x1x8xf32> to vector<1x16x8xf32>
    %134 = vector.extract_strided_slice %109 {offsets = [0, 0, 12, 0], sizes = [1, 16, 1, 8], strides = [1, 1, 1, 1]} : vector<1x16x16x8xf32> to vector<1x16x1x8xf32>
    %135 = vector.shape_cast %134 : vector<1x16x1x8xf32> to vector<1x16x8xf32>
    %136 = vector.extract_strided_slice %109 {offsets = [0, 0, 13, 0], sizes = [1, 16, 1, 8], strides = [1, 1, 1, 1]} : vector<1x16x16x8xf32> to vector<1x16x1x8xf32>
    %137 = vector.shape_cast %136 : vector<1x16x1x8xf32> to vector<1x16x8xf32>
    %138 = vector.extract_strided_slice %109 {offsets = [0, 0, 14, 0], sizes = [1, 16, 1, 8], strides = [1, 1, 1, 1]} : vector<1x16x16x8xf32> to vector<1x16x1x8xf32>
    %139 = vector.shape_cast %138 : vector<1x16x1x8xf32> to vector<1x16x8xf32>
    %140 = vector.extract_strided_slice %109 {offsets = [0, 0, 15, 0], sizes = [1, 16, 1, 8], strides = [1, 1, 1, 1]} : vector<1x16x16x8xf32> to vector<1x16x1x8xf32>
    %141 = vector.shape_cast %140 : vector<1x16x1x8xf32> to vector<1x16x8xf32>
    %142 = tpu.concatenate %111, %113, %115, %117, %119, %121, %123, %125, %127, %129, %131, %133, %135, %137, %139, %141 in 2 : vector<1x16x8xf32>, vector<1x16x8xf32>, vector<1x16x8xf32>, vector<1x16x8xf32>, vector<1x16x8xf32>, vector<1x16x8xf32>, vector<1x16x8xf32>, vector<1x16x8xf32>, vector<1x16x8xf32>, vector<1x16x8xf32>, vector<1x16x8xf32>, vector<1x16x8xf32>, vector<1x16x8xf32>, vector<1x16x8xf32>, vector<1x16x8xf32>, vector<1x16x8xf32> -> vector<1x16x128xf32>
    %c0_159 = arith.constant 0 : index
    %c0_160 = arith.constant 0 : index
    %c0_161 = arith.constant 0 : index
    %143 = vector.load %arg6[%c0_159, %c0_160, %c0_161] : memref<1x16x128xf32, #tpu.memory_space<vmem>>, vector<1x16x128xf32>
    tpu.vector_store %arg6[%c0_159, %c0_160, %c0_161], %142 {strides = array<i32>} : memref<1x16x128xf32, #tpu.memory_space<vmem>>, vector<1x16x128xf32>,
    return
  }
  func.func @transform_0(%arg0: i32) -> (i32, i32, i32, i32) {
    %c0_i32 = arith.constant 0 : i32
    %c0_i32_0 = arith.constant 0 : i32
    %c0_i32_1 = arith.constant 0 : i32
    %c0_i32_2 = arith.constant 0 : i32
    return %arg0, %c0_i32, %c0_i32_0, %c0_i32_1 : i32, i32, i32, i32
  }
  func.func @transform_1(%arg0: i32) -> (i32, i32) {
    %c0_i32 = arith.constant 0 : i32
    %c0_i32_0 = arith.constant 0 : i32
    %c0_i32_1 = arith.constant 0 : i32
    return %c0_i32, %c0_i32_0 : i32, i32
  }
  func.func @transform_2(%arg0: i32) -> (i32, i32) {
    %c0_i32 = arith.constant 0 : i32
    %c0_i32_0 = arith.constant 0 : i32
    %c0_i32_1 = arith.constant 0 : i32
    return %c0_i32, %c0_i32_0 : i32, i32
  }
  func.func @transform_3(%arg0: i32) -> (i32, i32) {
    %c0_i32 = arith.constant 0 : i32
    %c0_i32_0 = arith.constant 0 : i32
    %c0_i32_1 = arith.constant 0 : i32
    return %c0_i32, %c0_i32_0 : i32, i32
  }
  func.func @transform_4(%arg0: i32) -> (i32, i32) {
    %c0_i32 = arith.constant 0 : i32
    %c0_i32_0 = arith.constant 0 : i32
    %c0_i32_1 = arith.constant 0 : i32
    return %c0_i32, %c0_i32_0 : i32, i32
  }
  func.func @transform_5(%arg0: i32) -> (i32, i32, i32) {
    %c0_i32 = arith.constant 0 : i32
    %c0_i32_0 = arith.constant 0 : i32
    %c0_i32_1 = arith.constant 0 : i32
    return %arg0, %c0_i32, %c0_i32_0 : i32, i32, i32
  }
}

</mosaic_0001>

<llo_original>
// kernel: ccb_forward.1
$region0: #{ccb_forward.1}
  #allocation0 [shape = 'u32[]', space=smem, size = 0x4, offset = 0x4, fixed_abs, tag = 'smem constant byte address 0x4 - core index']
  #allocation1 [shape = 'u32[144,128]{1,0:T(1,128)}', space=vmem, size = 0x12000, scoped, tag = 'internal scratch']
  #allocation2 [shape = 'f32[1,18,18,4]{3,2,1,0:T(8,128)}', space=vmem, size = 0x36000, scoped, tag = 'scratch operand']
  #allocation3 [shape = 'f32[1,18,18,8]{3,2,1,0:T(8,128)}', space=vmem, size = 0x36000, scoped, tag = 'scratch operand']
  #allocation4 [shape = 'bf16[256,36]{1,0:T(16,128)(2,1)}', space=vmem, size = 0x10000, scoped, tag = 'scratch operand']
  #allocation5 [shape = 'bf16[256,72]{1,0:T(16,128)(2,1)}', space=vmem, size = 0x10000, scoped, tag = 'scratch operand']
  %s0 = inlined_call_operand.vmem [shape: bf16[2,16,16,4], index: 0, kind: input, shape index: {}]
  %s1 = inlined_call_operand.vmem [shape: bf16[36,8], index: 1, kind: input, shape index: {}]
  %s2 = inlined_call_operand.vmem [shape: f32[1,8], index: 2, kind: input, shape index: {}]
  %s3 = inlined_call_operand.vmem [shape: bf16[72,8], index: 3, kind: input, shape index: {}]
  %s4 = inlined_call_operand.vmem [shape: f32[1,8], index: 4, kind: input, shape index: {}]
  %s5 = inlined_call_operand.vmem [shape: f32[2,16,128], index: 5, kind: output, shape index: {}]
  %s6 = sld [smem:[#allocation0]]
  $region53: #{ccb_forward.1} parent=0
    _
  %s8 = ssub.s32 1, %s6
  %s9 = scalar_select 0, %s8, %s6
  loop: start=0, step=1, limit=4
  $region2: #{ccb_forward.1} parent=0 // loop_pre_header
    _
  $region3: #{ccb_forward.1} parent=0 // loop_header
    %s11 = sphi 0, %s15
    %p12 = scmp.ge.s32.totalorder %s11, 4
    %s21 = sphi 0, %s23
    %s24 = sphi 0, %s21
    %s25 = sphi 0, %s24
    %s41 = sphi 0, %s25
    %s45 = sphi 0, %s45
    %s47 = sphi 0, %s45
    %s48 = sphi 0, %s47
    %s62 = sphi 0, %s48
    %s66 = sphi 0, %s66
    %s68 = sphi 0, %s66
    %s69 = sphi 0, %s68
    %s83 = sphi 0, %s69
    %s87 = sphi 0, %s87
    %s89 = sphi 0, %s87
    %s90 = sphi 0, %s89
    %s104 = sphi 0, %s90
    %s108 = sphi 0, %s108
    %s110 = sphi 0, %s108
    %s111 = sphi 0, %s110
    %s125 = sphi 0, %s111
    %s131 = sphi 0, %s133
    %s134 = sphi 0, %s131
    %s135 = sphi 0, %s134
    %s151 = sphi 0, %s135
  $region4: #{ccb_forward.1} parent=0 // loop_header_branch
    %14 = sbr.rel (%p12) target = $region8
  $region5: #{ccb_forward.1} parent=0 // loop_body
    %s16 = ssub.s32 %s11, 1
    %s17 = ssub.s32 %s11, 2
    %s18 = sadd.s32 %s11, 1
    %s19 = ssub.s32 %s11, %s18
    %p20 = scmp.eq.s32.totalorder %s19, 0
    %s22 = sadd.s32 %s21, 1
    %s23 = scalar_select %p20, %s21, %s22
    %p26 = pneg %p20
    %p27 = scmp.eq.s32.totalorder %s11, 1
    %p28 = por %p26, %p27
    %p29 = scmp.ne.s32.totalorder %s21, %s24
    %p30 = scmp.eq.s32.totalorder %s11, 0
    %p31 = por %p29, %p30
    %p32 = scmp.ne.s32.totalorder %s21, %s24
    %p33 = scmp.eq.s32.totalorder %s16, 1
    %p34 = por %p32, %p33
    %p35 = scmp.ne.s32.totalorder %s24, %s25
    %p36 = scmp.eq.s32.totalorder %s16, 0
    %p37 = por %p35, %p36
    %p38 = scmp.ne.s32.totalorder %s24, %s25
    %p39 = scmp.eq.s32.totalorder %s17, 1
    %p40 = por %p38, %p39
    %p42 = scmp.ne.s32.totalorder %s25, %s41
    %p43 = scmp.eq.s32.totalorder %s17, 0
    %p44 = por %p42, %p43
    %s46 = sadd.s32 %s45, 1
    %p49 = scmp.eq.s32.totalorder %s11, 1
    %p50 = scmp.ne.s32.totalorder %s45, %s47
    %p51 = scmp.eq.s32.totalorder %s11, 0
    %p52 = por %p50, %p51
    %p53 = scmp.ne.s32.totalorder %s45, %s47
    %p54 = scmp.eq.s32.totalorder %s16, 1
    %p55 = por %p53, %p54
    %p56 = scmp.ne.s32.totalorder %s47, %s48
    %p57 = scmp.eq.s32.totalorder %s16, 0
    %p58 = por %p56, %p57
    %p59 = scmp.ne.s32.totalorder %s47, %s48
    %p60 = scmp.eq.s32.totalorder %s17, 1
    %p61 = por %p59, %p60
    %p63 = scmp.ne.s32.totalorder %s48, %s62
    %p64 = scmp.eq.s32.totalorder %s17, 0
    %p65 = por %p63, %p64
    %s67 = sadd.s32 %s66, 1
    %p70 = scmp.eq.s32.totalorder %s11, 1
    %p71 = scmp.ne.s32.totalorder %s66, %s68
    %p72 = scmp.eq.s32.totalorder %s11, 0
    %p73 = por %p71, %p72
    %p74 = scmp.ne.s32.totalorder %s66, %s68
    %p75 = scmp.eq.s32.totalorder %s16, 1
    %p76 = por %p74, %p75
    %p77 = scmp.ne.s32.totalorder %s68, %s69
    %p78 = scmp.eq.s32.totalorder %s16, 0
    %p79 = por %p77, %p78
    %p80 = scmp.ne.s32.totalorder %s68, %s69
    %p81 = scmp.eq.s32.totalorder %s17, 1
    %p82 = por %p80, %p81
    %p84 = scmp.ne.s32.totalorder %s69, %s83
    %p85 = scmp.eq.s32.totalorder %s17, 0
    %p86 = por %p84, %p85
    %s88 = sadd.s32 %s87, 1
    %p91 = scmp.eq.s32.totalorder %s11, 1
    %p92 = scmp.ne.s32.totalorder %s87, %s89
    %p93 = scmp.eq.s32.totalorder %s11, 0
    %p94 = por %p92, %p93
    %p95 = scmp.ne.s32.totalorder %s87, %s89
    %p96 = scmp.eq.s32.totalorder %s16, 1
    %p97 = por %p95, %p96
    %p98 = scmp.ne.s32.totalorder %s89, %s90
    %p99 = scmp.eq.s32.totalorder %s16, 0
    %p100 = por %p98, %p99
    %p101 = scmp.ne.s32.totalorder %s89, %s90
    %p102 = scmp.eq.s32.totalorder %s17, 1
    %p103 = por %p101, %p102
    %p105 = scmp.ne.s32.totalorder %s90, %s104
    %p106 = scmp.eq.s32.totalorder %s17, 0
    %p107 = por %p105, %p106
    %s109 = sadd.s32 %s108, 1
    %p112 = scmp.eq.s32.totalorder %s11, 1
    %p113 = scmp.ne.s32.totalorder %s108, %s110
    %p114 = scmp.eq.s32.totalorder %s11, 0
    %p115 = por %p113, %p114
    %p116 = scmp.ne.s32.totalorder %s108, %s110
    %p117 = scmp.eq.s32.totalorder %s16, 1
    %p118 = por %p116, %p117
    %p119 = scmp.ne.s32.totalorder %s110, %s111
    %p120 = scmp.eq.s32.totalorder %s16, 0
    %p121 = por %p119, %p120
    %p122 = scmp.ne.s32.totalorder %s110, %s111
    %p123 = scmp.eq.s32.totalorder %s17, 1
    %p124 = por %p122, %p123
    %p126 = scmp.ne.s32.totalorder %s111, %s125
    %p127 = scmp.eq.s32.totalorder %s17, 0
    %p128 = por %p126, %p127
    %s129 = ssub.s32 %s11, %s18
    %p130 = scmp.eq.s32.totalorder %s129, 0
    %s132 = sadd.s32 %s131, 1
    %s133 = scalar_select %p130, %s131, %s132
    %p136 = pneg %p130
    %p137 = scmp.eq.s32.totalorder %s11, 1
    %p138 = por %p136, %p137
    %p139 = scmp.ne.s32.totalorder %s131, %s134
    %p140 = scmp.eq.s32.totalorder %s11, 0
    %p141 = por %p139, %p140
    %p142 = scmp.ne.s32.totalorder %s131, %s134
    %p143 = scmp.eq.s32.totalorder %s16, 1
    %p144 = por %p142, %p143
    %p145 = scmp.ne.s32.totalorder %s134, %s135
    %p146 = scmp.eq.s32.totalorder %s16, 0
    %p147 = por %p145, %p146
    %p148 = scmp.ne.s32.totalorder %s134, %s135
    %p149 = scmp.eq.s32.totalorder %s17, 1
    %p150 = por %p148, %p149
    %p152 = scmp.ne.s32.totalorder %s135, %s151
    %p153 = scmp.eq.s32.totalorder %s17, 0
    %p154 = por %p152, %p153
    %p155 = scmp.le.s32.totalorder 1, %s11
    %p156 = scmp.lt.s32.totalorder %s11, 3
    %p157 = pnand %p155, %p156
    %p158 = pneg %p157
    // Predicated region
    $region9: #{ccb_forward.1} parent=5 // pred_check
      _
    $region10: #{ccb_forward.1} parent=5 // pred_check_branch
      %160 = sbr.rel (%p157) target = $region12
    $region11: #{ccb_forward.1} parent=5 // pred_region
      %s161 = ssub.s32 %s11, 1
      // Predicated region
      $region13: #{ccb_forward.1} parent=11 // pred_check
        %p162 = pneg %p58
      $region14: #{ccb_forward.1} parent=11 // pred_check_branch
        %164 = sbr.rel (%p162) target = $region16
      $region15: #{ccb_forward.1} parent=11 // pred_region
        _
      $region16: #{ccb_forward.1} parent=11 // pred_fallthru
        _
      // Predicated region
      $region17: #{ccb_forward.1} parent=11 // pred_check
        %p165 = pneg %p79
      $region18: #{ccb_forward.1} parent=11 // pred_check_branch
        %167 = sbr.rel (%p165) target = $region20
      $region19: #{ccb_forward.1} parent=11 // pred_region
        _
      $region20: #{ccb_forward.1} parent=11 // pred_fallthru
        _
      // Predicated region
      $region21: #{ccb_forward.1} parent=11 // pred_check
        %p168 = pneg %p100
      $region22: #{ccb_forward.1} parent=11 // pred_check_branch
        %170 = sbr.rel (%p168) target = $region24
      $region23: #{ccb_forward.1} parent=11 // pred_region
        _
      $region24: #{ccb_forward.1} parent=11 // pred_fallthru
        _
      // Predicated region
      $region25: #{ccb_forward.1} parent=11 // pred_check
        %p171 = pneg %p121
      $region26: #{ccb_forward.1} parent=11 // pred_check_branch
        %173 = sbr.rel (%p171) target = $region28
      $region27: #{ccb_forward.1} parent=11 // pred_region
        _
      $region28: #{ccb_forward.1} parent=11 // pred_fallthru
        _
    $region12: #{ccb_forward.1} parent=5 // pred_fallthru
      _
    %p174 = scmp.lt.s32.totalorder %s11, 2
    // Predicated region
    $region29: #{ccb_forward.1} parent=5 // pred_check
      %p175 = pneg %p174
    $region30: #{ccb_forward.1} parent=5 // pred_check_branch
      %177 = sbr.rel (%p175) target = $region32
    $region31: #{ccb_forward.1} parent=5 // pred_region
      // Predicated region
      $region33: #{ccb_forward.1} parent=31 // pred_check
        %p178 = pneg %p31
      $region34: #{ccb_forward.1} parent=31 // pred_check_branch
        %180 = sbr.rel (%p178) target = $region36
      $region35: #{ccb_forward.1} parent=31 // pred_region
        %p181 = scmp.lt.s32.totalorder %s11, 1
        %s182 = scalar_select %p181, %s11, 1
        %s183 = smul.addr %s182, 32
        %s184 = smul.addr %s183, 4
        %s185 = scalar_lea.vmem %s0, %s184
      $region36: #{ccb_forward.1} parent=31 // pred_fallthru
        _
    $region32: #{ccb_forward.1} parent=5 // pred_fallthru
      _
    %p186 = scmp.le.s32.totalorder 1, %s11
    %p187 = scmp.lt.s32.totalorder %s11, 3
    %p188 = pnand %p186, %p187
    %p189 = pneg %p188
    // Predicated region
    $region37: #{ccb_forward.1} parent=5 // pred_check
      _
    $region38: #{ccb_forward.1} parent=5 // pred_check_branch
      %191 = sbr.rel (%p188) target = $region40
    $region39: #{ccb_forward.1} parent=5 // pred_region
      %s192 = ssub.s32 %s11, 1
      %p193 = scmp.lt.s32.totalorder %s16, 1
      %s194 = scalar_select %p193, %s16, 1
      %s195 = smul.addr %s194, 32
      %s196 = smul.addr %s195, 4
      %s197 = scalar_lea.vmem %s0, %s196
      %p198 = pneg %p37
      %p199 = pneg %p34
      %p200 = pneg %p58
      %p201 = pneg %p55
      %p202 = pneg %p79
      %p203 = pneg %p76
      %p204 = pneg %p100
      %p205 = pneg %p97
      %p206 = pneg %p121
      %p207 = pneg %p118
      %p208 = pneg %p147
      %p209 = pneg %p144
      %p210 = scmp.lt.s32.totalorder %s16, 1
      %s211 = scalar_select %p210, %s16, 1
      %s212 = smul.addr %s211, 2
      %s213 = smul.addr %s212, 8
      %s214 = scalar_lea.vmem %s5, %s213
      %p215 = scmp.lt.s32.totalorder %s16, 1
      %s216 = scalar_select %p215, %s16, 1
      %s217 = smul.addr %s216, 32
      %s218 = smul.addr %s217, 4
      %s219 = scalar_lea.vmem %s0, %s218
      %p220 = scmp.lt.s32.totalorder %s16, 1
      %s221 = scalar_select %p220, %s16, 1
      %s222 = smul.addr %s221, 2
      %s223 = smul.addr %s222, 8
      %s224 = scalar_lea.vmem %s5, %s223
      %vm226 = vcmask 31744
      %227 = vst.msk [vmem:[#allocation2] sm:$0xff] %vm226, 0.0
      %228 = vst.msk [vmem:[#allocation2 + $0x8] sm:$0xff] %vm226, 0.0
      %vm229 = vcmask 25600
      %230 = vst.msk [vmem:[#allocation2 + $0x10] sm:$0x3] %vm229, 0.0
      %s231 = scalar_lea.vmem [#allocation2], 408
      %232 = vst.msk [vmem:[%s231] sm:$0xff] %vm226, 0.0
      %233 = vst.msk [vmem:[%s231 + $0x8] sm:$0xff] %vm226, 0.0
      %234 = vst.msk [vmem:[%s231 + $0x10] sm:$0x3] %vm229, 0.0
      %s235 = scalar_lea.vmem [#allocation2], 24
      %vm236 = vcmask 24576
      %237 = vst.msk [vmem:[%s235] sm:$0x1] %vm236, 0.0
      %238 = vst.msk [vmem:[%s235 + $0x18] sm:$0x1] %vm236, 0.0
      %239 = vst.msk [vmem:[%s235 + $0x30] sm:$0x1] %vm236, 0.0
      %240 = vst.msk [vmem:[%s235 + $0x48] sm:$0x1] %vm236, 0.0
      %241 = vst.msk [vmem:[%s235 + $0x60] sm:$0x1] %vm236, 0.0
      %242 = vst.msk [vmem:[%s235 + $0x78] sm:$0x1] %vm236, 0.0
      %243 = vst.msk [vmem:[%s235 + $0x90] sm:$0x1] %vm236, 0.0
      %244 = vst.msk [vmem:[%s235 + $0xa8] sm:$0x1] %vm236, 0.0
      %245 = vst.msk [vmem:[%s235 + $0xc0] sm:$0x1] %vm236, 0.0
      %246 = vst.msk [vmem:[%s235 + $0xd8] sm:$0x1] %vm236, 0.0
      %247 = vst.msk [vmem:[%s235 + $0xf0] sm:$0x1] %vm236, 0.0
      %248 = vst.msk [vmem:[%s235 + $0x108] sm:$0x1] %vm236, 0.0
      %249 = vst.msk [vmem:[%s235 + $0x120] sm:$0x1] %vm236, 0.0
      %250 = vst.msk [vmem:[%s235 + $0x138] sm:$0x1] %vm236, 0.0
      %251 = vst.msk [vmem:[%s235 + $0x150] sm:$0x1] %vm236, 0.0
      %252 = vst.msk [vmem:[%s235 + $0x168] sm:$0x1] %vm236, 0.0
      %253 = vst.msk [vmem:[%s235 + $0x11] sm:$0x1] %vm236, 0.0
      %254 = vst.msk [vmem:[%s235 + $0x29] sm:$0x1] %vm236, 0.0
      %255 = vst.msk [vmem:[%s235 + $0x41] sm:$0x1] %vm236, 0.0
      %256 = vst.msk [vmem:[%s235 + $0x59] sm:$0x1] %vm236, 0.0
      %257 = vst.msk [vmem:[%s235 + $0x71] sm:$0x1] %vm236, 0.0
      %258 = vst.msk [vmem:[%s235 + $0x89] sm:$0x1] %vm236, 0.0
      %259 = vst.msk [vmem:[%s235 + $0xa1] sm:$0x1] %vm236, 0.0
      %260 = vst.msk [vmem:[%s235 + $0xb9] sm:$0x1] %vm236, 0.0
      %261 = vst.msk [vmem:[%s235 + $0xd1] sm:$0x1] %vm236, 0.0
      %262 = vst.msk [vmem:[%s235 + $0xe9] sm:$0x1] %vm236, 0.0
      %263 = vst.msk [vmem:[%s235 + $0x101] sm:$0x1] %vm236, 0.0
      %264 = vst.msk [vmem:[%s235 + $0x119] sm:$0x1] %vm236, 0.0
      %265 = vst.msk [vmem:[%s235 + $0x131] sm:$0x1] %vm236, 0.0
      %266 = vst.msk [vmem:[%s235 + $0x149] sm:$0x1] %vm236, 0.0
      %267 = vst.msk [vmem:[%s235 + $0x161] sm:$0x1] %vm236, 0.0
      %268 = vst.msk [vmem:[%s235 + $0x179] sm:$0x1] %vm236, 0.0
      %vm269 = vcmask 64512
      %270 = vst.msk [vmem:[#allocation3] sm:$0xff] %vm269, 0.0
      %271 = vst.msk [vmem:[#allocation3 + $0x8] sm:$0xff] %vm269, 0.0
      %vm272 = vcmask 58368
      %273 = vst.msk [vmem:[#allocation3 + $0x10] sm:$0x3] %vm272, 0.0
      %s274 = scalar_lea.vmem [#allocation3], 408
      %275 = vst.msk [vmem:[%s274] sm:$0xff] %vm269, 0.0
      %276 = vst.msk [vmem:[%s274 + $0x8] sm:$0xff] %vm269, 0.0
      %277 = vst.msk [vmem:[%s274 + $0x10] sm:$0x3] %vm272, 0.0
      %s278 = scalar_lea.vmem [#allocation3], 24
      %vm279 = vcmask 57344
      %280 = vst.msk [vmem:[%s278] sm:$0x1] %vm279, 0.0
      %281 = vst.msk [vmem:[%s278 + $0x18] sm:$0x1] %vm279, 0.0
      %282 = vst.msk [vmem:[%s278 + $0x30] sm:$0x1] %vm279, 0.0
      %283 = vst.msk [vmem:[%s278 + $0x48] sm:$0x1] %vm279, 0.0
      %284 = vst.msk [vmem:[%s278 + $0x60] sm:$0x1] %vm279, 0.0
      %285 = vst.msk [vmem:[%s278 + $0x78] sm:$0x1] %vm279, 0.0
      %286 = vst.msk [vmem:[%s278 + $0x90] sm:$0x1] %vm279, 0.0
      %287 = vst.msk [vmem:[%s278 + $0xa8] sm:$0x1] %vm279, 0.0
      %288 = vst.msk [vmem:[%s278 + $0xc0] sm:$0x1] %vm279, 0.0
      %289 = vst.msk [vmem:[%s278 + $0xd8] sm:$0x1] %vm279, 0.0
      %290 = vst.msk [vmem:[%s278 + $0xf0] sm:$0x1] %vm279, 0.0
      %291 = vst.msk [vmem:[%s278 + $0x108] sm:$0x1] %vm279, 0.0
      %292 = vst.msk [vmem:[%s278 + $0x120] sm:$0x1] %vm279, 0.0
      %293 = vst.msk [vmem:[%s278 + $0x138] sm:$0x1] %vm279, 0.0
      %294 = vst.msk [vmem:[%s278 + $0x150] sm:$0x1] %vm279, 0.0
      %295 = vst.msk [vmem:[%s278 + $0x168] sm:$0x1] %vm279, 0.0
      %296 = vst.msk [vmem:[%s278 + $0x11] sm:$0x1] %vm279, 0.0
      %297 = vst.msk [vmem:[%s278 + $0x29] sm:$0x1] %vm279, 0.0
      %298 = vst.msk [vmem:[%s278 + $0x41] sm:$0x1] %vm279, 0.0
      %299 = vst.msk [vmem:[%s278 + $0x59] sm:$0x1] %vm279, 0.0
      %300 = vst.msk [vmem:[%s278 + $0x71] sm:$0x1] %vm279, 0.0
      %301 = vst.msk [vmem:[%s278 + $0x89] sm:$0x1] %vm279, 0.0
      %302 = vst.msk [vmem:[%s278 + $0xa1] sm:$0x1] %vm279, 0.0
      %303 = vst.msk [vmem:[%s278 + $0xb9] sm:$0x1] %vm279, 0.0
      %304 = vst.msk [vmem:[%s278 + $0xd1] sm:$0x1] %vm279, 0.0
      %305 = vst.msk [vmem:[%s278 + $0xe9] sm:$0x1] %vm279, 0.0
      %306 = vst.msk [vmem:[%s278 + $0x101] sm:$0x1] %vm279, 0.0
      %307 = vst.msk [vmem:[%s278 + $0x119] sm:$0x1] %vm279, 0.0
      %308 = vst.msk [vmem:[%s278 + $0x131] sm:$0x1] %vm279, 0.0
      %309 = vst.msk [vmem:[%s278 + $0x149] sm:$0x1] %vm279, 0.0
      %310 = vst.msk [vmem:[%s278 + $0x161] sm:$0x1] %vm279, 0.0
      %311 = vst.msk [vmem:[%s278 + $0x179] sm:$0x1] %vm279, 0.0
      %v312 = vld [vmem:[%s219] sm:$0xf]
      %v313 = vld [vmem:[%s219 + $0x4] sm:$0xf]
      %v314 = vld [vmem:[%s219 + $0x8] sm:$0xf]
      %v315 = vld [vmem:[%s219 + $0xc] sm:$0xf]
      %v316 = vld [vmem:[%s219 + $0x10] sm:$0xf]
      %v317 = vld [vmem:[%s219 + $0x14] sm:$0xf]
      %v318 = vld [vmem:[%s219 + $0x18] sm:$0xf]
      %v319 = vld [vmem:[%s219 + $0x1c] sm:$0xf]
      %v320 = vld [vmem:[%s219 + $0x20] sm:$0xf]
      %v321 = vld [vmem:[%s219 + $0x24] sm:$0xf]
      %v322 = vld [vmem:[%s219 + $0x28] sm:$0xf]
      %v323 = vld [vmem:[%s219 + $0x2c] sm:$0xf]
      %v324 = vld [vmem:[%s219 + $0x30] sm:$0xf]
      %v325 = vld [vmem:[%s219 + $0x34] sm:$0xf]
      %v326 = vld [vmem:[%s219 + $0x38] sm:$0xf]
      %v327 = vld [vmem:[%s219 + $0x3c] sm:$0xf]
      %v328 = vld [vmem:[%s219 + $0x40] sm:$0xf]
      %v329 = vld [vmem:[%s219 + $0x44] sm:$0xf]
      %v330 = vld [vmem:[%s219 + $0x48] sm:$0xf]
      %v331 = vld [vmem:[%s219 + $0x4c] sm:$0xf]
      %v332 = vld [vmem:[%s219 + $0x50] sm:$0xf]
      %v333 = vld [vmem:[%s219 + $0x54] sm:$0xf]
      %v334 = vld [vmem:[%s219 + $0x58] sm:$0xf]
      %v335 = vld [vmem:[%s219 + $0x5c] sm:$0xf]
      %v336 = vld [vmem:[%s219 + $0x60] sm:$0xf]
      %v337 = vld [vmem:[%s219 + $0x64] sm:$0xf]
      %v338 = vld [vmem:[%s219 + $0x68] sm:$0xf]
      %v339 = vld [vmem:[%s219 + $0x6c] sm:$0xf]
      %v340 = vld [vmem:[%s219 + $0x70] sm:$0xf]
      %v341 = vld [vmem:[%s219 + $0x74] sm:$0xf]
      %v342 = vld [vmem:[%s219 + $0x78] sm:$0xf]
      %v343 = vld [vmem:[%s219 + $0x7c] sm:$0xf]
      %v344 = vunpack.c.l.bf16 %v312
      %v345 = vunpack.c.l.bf16 %v313
      %v346 = vunpack.c.l.bf16 %v314
      %v347 = vunpack.c.l.bf16 %v315
      %v348 = vunpack.c.l.bf16 %v316
      %v349 = vunpack.c.l.bf16 %v317
      %v350 = vunpack.c.l.bf16 %v318
      %v351 = vunpack.c.l.bf16 %v319
      %v352 = vunpack.c.l.bf16 %v320
      %v353 = vunpack.c.l.bf16 %v321
      %v354 = vunpack.c.l.bf16 %v322
      %v355 = vunpack.c.l.bf16 %v323
      %v356 = vunpack.c.l.bf16 %v324
      %v357 = vunpack.c.l.bf16 %v325
      %v358 = vunpack.c.l.bf16 %v326
      %v359 = vunpack.c.l.bf16 %v327
      %v360 = vunpack.c.l.bf16 %v328
      %v361 = vunpack.c.l.bf16 %v329
      %v362 = vunpack.c.l.bf16 %v330
      %v363 = vunpack.c.l.bf16 %v331
      %v364 = vunpack.c.l.bf16 %v332
      %v365 = vunpack.c.l.bf16 %v333
      %v366 = vunpack.c.l.bf16 %v334
      %v367 = vunpack.c.l.bf16 %v335
      %v368 = vunpack.c.l.bf16 %v336
      %v369 = vunpack.c.l.bf16 %v337
      %v370 = vunpack.c.l.bf16 %v338
      %v371 = vunpack.c.l.bf16 %v339
      %v372 = vunpack.c.l.bf16 %v340
      %v373 = vunpack.c.l.bf16 %v341
      %v374 = vunpack.c.l.bf16 %v342
      %v375 = vunpack.c.l.bf16 %v343
      %376 = vst.msk [vmem:[%s235 + $0x1] sm:$0xff] %vm226, %v344
      %377 = vst.msk [vmem:[%s235 + $0x9] sm:$0xff] %vm226, %v345
      %378 = vst.msk [vmem:[%s235 + $0x19] sm:$0xff] %vm226, %v346
      %379 = vst.msk [vmem:[%s235 + $0x21] sm:$0xff] %vm226, %v347
      %380 = vst.msk [vmem:[%s235 + $0x31] sm:$0xff] %vm226, %v348
      %381 = vst.msk [vmem:[%s235 + $0x39] sm:$0xff] %vm226, %v349
      %382 = vst.msk [vmem:[%s235 + $0x49] sm:$0xff] %vm226, %v350
      %383 = vst.msk [vmem:[%s235 + $0x51] sm:$0xff] %vm226, %v351
      %384 = vst.msk [vmem:[%s235 + $0x61] sm:$0xff] %vm226, %v352
      %385 = vst.msk [vmem:[%s235 + $0x69] sm:$0xff] %vm226, %v353
      %386 = vst.msk [vmem:[%s235 + $0x79] sm:$0xff] %vm226, %v354
      %387 = vst.msk [vmem:[%s235 + $0x81] sm:$0xff] %vm226, %v355
      %388 = vst.msk [vmem:[%s235 + $0x91] sm:$0xff] %vm226, %v356
      %389 = vst.msk [vmem:[%s235 + $0x99] sm:$0xff] %vm226, %v357
      %390 = vst.msk [vmem:[%s235 + $0xa9] sm:$0xff] %vm226, %v358
      %391 = vst.msk [vmem:[%s235 + $0xb1] sm:$0xff] %vm226, %v359
      %392 = vst.msk [vmem:[%s235 + $0xc1] sm:$0xff] %vm226, %v360
      %393 = vst.msk [vmem:[%s235 + $0xc9] sm:$0xff] %vm226, %v361
      %394 = vst.msk [vmem:[%s235 + $0xd9] sm:$0xff] %vm226, %v362
      %395 = vst.msk [vmem:[%s235 + $0xe1] sm:$0xff] %vm226, %v363
      %396 = vst.msk [vmem:[%s235 + $0xf1] sm:$0xff] %vm226, %v364
      %397 = vst.msk [vmem:[%s235 + $0xf9] sm:$0xff] %vm226, %v365
      %398 = vst.msk [vmem:[%s235 + $0x109] sm:$0xff] %vm226, %v366
      %399 = vst.msk [vmem:[%s235 + $0x111] sm:$0xff] %vm226, %v367
      %400 = vst.msk [vmem:[%s235 + $0x121] sm:$0xff] %vm226, %v368
      %401 = vst.msk [vmem:[%s235 + $0x129] sm:$0xff] %vm226, %v369
      %402 = vst.msk [vmem:[%s235 + $0x139] sm:$0xff] %vm226, %v370
      %403 = vst.msk [vmem:[%s235 + $0x141] sm:$0xff] %vm226, %v371
      %404 = vst.msk [vmem:[%s235 + $0x151] sm:$0xff] %vm226, %v372
      %405 = vst.msk [vmem:[%s235 + $0x159] sm:$0xff] %vm226, %v373
      %406 = vst.msk [vmem:[%s235 + $0x169] sm:$0xff] %vm226, %v374
      %407 = vst.msk [vmem:[%s235 + $0x171] sm:$0xff] %vm226, %v375
      %v408 = vld [vmem:[#allocation2] sm:$0xff]
      %v409 = vld [vmem:[#allocation2 + $0x8] sm:$0xff]
      %v410 = vld [vmem:[#allocation2 + $0x18] sm:$0xff]
      %v411 = vld [vmem:[#allocation2 + $0x20] sm:$0xff]
      %v412 = vld [vmem:[#allocation2 + $0x30] sm:$0xff]
      %v413 = vld [vmem:[#allocation2 + $0x38] sm:$0xff]
      %v414 = vld [vmem:[#allocation2 + $0x48] sm:$0xff]
      %v415 = vld [vmem:[#allocation2 + $0x50] sm:$0xff]
      %v416 = vld [vmem:[#allocation2 + $0x60] sm:$0xff]
      %v417 = vld [vmem:[#allocation2 + $0x68] sm:$0xff]
      %v418 = vld [vmem:[#allocation2 + $0x78] sm:$0xff]
      %v419 = vld [vmem:[#allocation2 + $0x80] sm:$0xff]
      %v420 = vld [vmem:[#allocation2 + $0x90] sm:$0xff]
      %v421 = vld [vmem:[#allocation2 + $0x98] sm:$0xff]
      %v422 = vld [vmem:[#allocation2 + $0xa8] sm:$0xff]
      %v423 = vld [vmem:[#allocation2 + $0xb0] sm:$0xff]
      %v424 = vld [vmem:[#allocation2 + $0xc0] sm:$0xff]
      %v425 = vld [vmem:[#allocation2 + $0xc8] sm:$0xff]
      %v426 = vld [vmem:[#allocation2 + $0xd8] sm:$0xff]
      %v427 = vld [vmem:[#allocation2 + $0xe0] sm:$0xff]
      %v428 = vld [vmem:[#allocation2 + $0xf0] sm:$0xff]
      %v429 = vld [vmem:[#allocation2 + $0xf8] sm:$0xff]
      %v430 = vld [vmem:[#allocation2 + $0x108] sm:$0xff]
      %v431 = vld [vmem:[#allocation2 + $0x110] sm:$0xff]
      %v432 = vld [vmem:[#allocation2 + $0x120] sm:$0xff]
      %v433 = vld [vmem:[#allocation2 + $0x128] sm:$0xff]
      %v434 = vld [vmem:[#allocation2 + $0x138] sm:$0xff]
      %v435 = vld [vmem:[#allocation2 + $0x140] sm:$0xff]
      %v436 = vld [vmem:[#allocation2 + $0x150] sm:$0xff]
      %v437 = vld [vmem:[#allocation2 + $0x158] sm:$0xff]
      %v438 = vld [vmem:[#allocation2 + $0x168] sm:$0xff]
      %v439 = vld [vmem:[#allocation2 + $0x170] sm:$0xff]
      %v440 = vpack.c.bf16 %v409, %v408
      %v441 = vpack.c.bf16 %v411, %v410
      %v442 = vpack.c.bf16 %v413, %v412
      %v443 = vpack.c.bf16 %v415, %v414
      %v444 = vpack.c.bf16 %v417, %v416
      %v445 = vpack.c.bf16 %v419, %v418
      %v446 = vpack.c.bf16 %v421, %v420
      %v447 = vpack.c.bf16 %v423, %v422
      %v448 = vpack.c.bf16 %v425, %v424
      %v449 = vpack.c.bf16 %v427, %v426
      %v450 = vpack.c.bf16 %v429, %v428
      %v451 = vpack.c.bf16 %v431, %v430
      %v452 = vpack.c.bf16 %v433, %v432
      %v453 = vpack.c.bf16 %v435, %v434
      %v454 = vpack.c.bf16 %v437, %v436
      %v455 = vpack.c.bf16 %v439, %v438
      %456 = vst.msk [vmem:[#allocation4] sm:$0xff] %vm226, %v440
      %457 = vst.msk [vmem:[#allocation4 + $0x8] sm:$0xff] %vm226, %v441
      %458 = vst.msk [vmem:[#allocation4 + $0x10] sm:$0xff] %vm226, %v442
      %459 = vst.msk [vmem:[#allocation4 + $0x18] sm:$0xff] %vm226, %v443
      %460 = vst.msk [vmem:[#allocation4 + $0x20] sm:$0xff] %vm226, %v444
      %461 = vst.msk [vmem:[#allocation4 + $0x28] sm:$0xff] %vm226, %v445
      %462 = vst.msk [vmem:[#allocation4 + $0x30] sm:$0xff] %vm226, %v446
      %463 = vst.msk [vmem:[#allocation4 + $0x38] sm:$0xff] %vm226, %v447
      %464 = vst.msk [vmem:[#allocation4 + $0x40] sm:$0xff] %vm226, %v448
      %465 = vst.msk [vmem:[#allocation4 + $0x48] sm:$0xff] %vm226, %v449
      %466 = vst.msk [vmem:[#allocation4 + $0x50] sm:$0xff] %vm226, %v450
      %467 = vst.msk [vmem:[#allocation4 + $0x58] sm:$0xff] %vm226, %v451
      %468 = vst.msk [vmem:[#allocation4 + $0x60] sm:$0xff] %vm226, %v452
      %469 = vst.msk [vmem:[#allocation4 + $0x68] sm:$0xff] %vm226, %v453
      %470 = vst.msk [vmem:[#allocation4 + $0x70] sm:$0xff] %vm226, %v454
      %471 = vst.msk [vmem:[#allocation4 + $0x78] sm:$0xff] %vm226, %v455
      %v472 = vld [vmem:[#allocation2 + $0x1] sm:$0xff]
      %v473 = vld [vmem:[#allocation2 + $0x9] sm:$0xff]
      %v474 = vld [vmem:[#allocation2 + $0x19] sm:$0xff]
      %v475 = vld [vmem:[#allocation2 + $0x21] sm:$0xff]
      %v476 = vld [vmem:[#allocation2 + $0x31] sm:$0xff]
      %v477 = vld [vmem:[#allocation2 + $0x39] sm:$0xff]
      %v478 = vld [vmem:[#allocation2 + $0x49] sm:$0xff]
      %v479 = vld [vmem:[#allocation2 + $0x51] sm:$0xff]
      %v480 = vld [vmem:[#allocation2 + $0x61] sm:$0xff]
      %v481 = vld [vmem:[#allocation2 + $0x69] sm:$0xff]
      %v482 = vld [vmem:[#allocation2 + $0x79] sm:$0xff]
      %v483 = vld [vmem:[#allocation2 + $0x81] sm:$0xff]
      %v484 = vld [vmem:[#allocation2 + $0x91] sm:$0xff]
      %v485 = vld [vmem:[#allocation2 + $0x99] sm:$0xff]
      %v486 = vld [vmem:[#allocation2 + $0xa9] sm:$0xff]
      %v487 = vld [vmem:[#allocation2 + $0xb1] sm:$0xff]
      %v488 = vld [vmem:[#allocation2 + $0xc1] sm:$0xff]
      %v489 = vld [vmem:[#allocation2 + $0xc9] sm:$0xff]
      %v490 = vld [vmem:[#allocation2 + $0xd9] sm:$0xff]
      %v491 = vld [vmem:[#allocation2 + $0xe1] sm:$0xff]
      %v492 = vld [vmem:[#allocation2 + $0xf1] sm:$0xff]
      %v493 = vld [vmem:[#allocation2 + $0xf9] sm:$0xff]
      %v494 = vld [vmem:[#allocation2 + $0x109] sm:$0xff]
      %v495 = vld [vmem:[#allocation2 + $0x111] sm:$0xff]
      %v496 = vld [vmem:[#allocation2 + $0x121] sm:$0xff]
      %v497 = vld [vmem:[#allocation2 + $0x129] sm:$0xff]
      %v498 = vld [vmem:[#allocation2 + $0x139] sm:$0xff]
      %v499 = vld [vmem:[#allocation2 + $0x141] sm:$0xff]
      %v500 = vld [vmem:[#allocation2 + $0x151] sm:$0xff]
      %v501 = vld [vmem:[#allocation2 + $0x159] sm:$0xff]
      %v502 = vld [vmem:[#allocation2 + $0x169] sm:$0xff]
      %v503 = vld [vmem:[#allocation2 + $0x171] sm:$0xff]
      %v504 = vpack.c.bf16 %v473, %v472
      %v505 = vpack.c.bf16 %v475, %v474
      %v506 = vpack.c.bf16 %v477, %v476
      %v507 = vpack.c.bf16 %v479, %v478
      %v508 = vpack.c.bf16 %v481, %v480
      %v509 = vpack.c.bf16 %v483, %v482
      %v510 = vpack.c.bf16 %v485, %v484
      %v511 = vpack.c.bf16 %v487, %v486
      %v512 = vpack.c.bf16 %v489, %v488
      %v513 = vpack.c.bf16 %v491, %v490
      %v514 = vpack.c.bf16 %v493, %v492
      %v515 = vpack.c.bf16 %v495, %v494
      %v516 = vpack.c.bf16 %v497, %v496
      %v517 = vpack.c.bf16 %v499, %v498
      %v518 = vpack.c.bf16 %v501, %v500
      %v519 = vpack.c.bf16 %v503, %v502
      %536 = vrot.lane.b32.xlu0 %v504, 4
      %v537 = vpop.permute.xlu0 %536
      %538 = vrot.lane.b32.xlu0 %v505, 4
      %v539 = vpop.permute.xlu0 %538
      %540 = vrot.lane.b32.xlu0 %v506, 4
      %v541 = vpop.permute.xlu0 %540
      %542 = vrot.lane.b32.xlu0 %v507, 4
      %v543 = vpop.permute.xlu0 %542
      %544 = vrot.lane.b32.xlu0 %v508, 4
      %v545 = vpop.permute.xlu0 %544
      %546 = vrot.lane.b32.xlu0 %v509, 4
      %v547 = vpop.permute.xlu0 %546
      %548 = vrot.lane.b32.xlu0 %v510, 4
      %v549 = vpop.permute.xlu0 %548
      %550 = vrot.lane.b32.xlu0 %v511, 4
      %v551 = vpop.permute.xlu0 %550
      %552 = vrot.lane.b32.xlu0 %v512, 4
      %v553 = vpop.permute.xlu0 %552
      %554 = vrot.lane.b32.xlu0 %v513, 4
      %v555 = vpop.permute.xlu0 %554
      %556 = vrot.lane.b32.xlu0 %v514, 4
      %v557 = vpop.permute.xlu0 %556
      %558 = vrot.lane.b32.xlu0 %v515, 4
      %v559 = vpop.permute.xlu0 %558
      %560 = vrot.lane.b32.xlu0 %v516, 4
      %v561 = vpop.permute.xlu0 %560
      %562 = vrot.lane.b32.xlu0 %v517, 4
      %v563 = vpop.permute.xlu0 %562
      %564 = vrot.lane.b32.xlu0 %v518, 4
      %v565 = vpop.permute.xlu0 %564
      %566 = vrot.lane.b32.xlu0 %v519, 4
      %v567 = vpop.permute.xlu0 %566
      %vm584 = vcmask 64544
      %585 = vst.msk [vmem:[#allocation4] sm:$0xff] %vm584, %v537
      %586 = vst.msk [vmem:[#allocation4 + $0x8] sm:$0xff] %vm584, %v539
      %587 = vst.msk [vmem:[#allocation4 + $0x10] sm:$0xff] %vm584, %v541
      %588 = vst.msk [vmem:[#allocation4 + $0x18] sm:$0xff] %vm584, %v543
      %589 = vst.msk [vmem:[#allocation4 + $0x20] sm:$0xff] %vm584, %v545
      %590 = vst.msk [vmem:[#allocation4 + $0x28] sm:$0xff] %vm584, %v547
      %591 = vst.msk [vmem:[#allocation4 + $0x30] sm:$0xff] %vm584, %v549
      %592 = vst.msk [vmem:[#allocation4 + $0x38] sm:$0xff] %vm584, %v551
      %593 = vst.msk [vmem:[#allocation4 + $0x40] sm:$0xff] %vm584, %v553
      %594 = vst.msk [vmem:[#allocation4 + $0x48] sm:$0xff] %vm584, %v555
      %595 = vst.msk [vmem:[#allocation4 + $0x50] sm:$0xff] %vm584, %v557
      %596 = vst.msk [vmem:[#allocation4 + $0x58] sm:$0xff] %vm584, %v559
      %597 = vst.msk [vmem:[#allocation4 + $0x60] sm:$0xff] %vm584, %v561
      %598 = vst.msk [vmem:[#allocation4 + $0x68] sm:$0xff] %vm584, %v563
      %599 = vst.msk [vmem:[#allocation4 + $0x70] sm:$0xff] %vm584, %v565
      %600 = vst.msk [vmem:[#allocation4 + $0x78] sm:$0xff] %vm584, %v567
      %v601 = vld [vmem:[#allocation2 + $0x2] sm:$0xff]
      %v602 = vld [vmem:[#allocation2 + $0xa] sm:$0xff]
      %v603 = vld [vmem:[#allocation2 + $0x1a] sm:$0xff]
      %v604 = vld [vmem:[#allocation2 + $0x22] sm:$0xff]
      %v605 = vld [vmem:[#allocation2 + $0x32] sm:$0xff]
      %v606 = vld [vmem:[#allocation2 + $0x3a] sm:$0xff]
      %v607 = vld [vmem:[#allocation2 + $0x4a] sm:$0xff]
      %v608 = vld [vmem:[#allocation2 + $0x52] sm:$0xff]
      %v609 = vld [vmem:[#allocation2 + $0x62] sm:$0xff]
      %v610 = vld [vmem:[#allocation2 + $0x6a] sm:$0xff]
      %v611 = vld [vmem:[#allocation2 + $0x7a] sm:$0xff]
      %v612 = vld [vmem:[#allocation2 + $0x82] sm:$0xff]
      %v613 = vld [vmem:[#allocation2 + $0x92] sm:$0xff]
      %v614 = vld [vmem:[#allocation2 + $0x9a] sm:$0xff]
      %v615 = vld [vmem:[#allocation2 + $0xaa] sm:$0xff]
      %v616 = vld [vmem:[#allocation2 + $0xb2] sm:$0xff]
      %v617 = vld [vmem:[#allocation2 + $0xc2] sm:$0xff]
      %v618 = vld [vmem:[#allocation2 + $0xca] sm:$0xff]
      %v619 = vld [vmem:[#allocation2 + $0xda] sm:$0xff]
      %v620 = vld [vmem:[#allocation2 + $0xe2] sm:$0xff]
      %v621 = vld [vmem:[#allocation2 + $0xf2] sm:$0xff]
      %v622 = vld [vmem:[#allocation2 + $0xfa] sm:$0xff]
      %v623 = vld [vmem:[#allocation2 + $0x10a] sm:$0xff]
      %v624 = vld [vmem:[#allocation2 + $0x112] sm:$0xff]
      %v625 = vld [vmem:[#allocation2 + $0x122] sm:$0xff]
      %v626 = vld [vmem:[#allocation2 + $0x12a] sm:$0xff]
      %v627 = vld [vmem:[#allocation2 + $0x13a] sm:$0xff]
      %v628 = vld [vmem:[#allocation2 + $0x142] sm:$0xff]
      %v629 = vld [vmem:[#allocation2 + $0x152] sm:$0xff]
      %v630 = vld [vmem:[#allocation2 + $0x15a] sm:$0xff]
      %v631 = vld [vmem:[#allocation2 + $0x16a] sm:$0xff]
      %v632 = vld [vmem:[#allocation2 + $0x172] sm:$0xff]
      %v633 = vpack.c.bf16 %v602, %v601
      %v634 = vpack.c.bf16 %v604, %v603
      %v635 = vpack.c.bf16 %v606, %v605
      %v636 = vpack.c.bf16 %v608, %v607
      %v637 = vpack.c.bf16 %v610, %v609
      %v638 = vpack.c.bf16 %v612, %v611
      %v639 = vpack.c.bf16 %v614, %v613
      %v640 = vpack.c.bf16 %v616, %v615
      %v641 = vpack.c.bf16 %v618, %v617
      %v642 = vpack.c.bf16 %v620, %v619
      %v643 = vpack.c.bf16 %v622, %v621
      %v644 = vpack.c.bf16 %v624, %v623
      %v645 = vpack.c.bf16 %v626, %v625
      %v646 = vpack.c.bf16 %v628, %v627
      %v647 = vpack.c.bf16 %v630, %v629
      %v648 = vpack.c.bf16 %v632, %v631
      %665 = vrot.lane.b32.xlu0 %v633, 8
      %v666 = vpop.permute.xlu0 %665
      %667 = vrot.lane.b32.xlu0 %v634, 8
      %v668 = vpop.permute.xlu0 %667
      %669 = vrot.lane.b32.xlu0 %v635, 8
      %v670 = vpop.permute.xlu0 %669
      %671 = vrot.lane.b32.xlu0 %v636, 8
      %v672 = vpop.permute.xlu0 %671
      %673 = vrot.lane.b32.xlu0 %v637, 8
      %v674 = vpop.permute.xlu0 %673
      %675 = vrot.lane.b32.xlu0 %v638, 8
      %v676 = vpop.permute.xlu0 %675
      %677 = vrot.lane.b32.xlu0 %v639, 8
      %v678 = vpop.permute.xlu0 %677
      %679 = vrot.lane.b32.xlu0 %v640, 8
      %v680 = vpop.permute.xlu0 %679
      %681 = vrot.lane.b32.xlu0 %v641, 8
      %v682 = vpop.permute.xlu0 %681
      %683 = vrot.lane.b32.xlu0 %v642, 8
      %v684 = vpop.permute.xlu0 %683
      %685 = vrot.lane.b32.xlu0 %v643, 8
      %v686 = vpop.permute.xlu0 %685
      %687 = vrot.lane.b32.xlu0 %v644, 8
      %v688 = vpop.permute.xlu0 %687
      %689 = vrot.lane.b32.xlu0 %v645, 8
      %v690 = vpop.permute.xlu0 %689
      %691 = vrot.lane.b32.xlu0 %v646, 8
      %v692 = vpop.permute.xlu0 %691
      %693 = vrot.lane.b32.xlu0 %v647, 8
      %v694 = vpop.permute.xlu0 %693
      %695 = vrot.lane.b32.xlu0 %v648, 8
      %v696 = vpop.permute.xlu0 %695
      %vm713 = vcmask 97344
      %714 = vst.msk [vmem:[#allocation4] sm:$0xff] %vm713, %v666
      %715 = vst.msk [vmem:[#allocation4 + $0x8] sm:$0xff] %vm713, %v668
      %716 = vst.msk [vmem:[#allocation4 + $0x10] sm:$0xff] %vm713, %v670
      %717 = vst.msk [vmem:[#allocation4 + $0x18] sm:$0xff] %vm713, %v672
      %718 = vst.msk [vmem:[#allocation4 + $0x20] sm:$0xff] %vm713, %v674
      %719 = vst.msk [vmem:[#allocation4 + $0x28] sm:$0xff] %vm713, %v676
      %720 = vst.msk [vmem:[#allocation4 + $0x30] sm:$0xff] %vm713, %v678
      %721 = vst.msk [vmem:[#allocation4 + $0x38] sm:$0xff] %vm713, %v680
      %722 = vst.msk [vmem:[#allocation4 + $0x40] sm:$0xff] %vm713, %v682
      %723 = vst.msk [vmem:[#allocation4 + $0x48] sm:$0xff] %vm713, %v684
      %724 = vst.msk [vmem:[#allocation4 + $0x50] sm:$0xff] %vm713, %v686
      %725 = vst.msk [vmem:[#allocation4 + $0x58] sm:$0xff] %vm713, %v688
      %726 = vst.msk [vmem:[#allocation4 + $0x60] sm:$0xff] %vm713, %v690
      %727 = vst.msk [vmem:[#allocation4 + $0x68] sm:$0xff] %vm713, %v692
      %728 = vst.msk [vmem:[#allocation4 + $0x70] sm:$0xff] %vm713, %v694
      %729 = vst.msk [vmem:[#allocation4 + $0x78] sm:$0xff] %vm713, %v696
      %v730 = vld [vmem:[%s235] sm:$0xff]
      %v731 = vld [vmem:[%s235 + $0x8] sm:$0xff]
      %v732 = vld [vmem:[%s235 + $0x18] sm:$0xff]
      %v733 = vld [vmem:[%s235 + $0x20] sm:$0xff]
      %v734 = vld [vmem:[%s235 + $0x30] sm:$0xff]
      %v735 = vld [vmem:[%s235 + $0x38] sm:$0xff]
      %v736 = vld [vmem:[%s235 + $0x48] sm:$0xff]
      %v737 = vld [vmem:[%s235 + $0x50] sm:$0xff]
      %v738 = vld [vmem:[%s235 + $0x60] sm:$0xff]
      %v739 = vld [vmem:[%s235 + $0x68] sm:$0xff]
      %v740 = vld [vmem:[%s235 + $0x78] sm:$0xff]
      %v741 = vld [vmem:[%s235 + $0x80] sm:$0xff]
      %v742 = vld [vmem:[%s235 + $0x90] sm:$0xff]
      %v743 = vld [vmem:[%s235 + $0x98] sm:$0xff]
      %v744 = vld [vmem:[%s235 + $0xa8] sm:$0xff]
      %v745 = vld [vmem:[%s235 + $0xb0] sm:$0xff]
      %v746 = vld [vmem:[%s235 + $0xc0] sm:$0xff]
      %v747 = vld [vmem:[%s235 + $0xc8] sm:$0xff]
      %v748 = vld [vmem:[%s235 + $0xd8] sm:$0xff]
      %v749 = vld [vmem:[%s235 + $0xe0] sm:$0xff]
      %v750 = vld [vmem:[%s235 + $0xf0] sm:$0xff]
      %v751 = vld [vmem:[%s235 + $0xf8] sm:$0xff]
      %v752 = vld [vmem:[%s235 + $0x108] sm:$0xff]
      %v753 = vld [vmem:[%s235 + $0x110] sm:$0xff]
      %v754 = vld [vmem:[%s235 + $0x120] sm:$0xff]
      %v755 = vld [vmem:[%s235 + $0x128] sm:$0xff]
      %v756 = vld [vmem:[%s235 + $0x138] sm:$0xff]
      %v757 = vld [vmem:[%s235 + $0x140] sm:$0xff]
      %v758 = vld [vmem:[%s235 + $0x150] sm:$0xff]
      %v759 = vld [vmem:[%s235 + $0x158] sm:$0xff]
      %v760 = vld [vmem:[%s235 + $0x168] sm:$0xff]
      %v761 = vld [vmem:[%s235 + $0x170] sm:$0xff]
      %v762 = vpack.c.bf16 %v731, %v730
      %v763 = vpack.c.bf16 %v733, %v732
      %v764 = vpack.c.bf16 %v735, %v734
      %v765 = vpack.c.bf16 %v737, %v736
      %v766 = vpack.c.bf16 %v739, %v738
      %v767 = vpack.c.bf16 %v741, %v740
      %v768 = vpack.c.bf16 %v743, %v742
      %v769 = vpack.c.bf16 %v745, %v744
      %v770 = vpack.c.bf16 %v747, %v746
      %v771 = vpack.c.bf16 %v749, %v748
      %v772 = vpack.c.bf16 %v751, %v750
      %v773 = vpack.c.bf16 %v753, %v752
      %v774 = vpack.c.bf16 %v755, %v754
      %v775 = vpack.c.bf16 %v757, %v756
      %v776 = vpack.c.bf16 %v759, %v758
      %v777 = vpack.c.bf16 %v761, %v760
      %794 = vrot.lane.b32.xlu0 %v762, 12
      %v795 = vpop.permute.xlu0 %794
      %796 = vrot.lane.b32.xlu0 %v763, 12
      %v797 = vpop.permute.xlu0 %796
      %798 = vrot.lane.b32.xlu0 %v764, 12
      %v799 = vpop.permute.xlu0 %798
      %800 = vrot.lane.b32.xlu0 %v765, 12
      %v801 = vpop.permute.xlu0 %800
      %802 = vrot.lane.b32.xlu0 %v766, 12
      %v803 = vpop.permute.xlu0 %802
      %804 = vrot.lane.b32.xlu0 %v767, 12
      %v805 = vpop.permute.xlu0 %804
      %806 = vrot.lane.b32.xlu0 %v768, 12
      %v807 = vpop.permute.xlu0 %806
      %808 = vrot.lane.b32.xlu0 %v769, 12
      %v809 = vpop.permute.xlu0 %808
      %810 = vrot.lane.b32.xlu0 %v770, 12
      %v811 = vpop.permute.xlu0 %810
      %812 = vrot.lane.b32.xlu0 %v771, 12
      %v813 = vpop.permute.xlu0 %812
      %814 = vrot.lane.b32.xlu0 %v772, 12
      %v815 = vpop.permute.xlu0 %814
      %816 = vrot.lane.b32.xlu0 %v773, 12
      %v817 = vpop.permute.xlu0 %816
      %818 = vrot.lane.b32.xlu0 %v774, 12
      %v819 = vpop.permute.xlu0 %818
      %820 = vrot.lane.b32.xlu0 %v775, 12
      %v821 = vpop.permute.xlu0 %820
      %822 = vrot.lane.b32.xlu0 %v776, 12
      %v823 = vpop.permute.xlu0 %822
      %824 = vrot.lane.b32.xlu0 %v777, 12
      %v825 = vpop.permute.xlu0 %824
      %vm842 = vcmask 130144
      %843 = vst.msk [vmem:[#allocation4] sm:$0xff] %vm842, %v795
      %844 = vst.msk [vmem:[#allocation4 + $0x8] sm:$0xff] %vm842, %v797
      %845 = vst.msk [vmem:[#allocation4 + $0x10] sm:$0xff] %vm842, %v799
      %846 = vst.msk [vmem:[#allocation4 + $0x18] sm:$0xff] %vm842, %v801
      %847 = vst.msk [vmem:[#allocation4 + $0x20] sm:$0xff] %vm842, %v803
      %848 = vst.msk [vmem:[#allocation4 + $0x28] sm:$0xff] %vm842, %v805
      %849 = vst.msk [vmem:[#allocation4 + $0x30] sm:$0xff] %vm842, %v807
      %850 = vst.msk [vmem:[#allocation4 + $0x38] sm:$0xff] %vm842, %v809
      %851 = vst.msk [vmem:[#allocation4 + $0x40] sm:$0xff] %vm842, %v811
      %852 = vst.msk [vmem:[#allocation4 + $0x48] sm:$0xff] %vm842, %v813
      %853 = vst.msk [vmem:[#allocation4 + $0x50] sm:$0xff] %vm842, %v815
      %854 = vst.msk [vmem:[#allocation4 + $0x58] sm:$0xff] %vm842, %v817
      %855 = vst.msk [vmem:[#allocation4 + $0x60] sm:$0xff] %vm842, %v819
      %856 = vst.msk [vmem:[#allocation4 + $0x68] sm:$0xff] %vm842, %v821
      %857 = vst.msk [vmem:[#allocation4 + $0x70] sm:$0xff] %vm842, %v823
      %858 = vst.msk [vmem:[#allocation4 + $0x78] sm:$0xff] %vm842, %v825
      %v859 = vld [vmem:[%s235 + $0x1] sm:$0xff]
      %v860 = vld [vmem:[%s235 + $0x9] sm:$0xff]
      %v861 = vld [vmem:[%s235 + $0x19] sm:$0xff]
      %v862 = vld [vmem:[%s235 + $0x21] sm:$0xff]
      %v863 = vld [vmem:[%s235 + $0x31] sm:$0xff]
      %v864 = vld [vmem:[%s235 + $0x39] sm:$0xff]
      %v865 = vld [vmem:[%s235 + $0x49] sm:$0xff]
      %v866 = vld [vmem:[%s235 + $0x51] sm:$0xff]
      %v867 = vld [vmem:[%s235 + $0x61] sm:$0xff]
      %v868 = vld [vmem:[%s235 + $0x69] sm:$0xff]
      %v869 = vld [vmem:[%s235 + $0x79] sm:$0xff]
      %v870 = vld [vmem:[%s235 + $0x81] sm:$0xff]
      %v871 = vld [vmem:[%s235 + $0x91] sm:$0xff]
      %v872 = vld [vmem:[%s235 + $0x99] sm:$0xff]
      %v873 = vld [vmem:[%s235 + $0xa9] sm:$0xff]
      %v874 = vld [vmem:[%s235 + $0xb1] sm:$0xff]
      %v875 = vld [vmem:[%s235 + $0xc1] sm:$0xff]
      %v876 = vld [vmem:[%s235 + $0xc9] sm:$0xff]
      %v877 = vld [vmem:[%s235 + $0xd9] sm:$0xff]
      %v878 = vld [vmem:[%s235 + $0xe1] sm:$0xff]
      %v879 = vld [vmem:[%s235 + $0xf1] sm:$0xff]
      %v880 = vld [vmem:[%s235 + $0xf9] sm:$0xff]
      %v881 = vld [vmem:[%s235 + $0x109] sm:$0xff]
      %v882 = vld [vmem:[%s235 + $0x111] sm:$0xff]
      %v883 = vld [vmem:[%s235 + $0x121] sm:$0xff]
      %v884 = vld [vmem:[%s235 + $0x129] sm:$0xff]
      %v885 = vld [vmem:[%s235 + $0x139] sm:$0xff]
      %v886 = vld [vmem:[%s235 + $0x141] sm:$0xff]
      %v887 = vld [vmem:[%s235 + $0x151] sm:$0xff]
      %v888 = vld [vmem:[%s235 + $0x159] sm:$0xff]
      %v889 = vld [vmem:[%s235 + $0x169] sm:$0xff]
      %v890 = vld [vmem:[%s235 + $0x171] sm:$0xff]
      %v891 = vpack.c.bf16 %v860, %v859
      %v892 = vpack.c.bf16 %v862, %v861
      %v893 = vpack.c.bf16 %v864, %v863
      %v894 = vpack.c.bf16 %v866, %v865
      %v895 = vpack.c.bf16 %v868, %v867
      %v896 = vpack.c.bf16 %v870, %v869
      %v897 = vpack.c.bf16 %v872, %v871
      %v898 = vpack.c.bf16 %v874, %v873
      %v899 = vpack.c.bf16 %v876, %v875
      %v900 = vpack.c.bf16 %v878, %v877
      %v901 = vpack.c.bf16 %v880, %v879
      %v902 = vpack.c.bf16 %v882, %v881
      %v903 = vpack.c.bf16 %v884, %v883
      %v904 = vpack.c.bf16 %v886, %v885
      %v905 = vpack.c.bf16 %v888, %v887
      %v906 = vpack.c.bf16 %v890, %v889
      %923 = vrot.lane.b32.xlu0 %v891, 16
      %v924 = vpop.permute.xlu0 %923
      %925 = vrot.lane.b32.xlu0 %v892, 16
      %v926 = vpop.permute.xlu0 %925
      %927 = vrot.lane.b32.xlu0 %v893, 16
      %v928 = vpop.permute.xlu0 %927
      %929 = vrot.lane.b32.xlu0 %v894, 16
      %v930 = vpop.permute.xlu0 %929
      %931 = vrot.lane.b32.xlu0 %v895, 16
      %v932 = vpop.permute.xlu0 %931
      %933 = vrot.lane.b32.xlu0 %v896, 16
      %v934 = vpop.permute.xlu0 %933
      %935 = vrot.lane.b32.xlu0 %v897, 16
      %v936 = vpop.permute.xlu0 %935
      %937 = vrot.lane.b32.xlu0 %v898, 16
      %v938 = vpop.permute.xlu0 %937
      %939 = vrot.lane.b32.xlu0 %v899, 16
      %v940 = vpop.permute.xlu0 %939
      %941 = vrot.lane.b32.xlu0 %v900, 16
      %v942 = vpop.permute.xlu0 %941
      %943 = vrot.lane.b32.xlu0 %v901, 16
      %v944 = vpop.permute.xlu0 %943
      %945 = vrot.lane.b32.xlu0 %v902, 16
      %v946 = vpop.permute.xlu0 %945
      %947 = vrot.lane.b32.xlu0 %v903, 16
      %v948 = vpop.permute.xlu0 %947
      %949 = vrot.lane.b32.xlu0 %v904, 16
      %v950 = vpop.permute.xlu0 %949
      %951 = vrot.lane.b32.xlu0 %v905, 16
      %v952 = vpop.permute.xlu0 %951
      %953 = vrot.lane.b32.xlu0 %v906, 16
      %v954 = vpop.permute.xlu0 %953
      %vm971 = vcmask 162944
      %972 = vst.msk [vmem:[#allocation4] sm:$0xff] %vm971, %v924
      %973 = vst.msk [vmem:[#allocation4 + $0x8] sm:$0xff] %vm971, %v926
      %974 = vst.msk [vmem:[#allocation4 + $0x10] sm:$0xff] %vm971, %v928
      %975 = vst.msk [vmem:[#allocation4 + $0x18] sm:$0xff] %vm971, %v930
      %976 = vst.msk [vmem:[#allocation4 + $0x20] sm:$0xff] %vm971, %v932
      %977 = vst.msk [vmem:[#allocation4 + $0x28] sm:$0xff] %vm971, %v934
      %978 = vst.msk [vmem:[#allocation4 + $0x30] sm:$0xff] %vm971, %v936
      %979 = vst.msk [vmem:[#allocation4 + $0x38] sm:$0xff] %vm971, %v938
      %980 = vst.msk [vmem:[#allocation4 + $0x40] sm:$0xff] %vm971, %v940
      %981 = vst.msk [vmem:[#allocation4 + $0x48] sm:$0xff] %vm971, %v942
      %982 = vst.msk [vmem:[#allocation4 + $0x50] sm:$0xff] %vm971, %v944
      %983 = vst.msk [vmem:[#allocation4 + $0x58] sm:$0xff] %vm971, %v946
      %984 = vst.msk [vmem:[#allocation4 + $0x60] sm:$0xff] %vm971, %v948
      %985 = vst.msk [vmem:[#allocation4 + $0x68] sm:$0xff] %vm971, %v950
      %986 = vst.msk [vmem:[#allocation4 + $0x70] sm:$0xff] %vm971, %v952
      %987 = vst.msk [vmem:[#allocation4 + $0x78] sm:$0xff] %vm971, %v954
      %v988 = vld [vmem:[%s235 + $0x2] sm:$0xff]
      %v989 = vld [vmem:[%s235 + $0xa] sm:$0xff]
      %v990 = vld [vmem:[%s235 + $0x1a] sm:$0xff]
      %v991 = vld [vmem:[%s235 + $0x22] sm:$0xff]
      %v992 = vld [vmem:[%s235 + $0x32] sm:$0xff]
      %v993 = vld [vmem:[%s235 + $0x3a] sm:$0xff]
      %v994 = vld [vmem:[%s235 + $0x4a] sm:$0xff]
      %v995 = vld [vmem:[%s235 + $0x52] sm:$0xff]
      %v996 = vld [vmem:[%s235 + $0x62] sm:$0xff]
      %v997 = vld [vmem:[%s235 + $0x6a] sm:$0xff]
      %v998 = vld [vmem:[%s235 + $0x7a] sm:$0xff]
      %v999 = vld [vmem:[%s235 + $0x82] sm:$0xff]
      %v1000 = vld [vmem:[%s235 + $0x92] sm:$0xff]
      %v1001 = vld [vmem:[%s235 + $0x9a] sm:$0xff]
      %v1002 = vld [vmem:[%s235 + $0xaa] sm:$0xff]
      %v1003 = vld [vmem:[%s235 + $0xb2] sm:$0xff]
      %v1004 = vld [vmem:[%s235 + $0xc2] sm:$0xff]
      %v1005 = vld [vmem:[%s235 + $0xca] sm:$0xff]
      %v1006 = vld [vmem:[%s235 + $0xda] sm:$0xff]
      %v1007 = vld [vmem:[%s235 + $0xe2] sm:$0xff]
      %v1008 = vld [vmem:[%s235 + $0xf2] sm:$0xff]
      %v1009 = vld [vmem:[%s235 + $0xfa] sm:$0xff]
      %v1010 = vld [vmem:[%s235 + $0x10a] sm:$0xff]
      %v1011 = vld [vmem:[%s235 + $0x112] sm:$0xff]
      %v1012 = vld [vmem:[%s235 + $0x122] sm:$0xff]
      %v1013 = vld [vmem:[%s235 + $0x12a] sm:$0xff]
      %v1014 = vld [vmem:[%s235 + $0x13a] sm:$0xff]
      %v1015 = vld [vmem:[%s235 + $0x142] sm:$0xff]
      %v1016 = vld [vmem:[%s235 + $0x152] sm:$0xff]
      %v1017 = vld [vmem:[%s235 + $0x15a] sm:$0xff]
      %v1018 = vld [vmem:[%s235 + $0x16a] sm:$0xff]
      %v1019 = vld [vmem:[%s235 + $0x172] sm:$0xff]
      %v1020 = vpack.c.bf16 %v989, %v988
      %v1021 = vpack.c.bf16 %v991, %v990
      %v1022 = vpack.c.bf16 %v993, %v992
      %v1023 = vpack.c.bf16 %v995, %v994
      %v1024 = vpack.c.bf16 %v997, %v996
      %v1025 = vpack.c.bf16 %v999, %v998
      %v1026 = vpack.c.bf16 %v1001, %v1000
      %v1027 = vpack.c.bf16 %v1003, %v1002
      %v1028 = vpack.c.bf16 %v1005, %v1004
      %v1029 = vpack.c.bf16 %v1007, %v1006
      %v1030 = vpack.c.bf16 %v1009, %v1008
      %v1031 = vpack.c.bf16 %v1011, %v1010
      %v1032 = vpack.c.bf16 %v1013, %v1012
      %v1033 = vpack.c.bf16 %v1015, %v1014
      %v1034 = vpack.c.bf16 %v1017, %v1016
      %v1035 = vpack.c.bf16 %v1019, %v1018
      %1052 = vrot.lane.b32.xlu0 %v1020, 20
      %v1053 = vpop.permute.xlu0 %1052
      %1054 = vrot.lane.b32.xlu0 %v1021, 20
      %v1055 = vpop.permute.xlu0 %1054
      %1056 = vrot.lane.b32.xlu0 %v1022, 20
      %v1057 = vpop.permute.xlu0 %1056
      %1058 = vrot.lane.b32.xlu0 %v1023, 20
      %v1059 = vpop.permute.xlu0 %1058
      %1060 = vrot.lane.b32.xlu0 %v1024, 20
      %v1061 = vpop.permute.xlu0 %1060
      %1062 = vrot.lane.b32.xlu0 %v1025, 20
      %v1063 = vpop.permute.xlu0 %1062
      %1064 = vrot.lane.b32.xlu0 %v1026, 20
      %v1065 = vpop.permute.xlu0 %1064
      %1066 = vrot.lane.b32.xlu0 %v1027, 20
      %v1067 = vpop.permute.xlu0 %1066
      %1068 = vrot.lane.b32.xlu0 %v1028, 20
      %v1069 = vpop.permute.xlu0 %1068
      %1070 = vrot.lane.b32.xlu0 %v1029, 20
      %v1071 = vpop.permute.xlu0 %1070
      %1072 = vrot.lane.b32.xlu0 %v1030, 20
      %v1073 = vpop.permute.xlu0 %1072
      %1074 = vrot.lane.b32.xlu0 %v1031, 20
      %v1075 = vpop.permute.xlu0 %1074
      %1076 = vrot.lane.b32.xlu0 %v1032, 20
      %v1077 = vpop.permute.xlu0 %1076
      %1078 = vrot.lane.b32.xlu0 %v1033, 20
      %v1079 = vpop.permute.xlu0 %1078
      %1080 = vrot.lane.b32.xlu0 %v1034, 20
      %v1081 = vpop.permute.xlu0 %1080
      %1082 = vrot.lane.b32.xlu0 %v1035, 20
      %v1083 = vpop.permute.xlu0 %1082
      %vm1100 = vcmask 195744
      %1101 = vst.msk [vmem:[#allocation4] sm:$0xff] %vm1100, %v1053
      %1102 = vst.msk [vmem:[#allocation4 + $0x8] sm:$0xff] %vm1100, %v1055
      %1103 = vst.msk [vmem:[#allocation4 + $0x10] sm:$0xff] %vm1100, %v1057
      %1104 = vst.msk [vmem:[#allocation4 + $0x18] sm:$0xff] %vm1100, %v1059
      %1105 = vst.msk [vmem:[#allocation4 + $0x20] sm:$0xff] %vm1100, %v1061
      %1106 = vst.msk [vmem:[#allocation4 + $0x28] sm:$0xff] %vm1100, %v1063
      %1107 = vst.msk [vmem:[#allocation4 + $0x30] sm:$0xff] %vm1100, %v1065
      %1108 = vst.msk [vmem:[#allocation4 + $0x38] sm:$0xff] %vm1100, %v1067
      %1109 = vst.msk [vmem:[#allocation4 + $0x40] sm:$0xff] %vm1100, %v1069
      %1110 = vst.msk [vmem:[#allocation4 + $0x48] sm:$0xff] %vm1100, %v1071
      %1111 = vst.msk [vmem:[#allocation4 + $0x50] sm:$0xff] %vm1100, %v1073
      %1112 = vst.msk [vmem:[#allocation4 + $0x58] sm:$0xff] %vm1100, %v1075
      %1113 = vst.msk [vmem:[#allocation4 + $0x60] sm:$0xff] %vm1100, %v1077
      %1114 = vst.msk [vmem:[#allocation4 + $0x68] sm:$0xff] %vm1100, %v1079
      %1115 = vst.msk [vmem:[#allocation4 + $0x70] sm:$0xff] %vm1100, %v1081
      %1116 = vst.msk [vmem:[#allocation4 + $0x78] sm:$0xff] %vm1100, %v1083
      %s1117 = scalar_lea.vmem [#allocation2], 48
      %v1118 = vld [vmem:[%s1117] sm:$0xff]
      %v1119 = vld [vmem:[%s1117 + $0x8] sm:$0xff]
      %v1120 = vld [vmem:[%s1117 + $0x18] sm:$0xff]
      %v1121 = vld [vmem:[%s1117 + $0x20] sm:$0xff]
      %v1122 = vld [vmem:[%s1117 + $0x30] sm:$0xff]
      %v1123 = vld [vmem:[%s1117 + $0x38] sm:$0xff]
      %v1124 = vld [vmem:[%s1117 + $0x48] sm:$0xff]
      %v1125 = vld [vmem:[%s1117 + $0x50] sm:$0xff]
      %v1126 = vld [vmem:[%s1117 + $0x60] sm:$0xff]
      %v1127 = vld [vmem:[%s1117 + $0x68] sm:$0xff]
      %v1128 = vld [vmem:[%s1117 + $0x78] sm:$0xff]
      %v1129 = vld [vmem:[%s1117 + $0x80] sm:$0xff]
      %v1130 = vld [vmem:[%s1117 + $0x90] sm:$0xff]
      %v1131 = vld [vmem:[%s1117 + $0x98] sm:$0xff]
      %v1132 = vld [vmem:[%s1117 + $0xa8] sm:$0xff]
      %v1133 = vld [vmem:[%s1117 + $0xb0] sm:$0xff]
      %v1134 = vld [vmem:[%s1117 + $0xc0] sm:$0xff]
      %v1135 = vld [vmem:[%s1117 + $0xc8] sm:$0xff]
      %v1136 = vld [vmem:[%s1117 + $0xd8] sm:$0xff]
      %v1137 = vld [vmem:[%s1117 + $0xe0] sm:$0xff]
      %v1138 = vld [vmem:[%s1117 + $0xf0] sm:$0xff]
      %v1139 = vld [vmem:[%s1117 + $0xf8] sm:$0xff]
      %v1140 = vld [vmem:[%s1117 + $0x108] sm:$0xff]
      %v1141 = vld [vmem:[%s1117 + $0x110] sm:$0xff]
      %v1142 = vld [vmem:[%s1117 + $0x120] sm:$0xff]
      %v1143 = vld [vmem:[%s1117 + $0x128] sm:$0xff]
      %v1144 = vld [vmem:[%s1117 + $0x138] sm:$0xff]
      %v1145 = vld [vmem:[%s1117 + $0x140] sm:$0xff]
      %v1146 = vld [vmem:[%s1117 + $0x150] sm:$0xff]
      %v1147 = vld [vmem:[%s1117 + $0x158] sm:$0xff]
      %v1148 = vld [vmem:[%s1117 + $0x168] sm:$0xff]
      %v1149 = vld [vmem:[%s1117 + $0x170] sm:$0xff]
      %v1150 = vpack.c.bf16 %v1119, %v1118
      %v1151 = vpack.c.bf16 %v1121, %v1120
      %v1152 = vpack.c.bf16 %v1123, %v1122
      %v1153 = vpack.c.bf16 %v1125, %v1124
      %v1154 = vpack.c.bf16 %v1127, %v1126
      %v1155 = vpack.c.bf16 %v1129, %v1128
      %v1156 = vpack.c.bf16 %v1131, %v1130
      %v1157 = vpack.c.bf16 %v1133, %v1132
      %v1158 = vpack.c.bf16 %v1135, %v1134
      %v1159 = vpack.c.bf16 %v1137, %v1136
      %v1160 = vpack.c.bf16 %v1139, %v1138
      %v1161 = vpack.c.bf16 %v1141, %v1140
      %v1162 = vpack.c.bf16 %v1143, %v1142
      %v1163 = vpack.c.bf16 %v1145, %v1144
      %v1164 = vpack.c.bf16 %v1147, %v1146
      %v1165 = vpack.c.bf16 %v1149, %v1148
      %1182 = vrot.lane.b32.xlu0 %v1150, 24
      %v1183 = vpop.permute.xlu0 %1182
      %1184 = vrot.lane.b32.xlu0 %v1151, 24
      %v1185 = vpop.permute.xlu0 %1184
      %1186 = vrot.lane.b32.xlu0 %v1152, 24
      %v1187 = vpop.permute.xlu0 %1186
      %1188 = vrot.lane.b32.xlu0 %v1153, 24
      %v1189 = vpop.permute.xlu0 %1188
      %1190 = vrot.lane.b32.xlu0 %v1154, 24
      %v1191 = vpop.permute.xlu0 %1190
      %1192 = vrot.lane.b32.xlu0 %v1155, 24
      %v1193 = vpop.permute.xlu0 %1192
      %1194 = vrot.lane.b32.xlu0 %v1156, 24
      %v1195 = vpop.permute.xlu0 %1194
      %1196 = vrot.lane.b32.xlu0 %v1157, 24
      %v1197 = vpop.permute.xlu0 %1196
      %1198 = vrot.lane.b32.xlu0 %v1158, 24
      %v1199 = vpop.permute.xlu0 %1198
      %1200 = vrot.lane.b32.xlu0 %v1159, 24
      %v1201 = vpop.permute.xlu0 %1200
      %1202 = vrot.lane.b32.xlu0 %v1160, 24
      %v1203 = vpop.permute.xlu0 %1202
      %1204 = vrot.lane.b32.xlu0 %v1161, 24
      %v1205 = vpop.permute.xlu0 %1204
      %1206 = vrot.lane.b32.xlu0 %v1162, 24
      %v1207 = vpop.permute.xlu0 %1206
      %1208 = vrot.lane.b32.xlu0 %v1163, 24
      %v1209 = vpop.permute.xlu0 %1208
      %1210 = vrot.lane.b32.xlu0 %v1164, 24
      %v1211 = vpop.permute.xlu0 %1210
      %1212 = vrot.lane.b32.xlu0 %v1165, 24
      %v1213 = vpop.permute.xlu0 %1212
      %vm1230 = vcmask 228544
      %1231 = vst.msk [vmem:[#allocation4] sm:$0xff] %vm1230, %v1183
      %1232 = vst.msk [vmem:[#allocation4 + $0x8] sm:$0xff] %vm1230, %v1185
      %1233 = vst.msk [vmem:[#allocation4 + $0x10] sm:$0xff] %vm1230, %v1187
      %1234 = vst.msk [vmem:[#allocation4 + $0x18] sm:$0xff] %vm1230, %v1189
      %1235 = vst.msk [vmem:[#allocation4 + $0x20] sm:$0xff] %vm1230, %v1191
      %1236 = vst.msk [vmem:[#allocation4 + $0x28] sm:$0xff] %vm1230, %v1193
      %1237 = vst.msk [vmem:[#allocation4 + $0x30] sm:$0xff] %vm1230, %v1195
      %1238 = vst.msk [vmem:[#allocation4 + $0x38] sm:$0xff] %vm1230, %v1197
      %1239 = vst.msk [vmem:[#allocation4 + $0x40] sm:$0xff] %vm1230, %v1199
      %1240 = vst.msk [vmem:[#allocation4 + $0x48] sm:$0xff] %vm1230, %v1201
      %1241 = vst.msk [vmem:[#allocation4 + $0x50] sm:$0xff] %vm1230, %v1203
      %1242 = vst.msk [vmem:[#allocation4 + $0x58] sm:$0xff] %vm1230, %v1205
      %1243 = vst.msk [vmem:[#allocation4 + $0x60] sm:$0xff] %vm1230, %v1207
      %1244 = vst.msk [vmem:[#allocation4 + $0x68] sm:$0xff] %vm1230, %v1209
      %1245 = vst.msk [vmem:[#allocation4 + $0x70] sm:$0xff] %vm1230, %v1211
      %1246 = vst.msk [vmem:[#allocation4 + $0x78] sm:$0xff] %vm1230, %v1213
      %v1247 = vld [vmem:[%s1117 + $0x1] sm:$0xff]
      %v1248 = vld [vmem:[%s1117 + $0x9] sm:$0xff]
      %v1249 = vld [vmem:[%s1117 + $0x19] sm:$0xff]
      %v1250 = vld [vmem:[%s1117 + $0x21] sm:$0xff]
      %v1251 = vld [vmem:[%s1117 + $0x31] sm:$0xff]
      %v1252 = vld [vmem:[%s1117 + $0x39] sm:$0xff]
      %v1253 = vld [vmem:[%s1117 + $0x49] sm:$0xff]
      %v1254 = vld [vmem:[%s1117 + $0x51] sm:$0xff]
      %v1255 = vld [vmem:[%s1117 + $0x61] sm:$0xff]
      %v1256 = vld [vmem:[%s1117 + $0x69] sm:$0xff]
      %v1257 = vld [vmem:[%s1117 + $0x79] sm:$0xff]
      %v1258 = vld [vmem:[%s1117 + $0x81] sm:$0xff]
      %v1259 = vld [vmem:[%s1117 + $0x91] sm:$0xff]
      %v1260 = vld [vmem:[%s1117 + $0x99] sm:$0xff]
      %v1261 = vld [vmem:[%s1117 + $0xa9] sm:$0xff]
      %v1262 = vld [vmem:[%s1117 + $0xb1] sm:$0xff]
      %v1263 = vld [vmem:[%s1117 + $0xc1] sm:$0xff]
      %v1264 = vld [vmem:[%s1117 + $0xc9] sm:$0xff]
      %v1265 = vld [vmem:[%s1117 + $0xd9] sm:$0xff]
      %v1266 = vld [vmem:[%s1117 + $0xe1] sm:$0xff]
      %v1267 = vld [vmem:[%s1117 + $0xf1] sm:$0xff]
      %v1268 = vld [vmem:[%s1117 + $0xf9] sm:$0xff]
      %v1269 = vld [vmem:[%s1117 + $0x109] sm:$0xff]
      %v1270 = vld [vmem:[%s1117 + $0x111] sm:$0xff]
      %v1271 = vld [vmem:[%s1117 + $0x121] sm:$0xff]
      %v1272 = vld [vmem:[%s1117 + $0x129] sm:$0xff]
      %v1273 = vld [vmem:[%s1117 + $0x139] sm:$0xff]
      %v1274 = vld [vmem:[%s1117 + $0x141] sm:$0xff]
      %v1275 = vld [vmem:[%s1117 + $0x151] sm:$0xff]
      %v1276 = vld [vmem:[%s1117 + $0x159] sm:$0xff]
      %v1277 = vld [vmem:[%s1117 + $0x169] sm:$0xff]
      %v1278 = vld [vmem:[%s1117 + $0x171] sm:$0xff]
      %v1279 = vpack.c.bf16 %v1248, %v1247
      %v1280 = vpack.c.bf16 %v1250, %v1249
      %v1281 = vpack.c.bf16 %v1252, %v1251
      %v1282 = vpack.c.bf16 %v1254, %v1253
      %v1283 = vpack.c.bf16 %v1256, %v1255
      %v1284 = vpack.c.bf16 %v1258, %v1257
      %v1285 = vpack.c.bf16 %v1260, %v1259
      %v1286 = vpack.c.bf16 %v1262, %v1261
      %v1287 = vpack.c.bf16 %v1264, %v1263
      %v1288 = vpack.c.bf16 %v1266, %v1265
      %v1289 = vpack.c.bf16 %v1268, %v1267
      %v1290 = vpack.c.bf16 %v1270, %v1269
      %v1291 = vpack.c.bf16 %v1272, %v1271
      %v1292 = vpack.c.bf16 %v1274, %v1273
      %v1293 = vpack.c.bf16 %v1276, %v1275
      %v1294 = vpack.c.bf16 %v1278, %v1277
      %1311 = vrot.lane.b32.xlu0 %v1279, 28
      %v1312 = vpop.permute.xlu0 %1311
      %1313 = vrot.lane.b32.xlu0 %v1280, 28
      %v1314 = vpop.permute.xlu0 %1313
      %1315 = vrot.lane.b32.xlu0 %v1281, 28
      %v1316 = vpop.permute.xlu0 %1315
      %1317 = vrot.lane.b32.xlu0 %v1282, 28
      %v1318 = vpop.permute.xlu0 %1317
      %1319 = vrot.lane.b32.xlu0 %v1283, 28
      %v1320 = vpop.permute.xlu0 %1319
      %1321 = vrot.lane.b32.xlu0 %v1284, 28
      %v1322 = vpop.permute.xlu0 %1321
      %1323 = vrot.lane.b32.xlu0 %v1285, 28
      %v1324 = vpop.permute.xlu0 %1323
      %1325 = vrot.lane.b32.xlu0 %v1286, 28
      %v1326 = vpop.permute.xlu0 %1325
      %1327 = vrot.lane.b32.xlu0 %v1287, 28
      %v1328 = vpop.permute.xlu0 %1327
      %1329 = vrot.lane.b32.xlu0 %v1288, 28
      %v1330 = vpop.permute.xlu0 %1329
      %1331 = vrot.lane.b32.xlu0 %v1289, 28
      %v1332 = vpop.permute.xlu0 %1331
      %1333 = vrot.lane.b32.xlu0 %v1290, 28
      %v1334 = vpop.permute.xlu0 %1333
      %1335 = vrot.lane.b32.xlu0 %v1291, 28
      %v1336 = vpop.permute.xlu0 %1335
      %1337 = vrot.lane.b32.xlu0 %v1292, 28
      %v1338 = vpop.permute.xlu0 %1337
      %1339 = vrot.lane.b32.xlu0 %v1293, 28
      %v1340 = vpop.permute.xlu0 %1339
      %1341 = vrot.lane.b32.xlu0 %v1294, 28
      %v1342 = vpop.permute.xlu0 %1341
      %vm1359 = vcmask 261344
      %1360 = vst.msk [vmem:[#allocation4] sm:$0xff] %vm1359, %v1312
      %1361 = vst.msk [vmem:[#allocation4 + $0x8] sm:$0xff] %vm1359, %v1314
      %1362 = vst.msk [vmem:[#allocation4 + $0x10] sm:$0xff] %vm1359, %v1316
      %1363 = vst.msk [vmem:[#allocation4 + $0x18] sm:$0xff] %vm1359, %v1318
      %1364 = vst.msk [vmem:[#allocation4 + $0x20] sm:$0xff] %vm1359, %v1320
      %1365 = vst.msk [vmem:[#allocation4 + $0x28] sm:$0xff] %vm1359, %v1322
      %1366 = vst.msk [vmem:[#allocation4 + $0x30] sm:$0xff] %vm1359, %v1324
      %1367 = vst.msk [vmem:[#allocation4 + $0x38] sm:$0xff] %vm1359, %v1326
      %1368 = vst.msk [vmem:[#allocation4 + $0x40] sm:$0xff] %vm1359, %v1328
      %1369 = vst.msk [vmem:[#allocation4 + $0x48] sm:$0xff] %vm1359, %v1330
      %1370 = vst.msk [vmem:[#allocation4 + $0x50] sm:$0xff] %vm1359, %v1332
      %1371 = vst.msk [vmem:[#allocation4 + $0x58] sm:$0xff] %vm1359, %v1334
      %1372 = vst.msk [vmem:[#allocation4 + $0x60] sm:$0xff] %vm1359, %v1336
      %1373 = vst.msk [vmem:[#allocation4 + $0x68] sm:$0xff] %vm1359, %v1338
      %1374 = vst.msk [vmem:[#allocation4 + $0x70] sm:$0xff] %vm1359, %v1340
      %1375 = vst.msk [vmem:[#allocation4 + $0x78] sm:$0xff] %vm1359, %v1342
      %v1376 = vld [vmem:[%s1117 + $0x2] sm:$0xff]
      %v1377 = vld [vmem:[%s1117 + $0xa] sm:$0xff]
      %v1378 = vld [vmem:[%s1117 + $0x1a] sm:$0xff]
      %v1379 = vld [vmem:[%s1117 + $0x22] sm:$0xff]
      %v1380 = vld [vmem:[%s1117 + $0x32] sm:$0xff]
      %v1381 = vld [vmem:[%s1117 + $0x3a] sm:$0xff]
      %v1382 = vld [vmem:[%s1117 + $0x4a] sm:$0xff]
      %v1383 = vld [vmem:[%s1117 + $0x52] sm:$0xff]
      %v1384 = vld [vmem:[%s1117 + $0x62] sm:$0xff]
      %v1385 = vld [vmem:[%s1117 + $0x6a] sm:$0xff]
      %v1386 = vld [vmem:[%s1117 + $0x7a] sm:$0xff]
      %v1387 = vld [vmem:[%s1117 + $0x82] sm:$0xff]
      %v1388 = vld [vmem:[%s1117 + $0x92] sm:$0xff]
      %v1389 = vld [vmem:[%s1117 + $0x9a] sm:$0xff]
      %v1390 = vld [vmem:[%s1117 + $0xaa] sm:$0xff]
      %v1391 = vld [vmem:[%s1117 + $0xb2] sm:$0xff]
      %v1392 = vld [vmem:[%s1117 + $0xc2] sm:$0xff]
      %v1393 = vld [vmem:[%s1117 + $0xca] sm:$0xff]
      %v1394 = vld [vmem:[%s1117 + $0xda] sm:$0xff]
      %v1395 = vld [vmem:[%s1117 + $0xe2] sm:$0xff]
      %v1396 = vld [vmem:[%s1117 + $0xf2] sm:$0xff]
      %v1397 = vld [vmem:[%s1117 + $0xfa] sm:$0xff]
      %v1398 = vld [vmem:[%s1117 + $0x10a] sm:$0xff]
      %v1399 = vld [vmem:[%s1117 + $0x112] sm:$0xff]
      %v1400 = vld [vmem:[%s1117 + $0x122] sm:$0xff]
      %v1401 = vld [vmem:[%s1117 + $0x12a] sm:$0xff]
      %v1402 = vld [vmem:[%s1117 + $0x13a] sm:$0xff]
      %v1403 = vld [vmem:[%s1117 + $0x142] sm:$0xff]
      %v1404 = vld [vmem:[%s1117 + $0x152] sm:$0xff]
      %v1405 = vld [vmem:[%s1117 + $0x15a] sm:$0xff]
      %v1406 = vld [vmem:[%s1117 + $0x16a] sm:$0xff]
      %v1407 = vld [vmem:[%s1117 + $0x172] sm:$0xff]
      %v1408 = vpack.c.bf16 %v1377, %v1376
      %v1409 = vpack.c.bf16 %v1379, %v1378
      %v1410 = vpack.c.bf16 %v1381, %v1380
      %v1411 = vpack.c.bf16 %v1383, %v1382
      %v1412 = vpack.c.bf16 %v1385, %v1384
      %v1413 = vpack.c.bf16 %v1387, %v1386
      %v1414 = vpack.c.bf16 %v1389, %v1388
      %v1415 = vpack.c.bf16 %v1391, %v1390
      %v1416 = vpack.c.bf16 %v1393, %v1392
      %v1417 = vpack.c.bf16 %v1395, %v1394
      %v1418 = vpack.c.bf16 %v1397, %v1396
      %v1419 = vpack.c.bf16 %v1399, %v1398
      %v1420 = vpack.c.bf16 %v1401, %v1400
      %v1421 = vpack.c.bf16 %v1403, %v1402
      %v1422 = vpack.c.bf16 %v1405, %v1404
      %v1423 = vpack.c.bf16 %v1407, %v1406
      %1440 = vrot.lane.b32.xlu0 %v1408, 32
      %v1441 = vpop.permute.xlu0 %1440
      %1442 = vrot.lane.b32.xlu0 %v1409, 32
      %v1443 = vpop.permute.xlu0 %1442
      %1444 = vrot.lane.b32.xlu0 %v1410, 32
      %v1445 = vpop.permute.xlu0 %1444
      %1446 = vrot.lane.b32.xlu0 %v1411, 32
      %v1447 = vpop.permute.xlu0 %1446
      %1448 = vrot.lane.b32.xlu0 %v1412, 32
      %v1449 = vpop.permute.xlu0 %1448
      %1450 = vrot.lane.b32.xlu0 %v1413, 32
      %v1451 = vpop.permute.xlu0 %1450
      %1452 = vrot.lane.b32.xlu0 %v1414, 32
      %v1453 = vpop.permute.xlu0 %1452
      %1454 = vrot.lane.b32.xlu0 %v1415, 32
      %v1455 = vpop.permute.xlu0 %1454
      %1456 = vrot.lane.b32.xlu0 %v1416, 32
      %v1457 = vpop.permute.xlu0 %1456
      %1458 = vrot.lane.b32.xlu0 %v1417, 32
      %v1459 = vpop.permute.xlu0 %1458
      %1460 = vrot.lane.b32.xlu0 %v1418, 32
      %v1461 = vpop.permute.xlu0 %1460
      %1462 = vrot.lane.b32.xlu0 %v1419, 32
      %v1463 = vpop.permute.xlu0 %1462
      %1464 = vrot.lane.b32.xlu0 %v1420, 32
      %v1465 = vpop.permute.xlu0 %1464
      %1466 = vrot.lane.b32.xlu0 %v1421, 32
      %v1467 = vpop.permute.xlu0 %1466
      %1468 = vrot.lane.b32.xlu0 %v1422, 32
      %v1469 = vpop.permute.xlu0 %1468
      %1470 = vrot.lane.b32.xlu0 %v1423, 32
      %v1471 = vpop.permute.xlu0 %1470
      %vm1488 = vcmask 294144
      %1489 = vst.msk [vmem:[#allocation4] sm:$0xff] %vm1488, %v1441
      %1490 = vst.msk [vmem:[#allocation4 + $0x8] sm:$0xff] %vm1488, %v1443
      %1491 = vst.msk [vmem:[#allocation4 + $0x10] sm:$0xff] %vm1488, %v1445
      %1492 = vst.msk [vmem:[#allocation4 + $0x18] sm:$0xff] %vm1488, %v1447
      %1493 = vst.msk [vmem:[#allocation4 + $0x20] sm:$0xff] %vm1488, %v1449
      %1494 = vst.msk [vmem:[#allocation4 + $0x28] sm:$0xff] %vm1488, %v1451
      %1495 = vst.msk [vmem:[#allocation4 + $0x30] sm:$0xff] %vm1488, %v1453
      %1496 = vst.msk [vmem:[#allocation4 + $0x38] sm:$0xff] %vm1488, %v1455
      %1497 = vst.msk [vmem:[#allocation4 + $0x40] sm:$0xff] %vm1488, %v1457
      %1498 = vst.msk [vmem:[#allocation4 + $0x48] sm:$0xff] %vm1488, %v1459
      %1499 = vst.msk [vmem:[#allocation4 + $0x50] sm:$0xff] %vm1488, %v1461
      %1500 = vst.msk [vmem:[#allocation4 + $0x58] sm:$0xff] %vm1488, %v1463
      %1501 = vst.msk [vmem:[#allocation4 + $0x60] sm:$0xff] %vm1488, %v1465
      %1502 = vst.msk [vmem:[#allocation4 + $0x68] sm:$0xff] %vm1488, %v1467
      %1503 = vst.msk [vmem:[#allocation4 + $0x70] sm:$0xff] %vm1488, %v1469
      %1504 = vst.msk [vmem:[#allocation4 + $0x78] sm:$0xff] %vm1488, %v1471
      %v1505 = vld [vmem:[#allocation4] sm:$0xff]
      %v1506 = vld [vmem:[#allocation4 + $0x8] sm:$0xff]
      %v1507 = vld [vmem:[#allocation4 + $0x10] sm:$0xff]
      %v1508 = vld [vmem:[#allocation4 + $0x18] sm:$0xff]
      %v1509 = vld [vmem:[#allocation4 + $0x20] sm:$0xff]
      %v1510 = vld [vmem:[#allocation4 + $0x28] sm:$0xff]
      %v1511 = vld [vmem:[#allocation4 + $0x30] sm:$0xff]
      %v1512 = vld [vmem:[#allocation4 + $0x38] sm:$0xff]
      %v1513 = vld [vmem:[#allocation4 + $0x40] sm:$0xff]
      %v1514 = vld [vmem:[#allocation4 + $0x48] sm:$0xff]
      %v1515 = vld [vmem:[#allocation4 + $0x50] sm:$0xff]
      %v1516 = vld [vmem:[#allocation4 + $0x58] sm:$0xff]
      %v1517 = vld [vmem:[#allocation4 + $0x60] sm:$0xff]
      %v1518 = vld [vmem:[#allocation4 + $0x68] sm:$0xff]
      %v1519 = vld [vmem:[#allocation4 + $0x70] sm:$0xff]
      %v1520 = vld [vmem:[#allocation4 + $0x78] sm:$0xff]
      %v1521 = vld [vmem:[%s1] sm:$0xf]
      %v1522 = vld [vmem:[%s1 + $0x4] sm:$0xf]
      %v1523 = vld [vmem:[%s1 + $0x8] sm:$0xf]
      %v1524 = vld [vmem:[%s1 + $0xc] sm:$0xf]
      %v1525 = vld [vmem:[%s1 + $0x10] sm:$0x3]
      %v1526 = vld [vmem:[%s2] sm:$0x1]
      %v1528 = vlaneseq
      %v1529 = vshrl.u32 %v1528, 7
      %v1530 = vsub.s32 0, %v1529
      %v1531 = vrot.slane %v1526, %v1530
      %v1538 = vunpack.c.l.b16 %v1521
      %v1539 = vunpack.c.l.b16 %v1522
      %v1540 = vunpack.c.l.b16 %v1523
      %v1541 = vunpack.c.l.b16 %v1524
      %v1542 = vunpack.c.l.b16 %v1525
      %v1543 = vpack.c.b16 %v1539, %v1538
      %v1544 = vpack.c.b16 %v1541, %v1540
      %v1545 = vpack.c.b16 %v1542, %v1542
      %vm1548 = vcmask 293888
      %v1550 = vsel %vm1548, %v1505, 0
      %v1553 = vsel %vm1548, %v1506, 0
      %v1556 = vsel %vm1548, %v1507, 0
      %v1559 = vsel %vm1548, %v1508, 0
      %v1562 = vsel %vm1548, %v1509, 0
      %v1565 = vsel %vm1548, %v1510, 0
      %v1568 = vsel %vm1548, %v1511, 0
      %v1571 = vsel %vm1548, %v1512, 0
      %v1574 = vsel %vm1548, %v1513, 0
      %v1577 = vsel %vm1548, %v1514, 0
      %v1580 = vsel %vm1548, %v1515, 0
      %v1583 = vsel %vm1548, %v1516, 0
      %v1586 = vsel %vm1548, %v1517, 0
      %v1589 = vsel %vm1548, %v1518, 0
      %v1592 = vsel %vm1548, %v1519, 0
      %v1595 = vsel %vm1548, %v1520, 0
      %vm1597 = vcmask 1041408
      %v1599 = vsel %vm1597, %v1545, 0
      %1601 = vmatprep.subr.bf16.mxu0 0
      %1602 = vmatpush1.bf16.msra.mxu0 %v1543
      %1603 = vmatprep.subr.bf16.mxu0 0
      %1604 = vmatpush1.bf16.msra.mxu0 %v1544
      %1605 = vmatprep.subr.bf16.mxu0 0
      %1606 = vmatpush1.bf16.msra.mxu0 %v1599
      %1607 = vmatprep.subr.bf16.mxu0 0
      %1608 = vmatpush1.bf16.msra.mxu0 0
      %1609 = vmatprep.subr.bf16.mxu0 0
      %1610 = vmatpush1.bf16.msra.mxu0 0
      %1611 = vmatprep.subr.bf16.mxu0 0
      %1612 = vmatpush1.bf16.msra.mxu0 0
      %1613 = vmatprep.subr.bf16.mxu0 0
      %1614 = vmatpush1.bf16.msra.mxu0 0
      %1615 = vmatprep.subr.bf16.mxu0 0
      %1616 = vmatpush1.bf16.msra.mxu0 0
      %1617 = vmatprep.subr.bf16.mxu0 0
      %1618 = vmatpush1.bf16.msra.mxu0 0
      %1619 = vmatprep.subr.bf16.mxu0 0
      %1620 = vmatpush1.bf16.msra.mxu0 0
      %1621 = vmatprep.subr.bf16.mxu0 0
      %1622 = vmatpush1.bf16.msra.mxu0 0
      %1623 = vmatprep.subr.bf16.mxu0 0
      %1624 = vmatpush1.bf16.msra.mxu0 0
      %1625 = vmatprep.subr.bf16.mxu0 0
      %1626 = vmatpush1.bf16.msra.mxu0 0
      %1627 = vmatprep.subr.bf16.mxu0 0
      %1628 = vmatpush1.bf16.msra.mxu0 0
      %1629 = vmatprep.subr.bf16.mxu0 0
      %1630 = vmatpush1.bf16.msra.mxu0 0
      %1631 = vmatprep.subr.bf16.mxu0 0
      %1632 = vmatpush1.bf16.msra.mxu0 0
      %1633 = vmatprep.mubr.bf16.mxu0 0
      %1634 = vmatmul.mubr.bf16.gmra.mrb[0].mxu0 %v1550
      %v1635 = vpop.f32.mrb[0].mxu0
      %v1636 = vadd.f32 %v1531, %v1635
      %v1637 = vpop.f32.mrb[0].mxu0
      %v1638 = vpop.f32.mrb[0].mxu0
      %v1639 = vadd.f32 %v1531, %v1638
      %v1640 = vpop.f32.mrb[0].mxu0
      %1641 = vmatprep.mubr.bf16.mxu0 0
      %1642 = vmatmul.mubr.bf16.gmra.mrb[0].mxu0 %v1553
      %v1643 = vpop.f32.mrb[0].mxu0
      %v1644 = vadd.f32 %v1531, %v1643
      %v1645 = vpop.f32.mrb[0].mxu0
      %v1646 = vpop.f32.mrb[0].mxu0
      %v1647 = vadd.f32 %v1531, %v1646
      %v1648 = vpop.f32.mrb[0].mxu0
      %1649 = vmatprep.mubr.bf16.mxu0 0
      %1650 = vmatmul.mubr.bf16.gmra.mrb[0].mxu0 %v1556
      %v1651 = vpop.f32.mrb[0].mxu0
      %v1652 = vadd.f32 %v1531, %v1651
      %v1653 = vpop.f32.mrb[0].mxu0
      %v1654 = vpop.f32.mrb[0].mxu0
      %v1655 = vadd.f32 %v1531, %v1654
      %v1656 = vpop.f32.mrb[0].mxu0
      %1657 = vmatprep.mubr.bf16.mxu0 0
      %1658 = vmatmul.mubr.bf16.gmra.mrb[0].mxu0 %v1559
      %v1659 = vpop.f32.mrb[0].mxu0
      %v1660 = vadd.f32 %v1531, %v1659
      %v1661 = vpop.f32.mrb[0].mxu0
      %v1662 = vpop.f32.mrb[0].mxu0
      %v1663 = vadd.f32 %v1531, %v1662
      %v1664 = vpop.f32.mrb[0].mxu0
      %1665 = vmatprep.mubr.bf16.mxu0 0
      %1666 = vmatmul.mubr.bf16.gmra.mrb[0].mxu0 %v1562
      %v1667 = vpop.f32.mrb[0].mxu0
      %v1668 = vadd.f32 %v1531, %v1667
      %v1669 = vpop.f32.mrb[0].mxu0
      %v1670 = vpop.f32.mrb[0].mxu0
      %v1671 = vadd.f32 %v1531, %v1670
      %v1672 = vpop.f32.mrb[0].mxu0
      %1673 = vmatprep.mubr.bf16.mxu0 0
      %1674 = vmatmul.mubr.bf16.gmra.mrb[0].mxu0 %v1565
      %v1675 = vpop.f32.mrb[0].mxu0
      %v1676 = vadd.f32 %v1531, %v1675
      %v1677 = vpop.f32.mrb[0].mxu0
      %v1678 = vpop.f32.mrb[0].mxu0
      %v1679 = vadd.f32 %v1531, %v1678
      %v1680 = vpop.f32.mrb[0].mxu0
      %1681 = vmatprep.mubr.bf16.mxu0 0
      %1682 = vmatmul.mubr.bf16.gmra.mrb[0].mxu0 %v1568
      %v1683 = vpop.f32.mrb[0].mxu0
      %v1684 = vadd.f32 %v1531, %v1683
      %v1685 = vpop.f32.mrb[0].mxu0
      %v1686 = vpop.f32.mrb[0].mxu0
      %v1687 = vadd.f32 %v1531, %v1686
      %v1688 = vpop.f32.mrb[0].mxu0
      %1689 = vmatprep.mubr.bf16.mxu0 0
      %1690 = vmatmul.mubr.bf16.gmra.mrb[0].mxu0 %v1571
      %v1691 = vpop.f32.mrb[0].mxu0
      %v1692 = vadd.f32 %v1531, %v1691
      %v1693 = vpop.f32.mrb[0].mxu0
      %v1694 = vpop.f32.mrb[0].mxu0
      %v1695 = vadd.f32 %v1531, %v1694
      %v1696 = vpop.f32.mrb[0].mxu0
      %1697 = vmatprep.mubr.bf16.mxu0 0
      %1698 = vmatmul.mubr.bf16.gmra.mrb[0].mxu0 %v1574
      %v1699 = vpop.f32.mrb[0].mxu0
      %v1700 = vadd.f32 %v1531, %v1699
      %v1701 = vpop.f32.mrb[0].mxu0
      %v1702 = vpop.f32.mrb[0].mxu0
      %v1703 = vadd.f32 %v1531, %v1702
      %v1704 = vpop.f32.mrb[0].mxu0
      %1705 = vmatprep.mubr.bf16.mxu0 0
      %1706 = vmatmul.mubr.bf16.gmra.mrb[0].mxu0 %v1577
      %v1707 = vpop.f32.mrb[0].mxu0
      %v1708 = vadd.f32 %v1531, %v1707
      %v1709 = vpop.f32.mrb[0].mxu0
      %v1710 = vpop.f32.mrb[0].mxu0
      %v1711 = vadd.f32 %v1531, %v1710
      %v1712 = vpop.f32.mrb[0].mxu0
      %1713 = vmatprep.mubr.bf16.mxu0 0
      %1714 = vmatmul.mubr.bf16.gmra.mrb[0].mxu0 %v1580
      %v1715 = vpop.f32.mrb[0].mxu0
      %v1716 = vadd.f32 %v1531, %v1715
      %v1717 = vpop.f32.mrb[0].mxu0
      %v1718 = vpop.f32.mrb[0].mxu0
      %v1719 = vadd.f32 %v1531, %v1718
      %v1720 = vpop.f32.mrb[0].mxu0
      %1721 = vmatprep.mubr.bf16.mxu0 0
      %1722 = vmatmul.mubr.bf16.gmra.mrb[0].mxu0 %v1583
      %v1723 = vpop.f32.mrb[0].mxu0
      %v1724 = vadd.f32 %v1531, %v1723
      %v1725 = vpop.f32.mrb[0].mxu0
      %v1726 = vpop.f32.mrb[0].mxu0
      %v1727 = vadd.f32 %v1531, %v1726
      %v1728 = vpop.f32.mrb[0].mxu0
      %1729 = vmatprep.mubr.bf16.mxu0 0
      %1730 = vmatmul.mubr.bf16.gmra.mrb[0].mxu0 %v1586
      %v1731 = vpop.f32.mrb[0].mxu0
      %v1732 = vadd.f32 %v1531, %v1731
      %v1733 = vpop.f32.mrb[0].mxu0
      %v1734 = vpop.f32.mrb[0].mxu0
      %v1735 = vadd.f32 %v1531, %v1734
      %v1736 = vpop.f32.mrb[0].mxu0
      %1737 = vmatprep.mubr.bf16.mxu0 0
      %1738 = vmatmul.mubr.bf16.gmra.mrb[0].mxu0 %v1589
      %v1739 = vpop.f32.mrb[0].mxu0
      %v1740 = vadd.f32 %v1531, %v1739
      %v1741 = vpop.f32.mrb[0].mxu0
      %v1742 = vpop.f32.mrb[0].mxu0
      %v1743 = vadd.f32 %v1531, %v1742
      %v1744 = vpop.f32.mrb[0].mxu0
      %1745 = vmatprep.mubr.bf16.mxu0 0
      %1746 = vmatmul.mubr.bf16.gmra.mrb[0].mxu0 %v1592
      %v1747 = vpop.f32.mrb[0].mxu0
      %v1748 = vadd.f32 %v1531, %v1747
      %v1749 = vpop.f32.mrb[0].mxu0
      %v1750 = vpop.f32.mrb[0].mxu0
      %v1751 = vadd.f32 %v1531, %v1750
      %v1752 = vpop.f32.mrb[0].mxu0
      %1753 = vmatprep.mubr.bf16.mxu0 0
      %1754 = vmatmul.mubr.bf16.gmra.mrb[0].mxu0 %v1595
      %v1755 = vpop.f32.mrb[0].mxu0
      %v1756 = vadd.f32 %v1531, %v1755
      %v1757 = vpop.f32.mrb[0].mxu0
      %v1758 = vpop.f32.mrb[0].mxu0
      %v1759 = vadd.f32 %v1531, %v1758
      %v1760 = vpop.f32.mrb[0].mxu0
      %1761 = vdwg.mxu0
      %v1762 = vmax.f32 %v1636, 0.0
      %v1763 = vmax.f32 %v1639, 0.0
      %v1764 = vmax.f32 %v1644, 0.0
      %v1765 = vmax.f32 %v1647, 0.0
      %v1766 = vmax.f32 %v1652, 0.0
      %v1767 = vmax.f32 %v1655, 0.0
      %v1768 = vmax.f32 %v1660, 0.0
      %v1769 = vmax.f32 %v1663, 0.0
      %v1770 = vmax.f32 %v1668, 0.0
      %v1771 = vmax.f32 %v1671, 0.0
      %v1772 = vmax.f32 %v1676, 0.0
      %v1773 = vmax.f32 %v1679, 0.0
      %v1774 = vmax.f32 %v1684, 0.0
      %v1775 = vmax.f32 %v1687, 0.0
      %v1776 = vmax.f32 %v1692, 0.0
      %v1777 = vmax.f32 %v1695, 0.0
      %v1778 = vmax.f32 %v1700, 0.0
      %v1779 = vmax.f32 %v1703, 0.0
      %v1780 = vmax.f32 %v1708, 0.0
      %v1781 = vmax.f32 %v1711, 0.0
      %v1782 = vmax.f32 %v1716, 0.0
      %v1783 = vmax.f32 %v1719, 0.0
      %v1784 = vmax.f32 %v1724, 0.0
      %v1785 = vmax.f32 %v1727, 0.0
      %v1786 = vmax.f32 %v1732, 0.0
      %v1787 = vmax.f32 %v1735, 0.0
      %v1788 = vmax.f32 %v1740, 0.0
      %v1789 = vmax.f32 %v1743, 0.0
      %v1790 = vmax.f32 %v1748, 0.0
      %v1791 = vmax.f32 %v1751, 0.0
      %v1792 = vmax.f32 %v1756, 0.0
      %v1793 = vmax.f32 %v1759, 0.0
      %1794 = vst.msk [vmem:[%s278 + $0x1] sm:$0xff] %vm269, %v1762
      %1795 = vst.msk [vmem:[%s278 + $0x9] sm:$0xff] %vm269, %v1763
      %1796 = vst.msk [vmem:[%s278 + $0x19] sm:$0xff] %vm269, %v1764
      %1797 = vst.msk [vmem:[%s278 + $0x21] sm:$0xff] %vm269, %v1765
      %1798 = vst.msk [vmem:[%s278 + $0x31] sm:$0xff] %vm269, %v1766
      %1799 = vst.msk [vmem:[%s278 + $0x39] sm:$0xff] %vm269, %v1767
      %1800 = vst.msk [vmem:[%s278 + $0x49] sm:$0xff] %vm269, %v1768
      %1801 = vst.msk [vmem:[%s278 + $0x51] sm:$0xff] %vm269, %v1769
      %1802 = vst.msk [vmem:[%s278 + $0x61] sm:$0xff] %vm269, %v1770
      %1803 = vst.msk [vmem:[%s278 + $0x69] sm:$0xff] %vm269, %v1771
      %1804 = vst.msk [vmem:[%s278 + $0x79] sm:$0xff] %vm269, %v1772
      %1805 = vst.msk [vmem:[%s278 + $0x81] sm:$0xff] %vm269, %v1773
      %1806 = vst.msk [vmem:[%s278 + $0x91] sm:$0xff] %vm269, %v1774
      %1807 = vst.msk [vmem:[%s278 + $0x99] sm:$0xff] %vm269, %v1775
      %1808 = vst.msk [vmem:[%s278 + $0xa9] sm:$0xff] %vm269, %v1776
      %1809 = vst.msk [vmem:[%s278 + $0xb1] sm:$0xff] %vm269, %v1777
      %1810 = vst.msk [vmem:[%s278 + $0xc1] sm:$0xff] %vm269, %v1778
      %1811 = vst.msk [vmem:[%s278 + $0xc9] sm:$0xff] %vm269, %v1779
      %1812 = vst.msk [vmem:[%s278 + $0xd9] sm:$0xff] %vm269, %v1780
      %1813 = vst.msk [vmem:[%s278 + $0xe1] sm:$0xff] %vm269, %v1781
      %1814 = vst.msk [vmem:[%s278 + $0xf1] sm:$0xff] %vm269, %v1782
      %1815 = vst.msk [vmem:[%s278 + $0xf9] sm:$0xff] %vm269, %v1783
      %1816 = vst.msk [vmem:[%s278 + $0x109] sm:$0xff] %vm269, %v1784
      %1817 = vst.msk [vmem:[%s278 + $0x111] sm:$0xff] %vm269, %v1785
      %1818 = vst.msk [vmem:[%s278 + $0x121] sm:$0xff] %vm269, %v1786
      %1819 = vst.msk [vmem:[%s278 + $0x129] sm:$0xff] %vm269, %v1787
      %1820 = vst.msk [vmem:[%s278 + $0x139] sm:$0xff] %vm269, %v1788
      %1821 = vst.msk [vmem:[%s278 + $0x141] sm:$0xff] %vm269, %v1789
      %1822 = vst.msk [vmem:[%s278 + $0x151] sm:$0xff] %vm269, %v1790
      %1823 = vst.msk [vmem:[%s278 + $0x159] sm:$0xff] %vm269, %v1791
      %1824 = vst.msk [vmem:[%s278 + $0x169] sm:$0xff] %vm269, %v1792
      %1825 = vst.msk [vmem:[%s278 + $0x171] sm:$0xff] %vm269, %v1793
      %v1826 = vld [vmem:[#allocation3] sm:$0xff]
      %v1827 = vld [vmem:[#allocation3 + $0x8] sm:$0xff]
      %v1828 = vld [vmem:[#allocation3 + $0x18] sm:$0xff]
      %v1829 = vld [vmem:[#allocation3 + $0x20] sm:$0xff]
      %v1830 = vld [vmem:[#allocation3 + $0x30] sm:$0xff]
      %v1831 = vld [vmem:[#allocation3 + $0x38] sm:$0xff]
      %v1832 = vld [vmem:[#allocation3 + $0x48] sm:$0xff]
      %v1833 = vld [vmem:[#allocation3 + $0x50] sm:$0xff]
      %v1834 = vld [vmem:[#allocation3 + $0x60] sm:$0xff]
      %v1835 = vld [vmem:[#allocation3 + $0x68] sm:$0xff]
      %v1836 = vld [vmem:[#allocation3 + $0x78] sm:$0xff]
      %v1837 = vld [vmem:[#allocation3 + $0x80] sm:$0xff]
      %v1838 = vld [vmem:[#allocation3 + $0x90] sm:$0xff]
      %v1839 = vld [vmem:[#allocation3 + $0x98] sm:$0xff]
      %v1840 = vld [vmem:[#allocation3 + $0xa8] sm:$0xff]
      %v1841 = vld [vmem:[#allocation3 + $0xb0] sm:$0xff]
      %v1842 = vld [vmem:[#allocation3 + $0xc0] sm:$0xff]
      %v1843 = vld [vmem:[#allocation3 + $0xc8] sm:$0xff]
      %v1844 = vld [vmem:[#allocation3 + $0xd8] sm:$0xff]
      %v1845 = vld [vmem:[#allocation3 + $0xe0] sm:$0xff]
      %v1846 = vld [vmem:[#allocation3 + $0xf0] sm:$0xff]
      %v1847 = vld [vmem:[#allocation3 + $0xf8] sm:$0xff]
      %v1848 = vld [vmem:[#allocation3 + $0x108] sm:$0xff]
      %v1849 = vld [vmem:[#allocation3 + $0x110] sm:$0xff]
      %v1850 = vld [vmem:[#allocation3 + $0x120] sm:$0xff]
      %v1851 = vld [vmem:[#allocation3 + $0x128] sm:$0xff]
      %v1852 = vld [vmem:[#allocation3 + $0x138] sm:$0xff]
      %v1853 = vld [vmem:[#allocation3 + $0x140] sm:$0xff]
      %v1854 = vld [vmem:[#allocation3 + $0x150] sm:$0xff]
      %v1855 = vld [vmem:[#allocation3 + $0x158] sm:$0xff]
      %v1856 = vld [vmem:[#allocation3 + $0x168] sm:$0xff]
      %v1857 = vld [vmem:[#allocation3 + $0x170] sm:$0xff]
      %v1858 = vpack.c.bf16 %v1827, %v1826
      %v1859 = vpack.c.bf16 %v1829, %v1828
      %v1860 = vpack.c.bf16 %v1831, %v1830
      %v1861 = vpack.c.bf16 %v1833, %v1832
      %v1862 = vpack.c.bf16 %v1835, %v1834
      %v1863 = vpack.c.bf16 %v1837, %v1836
      %v1864 = vpack.c.bf16 %v1839, %v1838
      %v1865 = vpack.c.bf16 %v1841, %v1840
      %v1866 = vpack.c.bf16 %v1843, %v1842
      %v1867 = vpack.c.bf16 %v1845, %v1844
      %v1868 = vpack.c.bf16 %v1847, %v1846
      %v1869 = vpack.c.bf16 %v1849, %v1848
      %v1870 = vpack.c.bf16 %v1851, %v1850
      %v1871 = vpack.c.bf16 %v1853, %v1852
      %v1872 = vpack.c.bf16 %v1855, %v1854
      %v1873 = vpack.c.bf16 %v1857, %v1856
      %1874 = vst.msk [vmem:[#allocation5] sm:$0xff] %vm269, %v1858
      %1875 = vst.msk [vmem:[#allocation5 + $0x8] sm:$0xff] %vm269, %v1859
      %1876 = vst.msk [vmem:[#allocation5 + $0x10] sm:$0xff] %vm269, %v1860
      %1877 = vst.msk [vmem:[#allocation5 + $0x18] sm:$0xff] %vm269, %v1861
      %1878 = vst.msk [vmem:[#allocation5 + $0x20] sm:$0xff] %vm269, %v1862
      %1879 = vst.msk [vmem:[#allocation5 + $0x28] sm:$0xff] %vm269, %v1863
      %1880 = vst.msk [vmem:[#allocation5 + $0x30] sm:$0xff] %vm269, %v1864
      %1881 = vst.msk [vmem:[#allocation5 + $0x38] sm:$0xff] %vm269, %v1865
      %1882 = vst.msk [vmem:[#allocation5 + $0x40] sm:$0xff] %vm269, %v1866
      %1883 = vst.msk [vmem:[#allocation5 + $0x48] sm:$0xff] %vm269, %v1867
      %1884 = vst.msk [vmem:[#allocation5 + $0x50] sm:$0xff] %vm269, %v1868
      %1885 = vst.msk [vmem:[#allocation5 + $0x58] sm:$0xff] %vm269, %v1869
      %1886 = vst.msk [vmem:[#allocation5 + $0x60] sm:$0xff] %vm269, %v1870
      %1887 = vst.msk [vmem:[#allocation5 + $0x68] sm:$0xff] %vm269, %v1871
      %1888 = vst.msk [vmem:[#allocation5 + $0x70] sm:$0xff] %vm269, %v1872
      %1889 = vst.msk [vmem:[#allocation5 + $0x78] sm:$0xff] %vm269, %v1873
      %v1890 = vld [vmem:[#allocation3 + $0x1] sm:$0xff]
      %v1891 = vld [vmem:[#allocation3 + $0x9] sm:$0xff]
      %v1892 = vld [vmem:[#allocation3 + $0x19] sm:$0xff]
      %v1893 = vld [vmem:[#allocation3 + $0x21] sm:$0xff]
      %v1894 = vld [vmem:[#allocation3 + $0x31] sm:$0xff]
      %v1895 = vld [vmem:[#allocation3 + $0x39] sm:$0xff]
      %v1896 = vld [vmem:[#allocation3 + $0x49] sm:$0xff]
      %v1897 = vld [vmem:[#allocation3 + $0x51] sm:$0xff]
      %v1898 = vld [vmem:[#allocation3 + $0x61] sm:$0xff]
      %v1899 = vld [vmem:[#allocation3 + $0x69] sm:$0xff]
      %v1900 = vld [vmem:[#allocation3 + $0x79] sm:$0xff]
      %v1901 = vld [vmem:[#allocation3 + $0x81] sm:$0xff]
      %v1902 = vld [vmem:[#allocation3 + $0x91] sm:$0xff]
      %v1903 = vld [vmem:[#allocation3 + $0x99] sm:$0xff]
      %v1904 = vld [vmem:[#allocation3 + $0xa9] sm:$0xff]
      %v1905 = vld [vmem:[#allocation3 + $0xb1] sm:$0xff]
      %v1906 = vld [vmem:[#allocation3 + $0xc1] sm:$0xff]
      %v1907 = vld [vmem:[#allocation3 + $0xc9] sm:$0xff]
      %v1908 = vld [vmem:[#allocation3 + $0xd9] sm:$0xff]
      %v1909 = vld [vmem:[#allocation3 + $0xe1] sm:$0xff]
      %v1910 = vld [vmem:[#allocation3 + $0xf1] sm:$0xff]
      %v1911 = vld [vmem:[#allocation3 + $0xf9] sm:$0xff]
      %v1912 = vld [vmem:[#allocation3 + $0x109] sm:$0xff]
      %v1913 = vld [vmem:[#allocation3 + $0x111] sm:$0xff]
      %v1914 = vld [vmem:[#allocation3 + $0x121] sm:$0xff]
      %v1915 = vld [vmem:[#allocation3 + $0x129] sm:$0xff]
      %v1916 = vld [vmem:[#allocation3 + $0x139] sm:$0xff]
      %v1917 = vld [vmem:[#allocation3 + $0x141] sm:$0xff]
      %v1918 = vld [vmem:[#allocation3 + $0x151] sm:$0xff]
      %v1919 = vld [vmem:[#allocation3 + $0x159] sm:$0xff]
      %v1920 = vld [vmem:[#allocation3 + $0x169] sm:$0xff]
      %v1921 = vld [vmem:[#allocation3 + $0x171] sm:$0xff]
      %v1922 = vpack.c.bf16 %v1891, %v1890
      %v1923 = vpack.c.bf16 %v1893, %v1892
      %v1924 = vpack.c.bf16 %v1895, %v1894
      %v1925 = vpack.c.bf16 %v1897, %v1896
      %v1926 = vpack.c.bf16 %v1899, %v1898
      %v1927 = vpack.c.bf16 %v1901, %v1900
      %v1928 = vpack.c.bf16 %v1903, %v1902
      %v1929 = vpack.c.bf16 %v1905, %v1904
      %v1930 = vpack.c.bf16 %v1907, %v1906
      %v1931 = vpack.c.bf16 %v1909, %v1908
      %v1932 = vpack.c.bf16 %v1911, %v1910
      %v1933 = vpack.c.bf16 %v1913, %v1912
      %v1934 = vpack.c.bf16 %v1915, %v1914
      %v1935 = vpack.c.bf16 %v1917, %v1916
      %v1936 = vpack.c.bf16 %v1919, %v1918
      %v1937 = vpack.c.bf16 %v1921, %v1920
      %1954 = vrot.lane.b32.xlu0 %v1922, 8
      %v1955 = vpop.permute.xlu0 %1954
      %1956 = vrot.lane.b32.xlu0 %v1923, 8
      %v1957 = vpop.permute.xlu0 %1956
      %1958 = vrot.lane.b32.xlu0 %v1924, 8
      %v1959 = vpop.permute.xlu0 %1958
      %1960 = vrot.lane.b32.xlu0 %v1925, 8
      %v1961 = vpop.permute.xlu0 %1960
      %1962 = vrot.lane.b32.xlu0 %v1926, 8
      %v1963 = vpop.permute.xlu0 %1962
      %1964 = vrot.lane.b32.xlu0 %v1927, 8
      %v1965 = vpop.permute.xlu0 %1964
      %1966 = vrot.lane.b32.xlu0 %v1928, 8
      %v1967 = vpop.permute.xlu0 %1966
      %1968 = vrot.lane.b32.xlu0 %v1929, 8
      %v1969 = vpop.permute.xlu0 %1968
      %1970 = vrot.lane.b32.xlu0 %v1930, 8
      %v1971 = vpop.permute.xlu0 %1970
      %1972 = vrot.lane.b32.xlu0 %v1931, 8
      %v1973 = vpop.permute.xlu0 %1972
      %1974 = vrot.lane.b32.xlu0 %v1932, 8
      %v1975 = vpop.permute.xlu0 %1974
      %1976 = vrot.lane.b32.xlu0 %v1933, 8
      %v1977 = vpop.permute.xlu0 %1976
      %1978 = vrot.lane.b32.xlu0 %v1934, 8
      %v1979 = vpop.permute.xlu0 %1978
      %1980 = vrot.lane.b32.xlu0 %v1935, 8
      %v1981 = vpop.permute.xlu0 %1980
      %1982 = vrot.lane.b32.xlu0 %v1936, 8
      %v1983 = vpop.permute.xlu0 %1982
      %1984 = vrot.lane.b32.xlu0 %v1937, 8
      %v1985 = vpop.permute.xlu0 %1984
      %vm2002 = vcmask 130112
      %2003 = vst.msk [vmem:[#allocation5] sm:$0xff] %vm2002, %v1955
      %2004 = vst.msk [vmem:[#allocation5 + $0x8] sm:$0xff] %vm2002, %v1957
      %2005 = vst.msk [vmem:[#allocation5 + $0x10] sm:$0xff] %vm2002, %v1959
      %2006 = vst.msk [vmem:[#allocation5 + $0x18] sm:$0xff] %vm2002, %v1961
      %2007 = vst.msk [vmem:[#allocation5 + $0x20] sm:$0xff] %vm2002, %v1963
      %2008 = vst.msk [vmem:[#allocation5 + $0x28] sm:$0xff] %vm2002, %v1965
      %2009 = vst.msk [vmem:[#allocation5 + $0x30] sm:$0xff] %vm2002, %v1967
      %2010 = vst.msk [vmem:[#allocation5 + $0x38] sm:$0xff] %vm2002, %v1969
      %2011 = vst.msk [vmem:[#allocation5 + $0x40] sm:$0xff] %vm2002, %v1971
      %2012 = vst.msk [vmem:[#allocation5 + $0x48] sm:$0xff] %vm2002, %v1973
      %2013 = vst.msk [vmem:[#allocation5 + $0x50] sm:$0xff] %vm2002, %v1975
      %2014 = vst.msk [vmem:[#allocation5 + $0x58] sm:$0xff] %vm2002, %v1977
      %2015 = vst.msk [vmem:[#allocation5 + $0x60] sm:$0xff] %vm2002, %v1979
      %2016 = vst.msk [vmem:[#allocation5 + $0x68] sm:$0xff] %vm2002, %v1981
      %2017 = vst.msk [vmem:[#allocation5 + $0x70] sm:$0xff] %vm2002, %v1983
      %2018 = vst.msk [vmem:[#allocation5 + $0x78] sm:$0xff] %vm2002, %v1985
      %v2019 = vld [vmem:[#allocation3 + $0x2] sm:$0xff]
      %v2020 = vld [vmem:[#allocation3 + $0xa] sm:$0xff]
      %v2021 = vld [vmem:[#allocation3 + $0x1a] sm:$0xff]
      %v2022 = vld [vmem:[#allocation3 + $0x22] sm:$0xff]
      %v2023 = vld [vmem:[#allocation3 + $0x32] sm:$0xff]
      %v2024 = vld [vmem:[#allocation3 + $0x3a] sm:$0xff]
      %v2025 = vld [vmem:[#allocation3 + $0x4a] sm:$0xff]
      %v2026 = vld [vmem:[#allocation3 + $0x52] sm:$0xff]
      %v2027 = vld [vmem:[#allocation3 + $0x62] sm:$0xff]
      %v2028 = vld [vmem:[#allocation3 + $0x6a] sm:$0xff]
      %v2029 = vld [vmem:[#allocation3 + $0x7a] sm:$0xff]
      %v2030 = vld [vmem:[#allocation3 + $0x82] sm:$0xff]
      %v2031 = vld [vmem:[#allocation3 + $0x92] sm:$0xff]
      %v2032 = vld [vmem:[#allocation3 + $0x9a] sm:$0xff]
      %v2033 = vld [vmem:[#allocation3 + $0xaa] sm:$0xff]
      %v2034 = vld [vmem:[#allocation3 + $0xb2] sm:$0xff]
      %v2035 = vld [vmem:[#allocation3 + $0xc2] sm:$0xff]
      %v2036 = vld [vmem:[#allocation3 + $0xca] sm:$0xff]
      %v2037 = vld [vmem:[#allocation3 + $0xda] sm:$0xff]
      %v2038 = vld [vmem:[#allocation3 + $0xe2] sm:$0xff]
      %v2039 = vld [vmem:[#allocation3 + $0xf2] sm:$0xff]
      %v2040 = vld [vmem:[#allocation3 + $0xfa] sm:$0xff]
      %v2041 = vld [vmem:[#allocation3 + $0x10a] sm:$0xff]
      %v2042 = vld [vmem:[#allocation3 + $0x112] sm:$0xff]
      %v2043 = vld [vmem:[#allocation3 + $0x122] sm:$0xff]
      %v2044 = vld [vmem:[#allocation3 + $0x12a] sm:$0xff]
      %v2045 = vld [vmem:[#allocation3 + $0x13a] sm:$0xff]
      %v2046 = vld [vmem:[#allocation3 + $0x142] sm:$0xff]
      %v2047 = vld [vmem:[#allocation3 + $0x152] sm:$0xff]
      %v2048 = vld [vmem:[#allocation3 + $0x15a] sm:$0xff]
      %v2049 = vld [vmem:[#allocation3 + $0x16a] sm:$0xff]
      %v2050 = vld [vmem:[#allocation3 + $0x172] sm:$0xff]
      %v2051 = vpack.c.bf16 %v2020, %v2019
      %v2052 = vpack.c.bf16 %v2022, %v2021
      %v2053 = vpack.c.bf16 %v2024, %v2023
      %v2054 = vpack.c.bf16 %v2026, %v2025
      %v2055 = vpack.c.bf16 %v2028, %v2027
      %v2056 = vpack.c.bf16 %v2030, %v2029
      %v2057 = vpack.c.bf16 %v2032, %v2031
      %v2058 = vpack.c.bf16 %v2034, %v2033
      %v2059 = vpack.c.bf16 %v2036, %v2035
      %v2060 = vpack.c.bf16 %v2038, %v2037
      %v2061 = vpack.c.bf16 %v2040, %v2039
      %v2062 = vpack.c.bf16 %v2042, %v2041
      %v2063 = vpack.c.bf16 %v2044, %v2043
      %v2064 = vpack.c.bf16 %v2046, %v2045
      %v2065 = vpack.c.bf16 %v2048, %v2047
      %v2066 = vpack.c.bf16 %v2050, %v2049
      %2083 = vrot.lane.b32.xlu0 %v2051, 16
      %v2084 = vpop.permute.xlu0 %2083
      %2085 = vrot.lane.b32.xlu0 %v2052, 16
      %v2086 = vpop.permute.xlu0 %2085
      %2087 = vrot.lane.b32.xlu0 %v2053, 16
      %v2088 = vpop.permute.xlu0 %2087
      %2089 = vrot.lane.b32.xlu0 %v2054, 16
      %v2090 = vpop.permute.xlu0 %2089
      %2091 = vrot.lane.b32.xlu0 %v2055, 16
      %v2092 = vpop.permute.xlu0 %2091
      %2093 = vrot.lane.b32.xlu0 %v2056, 16
      %v2094 = vpop.permute.xlu0 %2093
      %2095 = vrot.lane.b32.xlu0 %v2057, 16
      %v2096 = vpop.permute.xlu0 %2095
      %2097 = vrot.lane.b32.xlu0 %v2058, 16
      %v2098 = vpop.permute.xlu0 %2097
      %2099 = vrot.lane.b32.xlu0 %v2059, 16
      %v2100 = vpop.permute.xlu0 %2099
      %2101 = vrot.lane.b32.xlu0 %v2060, 16
      %v2102 = vpop.permute.xlu0 %2101
      %2103 = vrot.lane.b32.xlu0 %v2061, 16
      %v2104 = vpop.permute.xlu0 %2103
      %2105 = vrot.lane.b32.xlu0 %v2062, 16
      %v2106 = vpop.permute.xlu0 %2105
      %2107 = vrot.lane.b32.xlu0 %v2063, 16
      %v2108 = vpop.permute.xlu0 %2107
      %2109 = vrot.lane.b32.xlu0 %v2064, 16
      %v2110 = vpop.permute.xlu0 %2109
      %2111 = vrot.lane.b32.xlu0 %v2065, 16
      %v2112 = vpop.permute.xlu0 %2111
      %2113 = vrot.lane.b32.xlu0 %v2066, 16
      %v2114 = vpop.permute.xlu0 %2113
      %vm2131 = vcmask 195712
      %2132 = vst.msk [vmem:[#allocation5] sm:$0xff] %vm2131, %v2084
      %2133 = vst.msk [vmem:[#allocation5 + $0x8] sm:$0xff] %vm2131, %v2086
      %2134 = vst.msk [vmem:[#allocation5 + $0x10] sm:$0xff] %vm2131, %v2088
      %2135 = vst.msk [vmem:[#allocation5 + $0x18] sm:$0xff] %vm2131, %v2090
      %2136 = vst.msk [vmem:[#allocation5 + $0x20] sm:$0xff] %vm2131, %v2092
      %2137 = vst.msk [vmem:[#allocation5 + $0x28] sm:$0xff] %vm2131, %v2094
      %2138 = vst.msk [vmem:[#allocation5 + $0x30] sm:$0xff] %vm2131, %v2096
      %2139 = vst.msk [vmem:[#allocation5 + $0x38] sm:$0xff] %vm2131, %v2098
      %2140 = vst.msk [vmem:[#allocation5 + $0x40] sm:$0xff] %vm2131, %v2100
      %2141 = vst.msk [vmem:[#allocation5 + $0x48] sm:$0xff] %vm2131, %v2102
      %2142 = vst.msk [vmem:[#allocation5 + $0x50] sm:$0xff] %vm2131, %v2104
      %2143 = vst.msk [vmem:[#allocation5 + $0x58] sm:$0xff] %vm2131, %v2106
      %2144 = vst.msk [vmem:[#allocation5 + $0x60] sm:$0xff] %vm2131, %v2108
      %2145 = vst.msk [vmem:[#allocation5 + $0x68] sm:$0xff] %vm2131, %v2110
      %2146 = vst.msk [vmem:[#allocation5 + $0x70] sm:$0xff] %vm2131, %v2112
      %2147 = vst.msk [vmem:[#allocation5 + $0x78] sm:$0xff] %vm2131, %v2114
      %v2148 = vld [vmem:[%s278] sm:$0xff]
      %v2149 = vld [vmem:[%s278 + $0x8] sm:$0xff]
      %v2150 = vld [vmem:[%s278 + $0x18] sm:$0xff]
      %v2151 = vld [vmem:[%s278 + $0x20] sm:$0xff]
      %v2152 = vld [vmem:[%s278 + $0x30] sm:$0xff]
      %v2153 = vld [vmem:[%s278 + $0x38] sm:$0xff]
      %v2154 = vld [vmem:[%s278 + $0x48] sm:$0xff]
      %v2155 = vld [vmem:[%s278 + $0x50] sm:$0xff]
      %v2156 = vld [vmem:[%s278 + $0x60] sm:$0xff]
      %v2157 = vld [vmem:[%s278 + $0x68] sm:$0xff]
      %v2158 = vld [vmem:[%s278 + $0x78] sm:$0xff]
      %v2159 = vld [vmem:[%s278 + $0x80] sm:$0xff]
      %v2160 = vld [vmem:[%s278 + $0x90] sm:$0xff]
      %v2161 = vld [vmem:[%s278 + $0x98] sm:$0xff]
      %v2162 = vld [vmem:[%s278 + $0xa8] sm:$0xff]
      %v2163 = vld [vmem:[%s278 + $0xb0] sm:$0xff]
      %v2164 = vld [vmem:[%s278 + $0xc0] sm:$0xff]
      %v2165 = vld [vmem:[%s278 + $0xc8] sm:$0xff]
      %v2166 = vld [vmem:[%s278 + $0xd8] sm:$0xff]
      %v2167 = vld [vmem:[%s278 + $0xe0] sm:$0xff]
      %v2168 = vld [vmem:[%s278 + $0xf0] sm:$0xff]
      %v2169 = vld [vmem:[%s278 + $0xf8] sm:$0xff]
      %v2170 = vld [vmem:[%s278 + $0x108] sm:$0xff]
      %v2171 = vld [vmem:[%s278 + $0x110] sm:$0xff]
      %v2172 = vld [vmem:[%s278 + $0x120] sm:$0xff]
      %v2173 = vld [vmem:[%s278 + $0x128] sm:$0xff]
      %v2174 = vld [vmem:[%s278 + $0x138] sm:$0xff]
      %v2175 = vld [vmem:[%s278 + $0x140] sm:$0xff]
      %v2176 = vld [vmem:[%s278 + $0x150] sm:$0xff]
      %v2177 = vld [vmem:[%s278 + $0x158] sm:$0xff]
      %v2178 = vld [vmem:[%s278 + $0x168] sm:$0xff]
      %v2179 = vld [vmem:[%s278 + $0x170] sm:$0xff]
      %v2180 = vpack.c.bf16 %v2149, %v2148
      %v2181 = vpack.c.bf16 %v2151, %v2150
      %v2182 = vpack.c.bf16 %v2153, %v2152
      %v2183 = vpack.c.bf16 %v2155, %v2154
      %v2184 = vpack.c.bf16 %v2157, %v2156
      %v2185 = vpack.c.bf16 %v2159, %v2158
      %v2186 = vpack.c.bf16 %v2161, %v2160
      %v2187 = vpack.c.bf16 %v2163, %v2162
      %v2188 = vpack.c.bf16 %v2165, %v2164
      %v2189 = vpack.c.bf16 %v2167, %v2166
      %v2190 = vpack.c.bf16 %v2169, %v2168
      %v2191 = vpack.c.bf16 %v2171, %v2170
      %v2192 = vpack.c.bf16 %v2173, %v2172
      %v2193 = vpack.c.bf16 %v2175, %v2174
      %v2194 = vpack.c.bf16 %v2177, %v2176
      %v2195 = vpack.c.bf16 %v2179, %v2178
      %2212 = vrot.lane.b32.xlu0 %v2180, 24
      %v2213 = vpop.permute.xlu0 %2212
      %2214 = vrot.lane.b32.xlu0 %v2181, 24
      %v2215 = vpop.permute.xlu0 %2214
      %2216 = vrot.lane.b32.xlu0 %v2182, 24
      %v2217 = vpop.permute.xlu0 %2216
      %2218 = vrot.lane.b32.xlu0 %v2183, 24
      %v2219 = vpop.permute.xlu0 %2218
      %2220 = vrot.lane.b32.xlu0 %v2184, 24
      %v2221 = vpop.permute.xlu0 %2220
      %2222 = vrot.lane.b32.xlu0 %v2185, 24
      %v2223 = vpop.permute.xlu0 %2222
      %2224 = vrot.lane.b32.xlu0 %v2186, 24
      %v2225 = vpop.permute.xlu0 %2224
      %2226 = vrot.lane.b32.xlu0 %v2187, 24
      %v2227 = vpop.permute.xlu0 %2226
      %2228 = vrot.lane.b32.xlu0 %v2188, 24
      %v2229 = vpop.permute.xlu0 %2228
      %2230 = vrot.lane.b32.xlu0 %v2189, 24
      %v2231 = vpop.permute.xlu0 %2230
      %2232 = vrot.lane.b32.xlu0 %v2190, 24
      %v2233 = vpop.permute.xlu0 %2232
      %2234 = vrot.lane.b32.xlu0 %v2191, 24
      %v2235 = vpop.permute.xlu0 %2234
      %2236 = vrot.lane.b32.xlu0 %v2192, 24
      %v2237 = vpop.permute.xlu0 %2236
      %2238 = vrot.lane.b32.xlu0 %v2193, 24
      %v2239 = vpop.permute.xlu0 %2238
      %2240 = vrot.lane.b32.xlu0 %v2194, 24
      %v2241 = vpop.permute.xlu0 %2240
      %2242 = vrot.lane.b32.xlu0 %v2195, 24
      %v2243 = vpop.permute.xlu0 %2242
      %vm2260 = vcmask 261312
      %2261 = vst.msk [vmem:[#allocation5] sm:$0xff] %vm2260, %v2213
      %2262 = vst.msk [vmem:[#allocation5 + $0x8] sm:$0xff] %vm2260, %v2215
      %2263 = vst.msk [vmem:[#allocation5 + $0x10] sm:$0xff] %vm2260, %v2217
      %2264 = vst.msk [vmem:[#allocation5 + $0x18] sm:$0xff] %vm2260, %v2219
      %2265 = vst.msk [vmem:[#allocation5 + $0x20] sm:$0xff] %vm2260, %v2221
      %2266 = vst.msk [vmem:[#allocation5 + $0x28] sm:$0xff] %vm2260, %v2223
      %2267 = vst.msk [vmem:[#allocation5 + $0x30] sm:$0xff] %vm2260, %v2225
      %2268 = vst.msk [vmem:[#allocation5 + $0x38] sm:$0xff] %vm2260, %v2227
      %2269 = vst.msk [vmem:[#allocation5 + $0x40] sm:$0xff] %vm2260, %v2229
      %2270 = vst.msk [vmem:[#allocation5 + $0x48] sm:$0xff] %vm2260, %v2231
      %2271 = vst.msk [vmem:[#allocation5 + $0x50] sm:$0xff] %vm2260, %v2233
      %2272 = vst.msk [vmem:[#allocation5 + $0x58] sm:$0xff] %vm2260, %v2235
      %2273 = vst.msk [vmem:[#allocation5 + $0x60] sm:$0xff] %vm2260, %v2237
      %2274 = vst.msk [vmem:[#allocation5 + $0x68] sm:$0xff] %vm2260, %v2239
      %2275 = vst.msk [vmem:[#allocation5 + $0x70] sm:$0xff] %vm2260, %v2241
      %2276 = vst.msk [vmem:[#allocation5 + $0x78] sm:$0xff] %vm2260, %v2243
      %v2277 = vld [vmem:[%s278 + $0x1] sm:$0xff]
      %v2278 = vld [vmem:[%s278 + $0x9] sm:$0xff]
      %v2279 = vld [vmem:[%s278 + $0x19] sm:$0xff]
      %v2280 = vld [vmem:[%s278 + $0x21] sm:$0xff]
      %v2281 = vld [vmem:[%s278 + $0x31] sm:$0xff]
      %v2282 = vld [vmem:[%s278 + $0x39] sm:$0xff]
      %v2283 = vld [vmem:[%s278 + $0x49] sm:$0xff]
      %v2284 = vld [vmem:[%s278 + $0x51] sm:$0xff]
      %v2285 = vld [vmem:[%s278 + $0x61] sm:$0xff]
      %v2286 = vld [vmem:[%s278 + $0x69] sm:$0xff]
      %v2287 = vld [vmem:[%s278 + $0x79] sm:$0xff]
      %v2288 = vld [vmem:[%s278 + $0x81] sm:$0xff]
      %v2289 = vld [vmem:[%s278 + $0x91] sm:$0xff]
      %v2290 = vld [vmem:[%s278 + $0x99] sm:$0xff]
      %v2291 = vld [vmem:[%s278 + $0xa9] sm:$0xff]
      %v2292 = vld [vmem:[%s278 + $0xb1] sm:$0xff]
      %v2293 = vld [vmem:[%s278 + $0xc1] sm:$0xff]
      %v2294 = vld [vmem:[%s278 + $0xc9] sm:$0xff]
      %v2295 = vld [vmem:[%s278 + $0xd9] sm:$0xff]
      %v2296 = vld [vmem:[%s278 + $0xe1] sm:$0xff]
      %v2297 = vld [vmem:[%s278 + $0xf1] sm:$0xff]
      %v2298 = vld [vmem:[%s278 + $0xf9] sm:$0xff]
      %v2299 = vld [vmem:[%s278 + $0x109] sm:$0xff]
      %v2300 = vld [vmem:[%s278 + $0x111] sm:$0xff]
      %v2301 = vld [vmem:[%s278 + $0x121] sm:$0xff]
      %v2302 = vld [vmem:[%s278 + $0x129] sm:$0xff]
      %v2303 = vld [vmem:[%s278 + $0x139] sm:$0xff]
      %v2304 = vld [vmem:[%s278 + $0x141] sm:$0xff]
      %v2305 = vld [vmem:[%s278 + $0x151] sm:$0xff]
      %v2306 = vld [vmem:[%s278 + $0x159] sm:$0xff]
      %v2307 = vld [vmem:[%s278 + $0x169] sm:$0xff]
      %v2308 = vld [vmem:[%s278 + $0x171] sm:$0xff]
      %v2309 = vpack.c.bf16 %v2278, %v2277
      %v2310 = vpack.c.bf16 %v2280, %v2279
      %v2311 = vpack.c.bf16 %v2282, %v2281
      %v2312 = vpack.c.bf16 %v2284, %v2283
      %v2313 = vpack.c.bf16 %v2286, %v2285
      %v2314 = vpack.c.bf16 %v2288, %v2287
      %v2315 = vpack.c.bf16 %v2290, %v2289
      %v2316 = vpack.c.bf16 %v2292, %v2291
      %v2317 = vpack.c.bf16 %v2294, %v2293
      %v2318 = vpack.c.bf16 %v2296, %v2295
      %v2319 = vpack.c.bf16 %v2298, %v2297
      %v2320 = vpack.c.bf16 %v2300, %v2299
      %v2321 = vpack.c.bf16 %v2302, %v2301
      %v2322 = vpack.c.bf16 %v2304, %v2303
      %v2323 = vpack.c.bf16 %v2306, %v2305
      %v2324 = vpack.c.bf16 %v2308, %v2307
      %2341 = vrot.lane.b32.xlu0 %v2309, 32
      %v2342 = vpop.permute.xlu0 %2341
      %2343 = vrot.lane.b32.xlu0 %v2310, 32
      %v2344 = vpop.permute.xlu0 %2343
      %2345 = vrot.lane.b32.xlu0 %v2311, 32
      %v2346 = vpop.permute.xlu0 %2345
      %2347 = vrot.lane.b32.xlu0 %v2312, 32
      %v2348 = vpop.permute.xlu0 %2347
      %2349 = vrot.lane.b32.xlu0 %v2313, 32
      %v2350 = vpop.permute.xlu0 %2349
      %2351 = vrot.lane.b32.xlu0 %v2314, 32
      %v2352 = vpop.permute.xlu0 %2351
      %2353 = vrot.lane.b32.xlu0 %v2315, 32
      %v2354 = vpop.permute.xlu0 %2353
      %2355 = vrot.lane.b32.xlu0 %v2316, 32
      %v2356 = vpop.permute.xlu0 %2355
      %2357 = vrot.lane.b32.xlu0 %v2317, 32
      %v2358 = vpop.permute.xlu0 %2357
      %2359 = vrot.lane.b32.xlu0 %v2318, 32
      %v2360 = vpop.permute.xlu0 %2359
      %2361 = vrot.lane.b32.xlu0 %v2319, 32
      %v2362 = vpop.permute.xlu0 %2361
      %2363 = vrot.lane.b32.xlu0 %v2320, 32
      %v2364 = vpop.permute.xlu0 %2363
      %2365 = vrot.lane.b32.xlu0 %v2321, 32
      %v2366 = vpop.permute.xlu0 %2365
      %2367 = vrot.lane.b32.xlu0 %v2322, 32
      %v2368 = vpop.permute.xlu0 %2367
      %2369 = vrot.lane.b32.xlu0 %v2323, 32
      %v2370 = vpop.permute.xlu0 %2369
      %2371 = vrot.lane.b32.xlu0 %v2324, 32
      %v2372 = vpop.permute.xlu0 %2371
      %vm2389 = vcmask 326912
      %2390 = vst.msk [vmem:[#allocation5] sm:$0xff] %vm2389, %v2342
      %2391 = vst.msk [vmem:[#allocation5 + $0x8] sm:$0xff] %vm2389, %v2344
      %2392 = vst.msk [vmem:[#allocation5 + $0x10] sm:$0xff] %vm2389, %v2346
      %2393 = vst.msk [vmem:[#allocation5 + $0x18] sm:$0xff] %vm2389, %v2348
      %2394 = vst.msk [vmem:[#allocation5 + $0x20] sm:$0xff] %vm2389, %v2350
      %2395 = vst.msk [vmem:[#allocation5 + $0x28] sm:$0xff] %vm2389, %v2352
      %2396 = vst.msk [vmem:[#allocation5 + $0x30] sm:$0xff] %vm2389, %v2354
      %2397 = vst.msk [vmem:[#allocation5 + $0x38] sm:$0xff] %vm2389, %v2356
      %2398 = vst.msk [vmem:[#allocation5 + $0x40] sm:$0xff] %vm2389, %v2358
      %2399 = vst.msk [vmem:[#allocation5 + $0x48] sm:$0xff] %vm2389, %v2360
      %2400 = vst.msk [vmem:[#allocation5 + $0x50] sm:$0xff] %vm2389, %v2362
      %2401 = vst.msk [vmem:[#allocation5 + $0x58] sm:$0xff] %vm2389, %v2364
      %2402 = vst.msk [vmem:[#allocation5 + $0x60] sm:$0xff] %vm2389, %v2366
      %2403 = vst.msk [vmem:[#allocation5 + $0x68] sm:$0xff] %vm2389, %v2368
      %2404 = vst.msk [vmem:[#allocation5 + $0x70] sm:$0xff] %vm2389, %v2370
      %2405 = vst.msk [vmem:[#allocation5 + $0x78] sm:$0xff] %vm2389, %v2372
      %v2406 = vld [vmem:[%s278 + $0x2] sm:$0xff]
      %v2407 = vld [vmem:[%s278 + $0xa] sm:$0xff]
      %v2408 = vld [vmem:[%s278 + $0x1a] sm:$0xff]
      %v2409 = vld [vmem:[%s278 + $0x22] sm:$0xff]
      %v2410 = vld [vmem:[%s278 + $0x32] sm:$0xff]
      %v2411 = vld [vmem:[%s278 + $0x3a] sm:$0xff]
      %v2412 = vld [vmem:[%s278 + $0x4a] sm:$0xff]
      %v2413 = vld [vmem:[%s278 + $0x52] sm:$0xff]
      %v2414 = vld [vmem:[%s278 + $0x62] sm:$0xff]
      %v2415 = vld [vmem:[%s278 + $0x6a] sm:$0xff]
      %v2416 = vld [vmem:[%s278 + $0x7a] sm:$0xff]
      %v2417 = vld [vmem:[%s278 + $0x82] sm:$0xff]
      %v2418 = vld [vmem:[%s278 + $0x92] sm:$0xff]
      %v2419 = vld [vmem:[%s278 + $0x9a] sm:$0xff]
      %v2420 = vld [vmem:[%s278 + $0xaa] sm:$0xff]
      %v2421 = vld [vmem:[%s278 + $0xb2] sm:$0xff]
      %v2422 = vld [vmem:[%s278 + $0xc2] sm:$0xff]
      %v2423 = vld [vmem:[%s278 + $0xca] sm:$0xff]
      %v2424 = vld [vmem:[%s278 + $0xda] sm:$0xff]
      %v2425 = vld [vmem:[%s278 + $0xe2] sm:$0xff]
      %v2426 = vld [vmem:[%s278 + $0xf2] sm:$0xff]
      %v2427 = vld [vmem:[%s278 + $0xfa] sm:$0xff]
      %v2428 = vld [vmem:[%s278 + $0x10a] sm:$0xff]
      %v2429 = vld [vmem:[%s278 + $0x112] sm:$0xff]
      %v2430 = vld [vmem:[%s278 + $0x122] sm:$0xff]
      %v2431 = vld [vmem:[%s278 + $0x12a] sm:$0xff]
      %v2432 = vld [vmem:[%s278 + $0x13a] sm:$0xff]
      %v2433 = vld [vmem:[%s278 + $0x142] sm:$0xff]
      %v2434 = vld [vmem:[%s278 + $0x152] sm:$0xff]
      %v2435 = vld [vmem:[%s278 + $0x15a] sm:$0xff]
      %v2436 = vld [vmem:[%s278 + $0x16a] sm:$0xff]
      %v2437 = vld [vmem:[%s278 + $0x172] sm:$0xff]
      %v2438 = vpack.c.bf16 %v2407, %v2406
      %v2439 = vpack.c.bf16 %v2409, %v2408
      %v2440 = vpack.c.bf16 %v2411, %v2410
      %v2441 = vpack.c.bf16 %v2413, %v2412
      %v2442 = vpack.c.bf16 %v2415, %v2414
      %v2443 = vpack.c.bf16 %v2417, %v2416
      %v2444 = vpack.c.bf16 %v2419, %v2418
      %v2445 = vpack.c.bf16 %v2421, %v2420
      %v2446 = vpack.c.bf16 %v2423, %v2422
      %v2447 = vpack.c.bf16 %v2425, %v2424
      %v2448 = vpack.c.bf16 %v2427, %v2426
      %v2449 = vpack.c.bf16 %v2429, %v2428
      %v2450 = vpack.c.bf16 %v2431, %v2430
      %v2451 = vpack.c.bf16 %v2433, %v2432
      %v2452 = vpack.c.bf16 %v2435, %v2434
      %v2453 = vpack.c.bf16 %v2437, %v2436
      %2470 = vrot.lane.b32.xlu0 %v2438, 40
      %v2471 = vpop.permute.xlu0 %2470
      %2472 = vrot.lane.b32.xlu0 %v2439, 40
      %v2473 = vpop.permute.xlu0 %2472
      %2474 = vrot.lane.b32.xlu0 %v2440, 40
      %v2475 = vpop.permute.xlu0 %2474
      %2476 = vrot.lane.b32.xlu0 %v2441, 40
      %v2477 = vpop.permute.xlu0 %2476
      %2478 = vrot.lane.b32.xlu0 %v2442, 40
      %v2479 = vpop.permute.xlu0 %2478
      %2480 = vrot.lane.b32.xlu0 %v2443, 40
      %v2481 = vpop.permute.xlu0 %2480
      %2482 = vrot.lane.b32.xlu0 %v2444, 40
      %v2483 = vpop.permute.xlu0 %2482
      %2484 = vrot.lane.b32.xlu0 %v2445, 40
      %v2485 = vpop.permute.xlu0 %2484
      %2486 = vrot.lane.b32.xlu0 %v2446, 40
      %v2487 = vpop.permute.xlu0 %2486
      %2488 = vrot.lane.b32.xlu0 %v2447, 40
      %v2489 = vpop.permute.xlu0 %2488
      %2490 = vrot.lane.b32.xlu0 %v2448, 40
      %v2491 = vpop.permute.xlu0 %2490
      %2492 = vrot.lane.b32.xlu0 %v2449, 40
      %v2493 = vpop.permute.xlu0 %2492
      %2494 = vrot.lane.b32.xlu0 %v2450, 40
      %v2495 = vpop.permute.xlu0 %2494
      %2496 = vrot.lane.b32.xlu0 %v2451, 40
      %v2497 = vpop.permute.xlu0 %2496
      %2498 = vrot.lane.b32.xlu0 %v2452, 40
      %v2499 = vpop.permute.xlu0 %2498
      %2500 = vrot.lane.b32.xlu0 %v2453, 40
      %v2501 = vpop.permute.xlu0 %2500
      %vm2518 = vcmask 392512
      %2519 = vst.msk [vmem:[#allocation5] sm:$0xff] %vm2518, %v2471
      %2520 = vst.msk [vmem:[#allocation5 + $0x8] sm:$0xff] %vm2518, %v2473
      %2521 = vst.msk [vmem:[#allocation5 + $0x10] sm:$0xff] %vm2518, %v2475
      %2522 = vst.msk [vmem:[#allocation5 + $0x18] sm:$0xff] %vm2518, %v2477
      %2523 = vst.msk [vmem:[#allocation5 + $0x20] sm:$0xff] %vm2518, %v2479
      %2524 = vst.msk [vmem:[#allocation5 + $0x28] sm:$0xff] %vm2518, %v2481
      %2525 = vst.msk [vmem:[#allocation5 + $0x30] sm:$0xff] %vm2518, %v2483
      %2526 = vst.msk [vmem:[#allocation5 + $0x38] sm:$0xff] %vm2518, %v2485
      %2527 = vst.msk [vmem:[#allocation5 + $0x40] sm:$0xff] %vm2518, %v2487
      %2528 = vst.msk [vmem:[#allocation5 + $0x48] sm:$0xff] %vm2518, %v2489
      %2529 = vst.msk [vmem:[#allocation5 + $0x50] sm:$0xff] %vm2518, %v2491
      %2530 = vst.msk [vmem:[#allocation5 + $0x58] sm:$0xff] %vm2518, %v2493
      %2531 = vst.msk [vmem:[#allocation5 + $0x60] sm:$0xff] %vm2518, %v2495
      %2532 = vst.msk [vmem:[#allocation5 + $0x68] sm:$0xff] %vm2518, %v2497
      %2533 = vst.msk [vmem:[#allocation5 + $0x70] sm:$0xff] %vm2518, %v2499
      %2534 = vst.msk [vmem:[#allocation5 + $0x78] sm:$0xff] %vm2518, %v2501
      %s2535 = scalar_lea.vmem [#allocation3], 48
      %v2536 = vld [vmem:[%s2535] sm:$0xff]
      %v2537 = vld [vmem:[%s2535 + $0x8] sm:$0xff]
      %v2538 = vld [vmem:[%s2535 + $0x18] sm:$0xff]
      %v2539 = vld [vmem:[%s2535 + $0x20] sm:$0xff]
      %v2540 = vld [vmem:[%s2535 + $0x30] sm:$0xff]
      %v2541 = vld [vmem:[%s2535 + $0x38] sm:$0xff]
      %v2542 = vld [vmem:[%s2535 + $0x48] sm:$0xff]
      %v2543 = vld [vmem:[%s2535 + $0x50] sm:$0xff]
      %v2544 = vld [vmem:[%s2535 + $0x60] sm:$0xff]
      %v2545 = vld [vmem:[%s2535 + $0x68] sm:$0xff]
      %v2546 = vld [vmem:[%s2535 + $0x78] sm:$0xff]
      %v2547 = vld [vmem:[%s2535 + $0x80] sm:$0xff]
      %v2548 = vld [vmem:[%s2535 + $0x90] sm:$0xff]
      %v2549 = vld [vmem:[%s2535 + $0x98] sm:$0xff]
      %v2550 = vld [vmem:[%s2535 + $0xa8] sm:$0xff]
      %v2551 = vld [vmem:[%s2535 + $0xb0] sm:$0xff]
      %v2552 = vld [vmem:[%s2535 + $0xc0] sm:$0xff]
      %v2553 = vld [vmem:[%s2535 + $0xc8] sm:$0xff]
      %v2554 = vld [vmem:[%s2535 + $0xd8] sm:$0xff]
      %v2555 = vld [vmem:[%s2535 + $0xe0] sm:$0xff]
      %v2556 = vld [vmem:[%s2535 + $0xf0] sm:$0xff]
      %v2557 = vld [vmem:[%s2535 + $0xf8] sm:$0xff]
      %v2558 = vld [vmem:[%s2535 + $0x108] sm:$0xff]
      %v2559 = vld [vmem:[%s2535 + $0x110] sm:$0xff]
      %v2560 = vld [vmem:[%s2535 + $0x120] sm:$0xff]
      %v2561 = vld [vmem:[%s2535 + $0x128] sm:$0xff]
      %v2562 = vld [vmem:[%s2535 + $0x138] sm:$0xff]
      %v2563 = vld [vmem:[%s2535 + $0x140] sm:$0xff]
      %v2564 = vld [vmem:[%s2535 + $0x150] sm:$0xff]
      %v2565 = vld [vmem:[%s2535 + $0x158] sm:$0xff]
      %v2566 = vld [vmem:[%s2535 + $0x168] sm:$0xff]
      %v2567 = vld [vmem:[%s2535 + $0x170] sm:$0xff]
      %v2568 = vpack.c.bf16 %v2537, %v2536
      %v2569 = vpack.c.bf16 %v2539, %v2538
      %v2570 = vpack.c.bf16 %v2541, %v2540
      %v2571 = vpack.c.bf16 %v2543, %v2542
      %v2572 = vpack.c.bf16 %v2545, %v2544
      %v2573 = vpack.c.bf16 %v2547, %v2546
      %v2574 = vpack.c.bf16 %v2549, %v2548
      %v2575 = vpack.c.bf16 %v2551, %v2550
      %v2576 = vpack.c.bf16 %v2553, %v2552
      %v2577 = vpack.c.bf16 %v2555, %v2554
      %v2578 = vpack.c.bf16 %v2557, %v2556
      %v2579 = vpack.c.bf16 %v2559, %v2558
      %v2580 = vpack.c.bf16 %v2561, %v2560
      %v2581 = vpack.c.bf16 %v2563, %v2562
      %v2582 = vpack.c.bf16 %v2565, %v2564
      %v2583 = vpack.c.bf16 %v2567, %v2566
      %2600 = vrot.lane.b32.xlu0 %v2568, 48
      %v2601 = vpop.permute.xlu0 %2600
      %2602 = vrot.lane.b32.xlu0 %v2569, 48
      %v2603 = vpop.permute.xlu0 %2602
      %2604 = vrot.lane.b32.xlu0 %v2570, 48
      %v2605 = vpop.permute.xlu0 %2604
      %2606 = vrot.lane.b32.xlu0 %v2571, 48
      %v2607 = vpop.permute.xlu0 %2606
      %2608 = vrot.lane.b32.xlu0 %v2572, 48
      %v2609 = vpop.permute.xlu0 %2608
      %2610 = vrot.lane.b32.xlu0 %v2573, 48
      %v2611 = vpop.permute.xlu0 %2610
      %2612 = vrot.lane.b32.xlu0 %v2574, 48
      %v2613 = vpop.permute.xlu0 %2612
      %2614 = vrot.lane.b32.xlu0 %v2575, 48
      %v2615 = vpop.permute.xlu0 %2614
      %2616 = vrot.lane.b32.xlu0 %v2576, 48
      %v2617 = vpop.permute.xlu0 %2616
      %2618 = vrot.lane.b32.xlu0 %v2577, 48
      %v2619 = vpop.permute.xlu0 %2618
      %2620 = vrot.lane.b32.xlu0 %v2578, 48
      %v2621 = vpop.permute.xlu0 %2620
      %2622 = vrot.lane.b32.xlu0 %v2579, 48
      %v2623 = vpop.permute.xlu0 %2622
      %2624 = vrot.lane.b32.xlu0 %v2580, 48
      %v2625 = vpop.permute.xlu0 %2624
      %2626 = vrot.lane.b32.xlu0 %v2581, 48
      %v2627 = vpop.permute.xlu0 %2626
      %2628 = vrot.lane.b32.xlu0 %v2582, 48
      %v2629 = vpop.permute.xlu0 %2628
      %2630 = vrot.lane.b32.xlu0 %v2583, 48
      %v2631 = vpop.permute.xlu0 %2630
      %vm2648 = vcmask 458112
      %2649 = vst.msk [vmem:[#allocation5] sm:$0xff] %vm2648, %v2601
      %2650 = vst.msk [vmem:[#allocation5 + $0x8] sm:$0xff] %vm2648, %v2603
      %2651 = vst.msk [vmem:[#allocation5 + $0x10] sm:$0xff] %vm2648, %v2605
      %2652 = vst.msk [vmem:[#allocation5 + $0x18] sm:$0xff] %vm2648, %v2607
      %2653 = vst.msk [vmem:[#allocation5 + $0x20] sm:$0xff] %vm2648, %v2609
      %2654 = vst.msk [vmem:[#allocation5 + $0x28] sm:$0xff] %vm2648, %v2611
      %2655 = vst.msk [vmem:[#allocation5 + $0x30] sm:$0xff] %vm2648, %v2613
      %2656 = vst.msk [vmem:[#allocation5 + $0x38] sm:$0xff] %vm2648, %v2615
      %2657 = vst.msk [vmem:[#allocation5 + $0x40] sm:$0xff] %vm2648, %v2617
      %2658 = vst.msk [vmem:[#allocation5 + $0x48] sm:$0xff] %vm2648, %v2619
      %2659 = vst.msk [vmem:[#allocation5 + $0x50] sm:$0xff] %vm2648, %v2621
      %2660 = vst.msk [vmem:[#allocation5 + $0x58] sm:$0xff] %vm2648, %v2623
      %2661 = vst.msk [vmem:[#allocation5 + $0x60] sm:$0xff] %vm2648, %v2625
      %2662 = vst.msk [vmem:[#allocation5 + $0x68] sm:$0xff] %vm2648, %v2627
      %2663 = vst.msk [vmem:[#allocation5 + $0x70] sm:$0xff] %vm2648, %v2629
      %2664 = vst.msk [vmem:[#allocation5 + $0x78] sm:$0xff] %vm2648, %v2631
      %v2665 = vld [vmem:[%s2535 + $0x1] sm:$0xff]
      %v2666 = vld [vmem:[%s2535 + $0x9] sm:$0xff]
      %v2667 = vld [vmem:[%s2535 + $0x19] sm:$0xff]
      %v2668 = vld [vmem:[%s2535 + $0x21] sm:$0xff]
      %v2669 = vld [vmem:[%s2535 + $0x31] sm:$0xff]
      %v2670 = vld [vmem:[%s2535 + $0x39] sm:$0xff]
      %v2671 = vld [vmem:[%s2535 + $0x49] sm:$0xff]
      %v2672 = vld [vmem:[%s2535 + $0x51] sm:$0xff]
      %v2673 = vld [vmem:[%s2535 + $0x61] sm:$0xff]
      %v2674 = vld [vmem:[%s2535 + $0x69] sm:$0xff]
      %v2675 = vld [vmem:[%s2535 + $0x79] sm:$0xff]
      %v2676 = vld [vmem:[%s2535 + $0x81] sm:$0xff]
      %v2677 = vld [vmem:[%s2535 + $0x91] sm:$0xff]
      %v2678 = vld [vmem:[%s2535 + $0x99] sm:$0xff]
      %v2679 = vld [vmem:[%s2535 + $0xa9] sm:$0xff]
      %v2680 = vld [vmem:[%s2535 + $0xb1] sm:$0xff]
      %v2681 = vld [vmem:[%s2535 + $0xc1] sm:$0xff]
      %v2682 = vld [vmem:[%s2535 + $0xc9] sm:$0xff]
      %v2683 = vld [vmem:[%s2535 + $0xd9] sm:$0xff]
      %v2684 = vld [vmem:[%s2535 + $0xe1] sm:$0xff]
      %v2685 = vld [vmem:[%s2535 + $0xf1] sm:$0xff]
      %v2686 = vld [vmem:[%s2535 + $0xf9] sm:$0xff]
      %v2687 = vld [vmem:[%s2535 + $0x109] sm:$0xff]
      %v2688 = vld [vmem:[%s2535 + $0x111] sm:$0xff]
      %v2689 = vld [vmem:[%s2535 + $0x121] sm:$0xff]
      %v2690 = vld [vmem:[%s2535 + $0x129] sm:$0xff]
      %v2691 = vld [vmem:[%s2535 + $0x139] sm:$0xff]
      %v2692 = vld [vmem:[%s2535 + $0x141] sm:$0xff]
      %v2693 = vld [vmem:[%s2535 + $0x151] sm:$0xff]
      %v2694 = vld [vmem:[%s2535 + $0x159] sm:$0xff]
      %v2695 = vld [vmem:[%s2535 + $0x169] sm:$0xff]
      %v2696 = vld [vmem:[%s2535 + $0x171] sm:$0xff]
      %v2697 = vpack.c.bf16 %v2666, %v2665
      %v2698 = vpack.c.bf16 %v2668, %v2667
      %v2699 = vpack.c.bf16 %v2670, %v2669
      %v2700 = vpack.c.bf16 %v2672, %v2671
      %v2701 = vpack.c.bf16 %v2674, %v2673
      %v2702 = vpack.c.bf16 %v2676, %v2675
      %v2703 = vpack.c.bf16 %v2678, %v2677
      %v2704 = vpack.c.bf16 %v2680, %v2679
      %v2705 = vpack.c.bf16 %v2682, %v2681
      %v2706 = vpack.c.bf16 %v2684, %v2683
      %v2707 = vpack.c.bf16 %v2686, %v2685
      %v2708 = vpack.c.bf16 %v2688, %v2687
      %v2709 = vpack.c.bf16 %v2690, %v2689
      %v2710 = vpack.c.bf16 %v2692, %v2691
      %v2711 = vpack.c.bf16 %v2694, %v2693
      %v2712 = vpack.c.bf16 %v2696, %v2695
      %2729 = vrot.lane.b32.xlu0 %v2697, 56
      %v2730 = vpop.permute.xlu0 %2729
      %2731 = vrot.lane.b32.xlu0 %v2698, 56
      %v2732 = vpop.permute.xlu0 %2731
      %2733 = vrot.lane.b32.xlu0 %v2699, 56
      %v2734 = vpop.permute.xlu0 %2733
      %2735 = vrot.lane.b32.xlu0 %v2700, 56
      %v2736 = vpop.permute.xlu0 %2735
      %2737 = vrot.lane.b32.xlu0 %v2701, 56
      %v2738 = vpop.permute.xlu0 %2737
      %2739 = vrot.lane.b32.xlu0 %v2702, 56
      %v2740 = vpop.permute.xlu0 %2739
      %2741 = vrot.lane.b32.xlu0 %v2703, 56
      %v2742 = vpop.permute.xlu0 %2741
      %2743 = vrot.lane.b32.xlu0 %v2704, 56
      %v2744 = vpop.permute.xlu0 %2743
      %2745 = vrot.lane.b32.xlu0 %v2705, 56
      %v2746 = vpop.permute.xlu0 %2745
      %2747 = vrot.lane.b32.xlu0 %v2706, 56
      %v2748 = vpop.permute.xlu0 %2747
      %2749 = vrot.lane.b32.xlu0 %v2707, 56
      %v2750 = vpop.permute.xlu0 %2749
      %2751 = vrot.lane.b32.xlu0 %v2708, 56
      %v2752 = vpop.permute.xlu0 %2751
      %2753 = vrot.lane.b32.xlu0 %v2709, 56
      %v2754 = vpop.permute.xlu0 %2753
      %2755 = vrot.lane.b32.xlu0 %v2710, 56
      %v2756 = vpop.permute.xlu0 %2755
      %2757 = vrot.lane.b32.xlu0 %v2711, 56
      %v2758 = vpop.permute.xlu0 %2757
      %2759 = vrot.lane.b32.xlu0 %v2712, 56
      %v2760 = vpop.permute.xlu0 %2759
      %vm2777 = vcmask 523712
      %2778 = vst.msk [vmem:[#allocation5] sm:$0xff] %vm2777, %v2730
      %2779 = vst.msk [vmem:[#allocation5 + $0x8] sm:$0xff] %vm2777, %v2732
      %2780 = vst.msk [vmem:[#allocation5 + $0x10] sm:$0xff] %vm2777, %v2734
      %2781 = vst.msk [vmem:[#allocation5 + $0x18] sm:$0xff] %vm2777, %v2736
      %2782 = vst.msk [vmem:[#allocation5 + $0x20] sm:$0xff] %vm2777, %v2738
      %2783 = vst.msk [vmem:[#allocation5 + $0x28] sm:$0xff] %vm2777, %v2740
      %2784 = vst.msk [vmem:[#allocation5 + $0x30] sm:$0xff] %vm2777, %v2742
      %2785 = vst.msk [vmem:[#allocation5 + $0x38] sm:$0xff] %vm2777, %v2744
      %2786 = vst.msk [vmem:[#allocation5 + $0x40] sm:$0xff] %vm2777, %v2746
      %2787 = vst.msk [vmem:[#allocation5 + $0x48] sm:$0xff] %vm2777, %v2748
      %2788 = vst.msk [vmem:[#allocation5 + $0x50] sm:$0xff] %vm2777, %v2750
      %2789 = vst.msk [vmem:[#allocation5 + $0x58] sm:$0xff] %vm2777, %v2752
      %2790 = vst.msk [vmem:[#allocation5 + $0x60] sm:$0xff] %vm2777, %v2754
      %2791 = vst.msk [vmem:[#allocation5 + $0x68] sm:$0xff] %vm2777, %v2756
      %2792 = vst.msk [vmem:[#allocation5 + $0x70] sm:$0xff] %vm2777, %v2758
      %2793 = vst.msk [vmem:[#allocation5 + $0x78] sm:$0xff] %vm2777, %v2760
      %v2794 = vld [vmem:[%s2535 + $0x2] sm:$0xff]
      %v2795 = vld [vmem:[%s2535 + $0xa] sm:$0xff]
      %v2796 = vld [vmem:[%s2535 + $0x1a] sm:$0xff]
      %v2797 = vld [vmem:[%s2535 + $0x22] sm:$0xff]
      %v2798 = vld [vmem:[%s2535 + $0x32] sm:$0xff]
      %v2799 = vld [vmem:[%s2535 + $0x3a] sm:$0xff]
      %v2800 = vld [vmem:[%s2535 + $0x4a] sm:$0xff]
      %v2801 = vld [vmem:[%s2535 + $0x52] sm:$0xff]
      %v2802 = vld [vmem:[%s2535 + $0x62] sm:$0xff]
      %v2803 = vld [vmem:[%s2535 + $0x6a] sm:$0xff]
      %v2804 = vld [vmem:[%s2535 + $0x7a] sm:$0xff]
      %v2805 = vld [vmem:[%s2535 + $0x82] sm:$0xff]
      %v2806 = vld [vmem:[%s2535 + $0x92] sm:$0xff]
      %v2807 = vld [vmem:[%s2535 + $0x9a] sm:$0xff]
      %v2808 = vld [vmem:[%s2535 + $0xaa] sm:$0xff]
      %v2809 = vld [vmem:[%s2535 + $0xb2] sm:$0xff]
      %v2810 = vld [vmem:[%s2535 + $0xc2] sm:$0xff]
      %v2811 = vld [vmem:[%s2535 + $0xca] sm:$0xff]
      %v2812 = vld [vmem:[%s2535 + $0xda] sm:$0xff]
      %v2813 = vld [vmem:[%s2535 + $0xe2] sm:$0xff]
      %v2814 = vld [vmem:[%s2535 + $0xf2] sm:$0xff]
      %v2815 = vld [vmem:[%s2535 + $0xfa] sm:$0xff]
      %v2816 = vld [vmem:[%s2535 + $0x10a] sm:$0xff]
      %v2817 = vld [vmem:[%s2535 + $0x112] sm:$0xff]
      %v2818 = vld [vmem:[%s2535 + $0x122] sm:$0xff]
      %v2819 = vld [vmem:[%s2535 + $0x12a] sm:$0xff]
      %v2820 = vld [vmem:[%s2535 + $0x13a] sm:$0xff]
      %v2821 = vld [vmem:[%s2535 + $0x142] sm:$0xff]
      %v2822 = vld [vmem:[%s2535 + $0x152] sm:$0xff]
      %v2823 = vld [vmem:[%s2535 + $0x15a] sm:$0xff]
      %v2824 = vld [vmem:[%s2535 + $0x16a] sm:$0xff]
      %v2825 = vld [vmem:[%s2535 + $0x172] sm:$0xff]
      %v2826 = vpack.c.bf16 %v2795, %v2794
      %v2827 = vpack.c.bf16 %v2797, %v2796
      %v2828 = vpack.c.bf16 %v2799, %v2798
      %v2829 = vpack.c.bf16 %v2801, %v2800
      %v2830 = vpack.c.bf16 %v2803, %v2802
      %v2831 = vpack.c.bf16 %v2805, %v2804
      %v2832 = vpack.c.bf16 %v2807, %v2806
      %v2833 = vpack.c.bf16 %v2809, %v2808
      %v2834 = vpack.c.bf16 %v2811, %v2810
      %v2835 = vpack.c.bf16 %v2813, %v2812
      %v2836 = vpack.c.bf16 %v2815, %v2814
      %v2837 = vpack.c.bf16 %v2817, %v2816
      %v2838 = vpack.c.bf16 %v2819, %v2818
      %v2839 = vpack.c.bf16 %v2821, %v2820
      %v2840 = vpack.c.bf16 %v2823, %v2822
      %v2841 = vpack.c.bf16 %v2825, %v2824
      %2858 = vrot.lane.b32.xlu0 %v2826, 64
      %v2859 = vpop.permute.xlu0 %2858
      %2860 = vrot.lane.b32.xlu0 %v2827, 64
      %v2861 = vpop.permute.xlu0 %2860
      %2862 = vrot.lane.b32.xlu0 %v2828, 64
      %v2863 = vpop.permute.xlu0 %2862
      %2864 = vrot.lane.b32.xlu0 %v2829, 64
      %v2865 = vpop.permute.xlu0 %2864
      %2866 = vrot.lane.b32.xlu0 %v2830, 64
      %v2867 = vpop.permute.xlu0 %2866
      %2868 = vrot.lane.b32.xlu0 %v2831, 64
      %v2869 = vpop.permute.xlu0 %2868
      %2870 = vrot.lane.b32.xlu0 %v2832, 64
      %v2871 = vpop.permute.xlu0 %2870
      %2872 = vrot.lane.b32.xlu0 %v2833, 64
      %v2873 = vpop.permute.xlu0 %2872
      %2874 = vrot.lane.b32.xlu0 %v2834, 64
      %v2875 = vpop.permute.xlu0 %2874
      %2876 = vrot.lane.b32.xlu0 %v2835, 64
      %v2877 = vpop.permute.xlu0 %2876
      %2878 = vrot.lane.b32.xlu0 %v2836, 64
      %v2879 = vpop.permute.xlu0 %2878
      %2880 = vrot.lane.b32.xlu0 %v2837, 64
      %v2881 = vpop.permute.xlu0 %2880
      %2882 = vrot.lane.b32.xlu0 %v2838, 64
      %v2883 = vpop.permute.xlu0 %2882
      %2884 = vrot.lane.b32.xlu0 %v2839, 64
      %v2885 = vpop.permute.xlu0 %2884
      %2886 = vrot.lane.b32.xlu0 %v2840, 64
      %v2887 = vpop.permute.xlu0 %2886
      %2888 = vrot.lane.b32.xlu0 %v2841, 64
      %v2889 = vpop.permute.xlu0 %2888
      %vm2906 = vcmask 589312
      %2907 = vst.msk [vmem:[#allocation5] sm:$0xff] %vm2906, %v2859
      %2908 = vst.msk [vmem:[#allocation5 + $0x8] sm:$0xff] %vm2906, %v2861
      %2909 = vst.msk [vmem:[#allocation5 + $0x10] sm:$0xff] %vm2906, %v2863
      %2910 = vst.msk [vmem:[#allocation5 + $0x18] sm:$0xff] %vm2906, %v2865
      %2911 = vst.msk [vmem:[#allocation5 + $0x20] sm:$0xff] %vm2906, %v2867
      %2912 = vst.msk [vmem:[#allocation5 + $0x28] sm:$0xff] %vm2906, %v2869
      %2913 = vst.msk [vmem:[#allocation5 + $0x30] sm:$0xff] %vm2906, %v2871
      %2914 = vst.msk [vmem:[#allocation5 + $0x38] sm:$0xff] %vm2906, %v2873
      %2915 = vst.msk [vmem:[#allocation5 + $0x40] sm:$0xff] %vm2906, %v2875
      %2916 = vst.msk [vmem:[#allocation5 + $0x48] sm:$0xff] %vm2906, %v2877
      %2917 = vst.msk [vmem:[#allocation5 + $0x50] sm:$0xff] %vm2906, %v2879
      %2918 = vst.msk [vmem:[#allocation5 + $0x58] sm:$0xff] %vm2906, %v2881
      %2919 = vst.msk [vmem:[#allocation5 + $0x60] sm:$0xff] %vm2906, %v2883
      %2920 = vst.msk [vmem:[#allocation5 + $0x68] sm:$0xff] %vm2906, %v2885
      %2921 = vst.msk [vmem:[#allocation5 + $0x70] sm:$0xff] %vm2906, %v2887
      %2922 = vst.msk [vmem:[#allocation5 + $0x78] sm:$0xff] %vm2906, %v2889
      %v2923 = vld [vmem:[#allocation5] sm:$0xff]
      %v2924 = vld [vmem:[#allocation5 + $0x8] sm:$0xff]
      %v2925 = vld [vmem:[#allocation5 + $0x10] sm:$0xff]
      %v2926 = vld [vmem:[#allocation5 + $0x18] sm:$0xff]
      %v2927 = vld [vmem:[#allocation5 + $0x20] sm:$0xff]
      %v2928 = vld [vmem:[#allocation5 + $0x28] sm:$0xff]
      %v2929 = vld [vmem:[#allocation5 + $0x30] sm:$0xff]
      %v2930 = vld [vmem:[#allocation5 + $0x38] sm:$0xff]
      %v2931 = vld [vmem:[#allocation5 + $0x40] sm:$0xff]
      %v2932 = vld [vmem:[#allocation5 + $0x48] sm:$0xff]
      %v2933 = vld [vmem:[#allocation5 + $0x50] sm:$0xff]
      %v2934 = vld [vmem:[#allocation5 + $0x58] sm:$0xff]
      %v2935 = vld [vmem:[#allocation5 + $0x60] sm:$0xff]
      %v2936 = vld [vmem:[#allocation5 + $0x68] sm:$0xff]
      %v2937 = vld [vmem:[#allocation5 + $0x70] sm:$0xff]
      %v2938 = vld [vmem:[#allocation5 + $0x78] sm:$0xff]
      %v2939 = vld [vmem:[%s3] sm:$0xf]
      %v2940 = vld [vmem:[%s3 + $0x4] sm:$0xf]
      %v2941 = vld [vmem:[%s3 + $0x8] sm:$0xf]
      %v2942 = vld [vmem:[%s3 + $0xc] sm:$0xf]
      %v2943 = vld [vmem:[%s3 + $0x10] sm:$0xf]
      %v2944 = vld [vmem:[%s3 + $0x14] sm:$0xf]
      %v2945 = vld [vmem:[%s3 + $0x18] sm:$0xf]
      %v2946 = vld [vmem:[%s3 + $0x1c] sm:$0xf]
      %v2947 = vld [vmem:[%s3 + $0x20] sm:$0xf]
      %v2948 = vld [vmem:[%s4] sm:$0x1]
      %v2950 = vlaneseq
      %v2951 = vshrl.u32 %v2950, 7
      %v2952 = vsub.s32 0, %v2951
      %v2953 = vrot.slane %v2948, %v2952
      %v2964 = vunpack.c.l.b16 %v2939
      %v2965 = vunpack.c.l.b16 %v2940
      %v2966 = vunpack.c.l.b16 %v2941
      %v2967 = vunpack.c.l.b16 %v2942
      %v2968 = vunpack.c.l.b16 %v2943
      %v2969 = vunpack.c.l.b16 %v2944
      %v2970 = vunpack.c.l.b16 %v2945
      %v2971 = vunpack.c.l.b16 %v2946
      %v2972 = vunpack.c.l.b16 %v2947
      %v2973 = vpack.c.b16 %v2965, %v2964
      %v2974 = vpack.c.b16 %v2967, %v2966
      %v2975 = vpack.c.b16 %v2969, %v2968
      %v2976 = vpack.c.b16 %v2971, %v2970
      %v2977 = vpack.c.b16 %v2972, %v2972
      %vm2982 = vcmask 588800
      %v2984 = vsel %vm2982, %v2923, 0
      %v2987 = vsel %vm2982, %v2924, 0
      %v2990 = vsel %vm2982, %v2925, 0
      %v2993 = vsel %vm2982, %v2926, 0
      %v2996 = vsel %vm2982, %v2927, 0
      %v2999 = vsel %vm2982, %v2928, 0
      %v3002 = vsel %vm2982, %v2929, 0
      %v3005 = vsel %vm2982, %v2930, 0
      %v3008 = vsel %vm2982, %v2931, 0
      %v3011 = vsel %vm2982, %v2932, 0
      %v3014 = vsel %vm2982, %v2933, 0
      %v3017 = vsel %vm2982, %v2934, 0
      %v3020 = vsel %vm2982, %v2935, 0
      %v3023 = vsel %vm2982, %v2936, 0
      %v3026 = vsel %vm2982, %v2937, 0
      %v3029 = vsel %vm2982, %v2938, 0
      %vm3031 = vcmask 1043456
      %v3033 = vsel %vm3031, %v2977, 0
      %3035 = vmatprep.subr.bf16.mxu0 0
      %3036 = vmatpush1.bf16.msra.mxu0 %v2973
      %3037 = vmatprep.subr.bf16.mxu0 0
      %3038 = vmatpush1.bf16.msra.mxu0 %v2974
      %3039 = vmatprep.subr.bf16.mxu0 0
      %3040 = vmatpush1.bf16.msra.mxu0 %v2975
      %3041 = vmatprep.subr.bf16.mxu0 0
      %3042 = vmatpush1.bf16.msra.mxu0 %v2976
      %3043 = vmatprep.subr.bf16.mxu0 0
      %3044 = vmatpush1.bf16.msra.mxu0 %v3033
      %3045 = vmatprep.subr.bf16.mxu0 0
      %3046 = vmatpush1.bf16.msra.mxu0 0
      %3047 = vmatprep.subr.bf16.mxu0 0
      %3048 = vmatpush1.bf16.msra.mxu0 0
      %3049 = vmatprep.subr.bf16.mxu0 0
      %3050 = vmatpush1.bf16.msra.mxu0 0
      %3051 = vmatprep.subr.bf16.mxu0 0
      %3052 = vmatpush1.bf16.msra.mxu0 0
      %3053 = vmatprep.subr.bf16.mxu0 0
      %3054 = vmatpush1.bf16.msra.mxu0 0
      %3055 = vmatprep.subr.bf16.mxu0 0
      %3056 = vmatpush1.bf16.msra.mxu0 0
      %3057 = vmatprep.subr.bf16.mxu0 0
      %3058 = vmatpush1.bf16.msra.mxu0 0
      %3059 = vmatprep.subr.bf16.mxu0 0
      %3060 = vmatpush1.bf16.msra.mxu0 0
      %3061 = vmatprep.subr.bf16.mxu0 0
      %3062 = vmatpush1.bf16.msra.mxu0 0
      %3063 = vmatprep.subr.bf16.mxu0 0
      %3064 = vmatpush1.bf16.msra.mxu0 0
      %3065 = vmatprep.subr.bf16.mxu0 0
      %3066 = vmatpush1.bf16.msra.mxu0 0
      %3067 = vmatprep.mubr.bf16.mxu0 0
      %3068 = vmatmul.mubr.bf16.gmra.mrb[0].mxu0 %v2984
      %v3069 = vpop.f32.mrb[0].mxu0
      %v3070 = vadd.f32 %v2953, %v3069
      %v3071 = vpop.f32.mrb[0].mxu0
      %v3072 = vpop.f32.mrb[0].mxu0
      %v3073 = vadd.f32 %v2953, %v3072
      %v3074 = vpop.f32.mrb[0].mxu0
      %3075 = vmatprep.mubr.bf16.mxu0 0
      %3076 = vmatmul.mubr.bf16.gmra.mrb[0].mxu0 %v2987
      %v3077 = vpop.f32.mrb[0].mxu0
      %v3078 = vadd.f32 %v2953, %v3077
      %v3079 = vpop.f32.mrb[0].mxu0
      %v3080 = vpop.f32.mrb[0].mxu0
      %v3081 = vadd.f32 %v2953, %v3080
      %v3082 = vpop.f32.mrb[0].mxu0
      %3083 = vmatprep.mubr.bf16.mxu0 0
      %3084 = vmatmul.mubr.bf16.gmra.mrb[0].mxu0 %v2990
      %v3085 = vpop.f32.mrb[0].mxu0
      %v3086 = vadd.f32 %v2953, %v3085
      %v3087 = vpop.f32.mrb[0].mxu0
      %v3088 = vpop.f32.mrb[0].mxu0
      %v3089 = vadd.f32 %v2953, %v3088
      %v3090 = vpop.f32.mrb[0].mxu0
      %3091 = vmatprep.mubr.bf16.mxu0 0
      %3092 = vmatmul.mubr.bf16.gmra.mrb[0].mxu0 %v2993
      %v3093 = vpop.f32.mrb[0].mxu0
      %v3094 = vadd.f32 %v2953, %v3093
      %v3095 = vpop.f32.mrb[0].mxu0
      %v3096 = vpop.f32.mrb[0].mxu0
      %v3097 = vadd.f32 %v2953, %v3096
      %v3098 = vpop.f32.mrb[0].mxu0
      %3099 = vmatprep.mubr.bf16.mxu0 0
      %3100 = vmatmul.mubr.bf16.gmra.mrb[0].mxu0 %v2996
      %v3101 = vpop.f32.mrb[0].mxu0
      %v3102 = vadd.f32 %v2953, %v3101
      %v3103 = vpop.f32.mrb[0].mxu0
      %v3104 = vpop.f32.mrb[0].mxu0
      %v3105 = vadd.f32 %v2953, %v3104
      %v3106 = vpop.f32.mrb[0].mxu0
      %3107 = vmatprep.mubr.bf16.mxu0 0
      %3108 = vmatmul.mubr.bf16.gmra.mrb[0].mxu0 %v2999
      %v3109 = vpop.f32.mrb[0].mxu0
      %v3110 = vadd.f32 %v2953, %v3109
      %v3111 = vpop.f32.mrb[0].mxu0
      %v3112 = vpop.f32.mrb[0].mxu0
      %v3113 = vadd.f32 %v2953, %v3112
      %v3114 = vpop.f32.mrb[0].mxu0
      %3115 = vmatprep.mubr.bf16.mxu0 0
      %3116 = vmatmul.mubr.bf16.gmra.mrb[0].mxu0 %v3002
      %v3117 = vpop.f32.mrb[0].mxu0
      %v3118 = vadd.f32 %v2953, %v3117
      %v3119 = vpop.f32.mrb[0].mxu0
      %v3120 = vpop.f32.mrb[0].mxu0
      %v3121 = vadd.f32 %v2953, %v3120
      %v3122 = vpop.f32.mrb[0].mxu0
      %3123 = vmatprep.mubr.bf16.mxu0 0
      %3124 = vmatmul.mubr.bf16.gmra.mrb[0].mxu0 %v3005
      %v3125 = vpop.f32.mrb[0].mxu0
      %v3126 = vadd.f32 %v2953, %v3125
      %v3127 = vpop.f32.mrb[0].mxu0
      %v3128 = vpop.f32.mrb[0].mxu0
      %v3129 = vadd.f32 %v2953, %v3128
      %v3130 = vpop.f32.mrb[0].mxu0
      %3131 = vmatprep.mubr.bf16.mxu0 0
      %3132 = vmatmul.mubr.bf16.gmra.mrb[0].mxu0 %v3008
      %v3133 = vpop.f32.mrb[0].mxu0
      %v3134 = vadd.f32 %v2953, %v3133
      %v3135 = vpop.f32.mrb[0].mxu0
      %v3136 = vpop.f32.mrb[0].mxu0
      %v3137 = vadd.f32 %v2953, %v3136
      %v3138 = vpop.f32.mrb[0].mxu0
      %3139 = vmatprep.mubr.bf16.mxu0 0
      %3140 = vmatmul.mubr.bf16.gmra.mrb[0].mxu0 %v3011
      %v3141 = vpop.f32.mrb[0].mxu0
      %v3142 = vadd.f32 %v2953, %v3141
      %v3143 = vpop.f32.mrb[0].mxu0
      %v3144 = vpop.f32.mrb[0].mxu0
      %v3145 = vadd.f32 %v2953, %v3144
      %v3146 = vpop.f32.mrb[0].mxu0
      %3147 = vmatprep.mubr.bf16.mxu0 0
      %3148 = vmatmul.mubr.bf16.gmra.mrb[0].mxu0 %v3014
      %v3149 = vpop.f32.mrb[0].mxu0
      %v3150 = vadd.f32 %v2953, %v3149
      %v3151 = vpop.f32.mrb[0].mxu0
      %v3152 = vpop.f32.mrb[0].mxu0
      %v3153 = vadd.f32 %v2953, %v3152
      %v3154 = vpop.f32.mrb[0].mxu0
      %3155 = vmatprep.mubr.bf16.mxu0 0
      %3156 = vmatmul.mubr.bf16.gmra.mrb[0].mxu0 %v3017
      %v3157 = vpop.f32.mrb[0].mxu0
      %v3158 = vadd.f32 %v2953, %v3157
      %v3159 = vpop.f32.mrb[0].mxu0
      %v3160 = vpop.f32.mrb[0].mxu0
      %v3161 = vadd.f32 %v2953, %v3160
      %v3162 = vpop.f32.mrb[0].mxu0
      %3163 = vmatprep.mubr.bf16.mxu0 0
      %3164 = vmatmul.mubr.bf16.gmra.mrb[0].mxu0 %v3020
      %v3165 = vpop.f32.mrb[0].mxu0
      %v3166 = vadd.f32 %v2953, %v3165
      %v3167 = vpop.f32.mrb[0].mxu0
      %v3168 = vpop.f32.mrb[0].mxu0
      %v3169 = vadd.f32 %v2953, %v3168
      %v3170 = vpop.f32.mrb[0].mxu0
      %3171 = vmatprep.mubr.bf16.mxu0 0
      %3172 = vmatmul.mubr.bf16.gmra.mrb[0].mxu0 %v3023
      %v3173 = vpop.f32.mrb[0].mxu0
      %v3174 = vadd.f32 %v2953, %v3173
      %v3175 = vpop.f32.mrb[0].mxu0
      %v3176 = vpop.f32.mrb[0].mxu0
      %v3177 = vadd.f32 %v2953, %v3176
      %v3178 = vpop.f32.mrb[0].mxu0
      %3179 = vmatprep.mubr.bf16.mxu0 0
      %3180 = vmatmul.mubr.bf16.gmra.mrb[0].mxu0 %v3026
      %v3181 = vpop.f32.mrb[0].mxu0
      %v3182 = vadd.f32 %v2953, %v3181
      %v3183 = vpop.f32.mrb[0].mxu0
      %v3184 = vpop.f32.mrb[0].mxu0
      %v3185 = vadd.f32 %v2953, %v3184
      %v3186 = vpop.f32.mrb[0].mxu0
      %3187 = vmatprep.mubr.bf16.mxu0 0
      %3188 = vmatmul.mubr.bf16.gmra.mrb[0].mxu0 %v3029
      %v3189 = vpop.f32.mrb[0].mxu0
      %v3190 = vadd.f32 %v2953, %v3189
      %v3191 = vpop.f32.mrb[0].mxu0
      %v3192 = vpop.f32.mrb[0].mxu0
      %v3193 = vadd.f32 %v2953, %v3192
      %v3194 = vpop.f32.mrb[0].mxu0
      %3195 = vdwg.mxu0
      %v3196 = vmax.f32 %v3070, 0.0
      %v3197 = vmax.f32 %v3073, 0.0
      %v3198 = vmax.f32 %v3078, 0.0
      %v3199 = vmax.f32 %v3081, 0.0
      %v3200 = vmax.f32 %v3086, 0.0
      %v3201 = vmax.f32 %v3089, 0.0
      %v3202 = vmax.f32 %v3094, 0.0
      %v3203 = vmax.f32 %v3097, 0.0
      %v3204 = vmax.f32 %v3102, 0.0
      %v3205 = vmax.f32 %v3105, 0.0
      %v3206 = vmax.f32 %v3110, 0.0
      %v3207 = vmax.f32 %v3113, 0.0
      %v3208 = vmax.f32 %v3118, 0.0
      %v3209 = vmax.f32 %v3121, 0.0
      %v3210 = vmax.f32 %v3126, 0.0
      %v3211 = vmax.f32 %v3129, 0.0
      %v3212 = vmax.f32 %v3134, 0.0
      %v3213 = vmax.f32 %v3137, 0.0
      %v3214 = vmax.f32 %v3142, 0.0
      %v3215 = vmax.f32 %v3145, 0.0
      %v3216 = vmax.f32 %v3150, 0.0
      %v3217 = vmax.f32 %v3153, 0.0
      %v3218 = vmax.f32 %v3158, 0.0
      %v3219 = vmax.f32 %v3161, 0.0
      %v3220 = vmax.f32 %v3166, 0.0
      %v3221 = vmax.f32 %v3169, 0.0
      %v3222 = vmax.f32 %v3174, 0.0
      %v3223 = vmax.f32 %v3177, 0.0
      %v3224 = vmax.f32 %v3182, 0.0
      %v3225 = vmax.f32 %v3185, 0.0
      %v3226 = vmax.f32 %v3190, 0.0
      %v3227 = vmax.f32 %v3193, 0.0
      %v3244 = vrot.slane %v3198, 7
      %vm3245 = vcmask 1041409
      %v3246 = vsel %vm3245, %v3244, %v3196
      %v3247 = vrot.slane %v3200, 6
      %vm3248 = vcmask 1042434
      %v3249 = vsel %vm3248, %v3247, %v3246
      %v3250 = vrot.slane %v3202, 5
      %vm3251 = vcmask 1043459
      %v3252 = vsel %vm3251, %v3250, %v3249
      %v3253 = vrot.slane %v3204, 4
      %vm3254 = vcmask 1044484
      %v3255 = vsel %vm3254, %v3253, %v3252
      %v3256 = vrot.slane %v3206, 3
      %vm3257 = vcmask 1045509
      %v3258 = vsel %vm3257, %v3256, %v3255
      %v3259 = vrot.slane %v3208, 2
      %vm3260 = vcmask 1046534
      %v3261 = vsel %vm3260, %v3259, %v3258
      %v3262 = vrot.slane %v3210, 1
      %vm3263 = vcmask 1047559
      %v3264 = vsel %vm3263, %v3262, %v3261
      %v3265 = vrot.slane %v3214, 7
      %v3266 = vsel %vm3245, %v3265, %v3212
      %v3267 = vrot.slane %v3216, 6
      %v3268 = vsel %vm3248, %v3267, %v3266
      %v3269 = vrot.slane %v3218, 5
      %v3270 = vsel %vm3251, %v3269, %v3268
      %v3271 = vrot.slane %v3220, 4
      %v3272 = vsel %vm3254, %v3271, %v3270
      %v3273 = vrot.slane %v3222, 3
      %v3274 = vsel %vm3257, %v3273, %v3272
      %v3275 = vrot.slane %v3224, 2
      %v3276 = vsel %vm3260, %v3275, %v3274
      %v3277 = vrot.slane %v3226, 1
      %v3278 = vsel %vm3263, %v3277, %v3276
      %v3281 = vrot.slane %v3196, 1
      %v3282 = vsel %vm3245, %v3198, %v3281
      %v3283 = vrot.slane %v3200, 7
      %v3284 = vsel %vm3248, %v3283, %v3282
      %v3285 = vrot.slane %v3202, 6
      %v3286 = vsel %vm3251, %v3285, %v3284
      %v3287 = vrot.slane %v3204, 5
      %v3288 = vsel %vm3254, %v3287, %v3286
      %v3289 = vrot.slane %v3206, 4
      %v3290 = vsel %vm3257, %v3289, %v3288
      %v3291 = vrot.slane %v3208, 3
      %v3292 = vsel %vm3260, %v3291, %v3290
      %v3293 = vrot.slane %v3210, 2
      %v3294 = vsel %vm3263, %v3293, %v3292
      %v3295 = vrot.slane %v3212, 1
      %v3296 = vsel %vm3245, %v3214, %v3295
      %v3297 = vrot.slane %v3216, 7
      %v3298 = vsel %vm3248, %v3297, %v3296
      %v3299 = vrot.slane %v3218, 6
      %v3300 = vsel %vm3251, %v3299, %v3298
      %v3301 = vrot.slane %v3220, 5
      %v3302 = vsel %vm3254, %v3301, %v3300
      %v3303 = vrot.slane %v3222, 4
      %v3304 = vsel %vm3257, %v3303, %v3302
      %v3305 = vrot.slane %v3224, 3
      %v3306 = vsel %vm3260, %v3305, %v3304
      %v3307 = vrot.slane %v3226, 2
      %v3308 = vsel %vm3263, %v3307, %v3306
      %3309 = vrot.lane.b32.xlu0 %v3294, 8
      %v3310 = vpop.permute.xlu0 %3309
      %3311 = vrot.lane.b32.xlu0 %v3308, 8
      %v3312 = vpop.permute.xlu0 %3311
      %v3315 = vrot.slane %v3196, 2
      %v3316 = vrot.slane %v3198, 1
      %v3317 = vsel %vm3245, %v3316, %v3315
      %v3318 = vsel %vm3248, %v3200, %v3317
      %v3319 = vrot.slane %v3202, 7
      %v3320 = vsel %vm3251, %v3319, %v3318
      %v3321 = vrot.slane %v3204, 6
      %v3322 = vsel %vm3254, %v3321, %v3320
      %v3323 = vrot.slane %v3206, 5
      %v3324 = vsel %vm3257, %v3323, %v3322
      %v3325 = vrot.slane %v3208, 4
      %v3326 = vsel %vm3260, %v3325, %v3324
      %v3327 = vrot.slane %v3210, 3
      %v3328 = vsel %vm3263, %v3327, %v3326
      %v3329 = vrot.slane %v3212, 2
      %v3330 = vrot.slane %v3214, 1
      %v3331 = vsel %vm3245, %v3330, %v3329
      %v3332 = vsel %vm3248, %v3216, %v3331
      %v3333 = vrot.slane %v3218, 7
      %v3334 = vsel %vm3251, %v3333, %v3332
      %v3335 = vrot.slane %v3220, 6
      %v3336 = vsel %vm3254, %v3335, %v3334
      %v3337 = vrot.slane %v3222, 5
      %v3338 = vsel %vm3257, %v3337, %v3336
      %v3339 = vrot.slane %v3224, 4
      %v3340 = vsel %vm3260, %v3339, %v3338
      %v3341 = vrot.slane %v3226, 3
      %v3342 = vsel %vm3263, %v3341, %v3340
      %3343 = vrot.lane.b32.xlu0 %v3328, 16
      %v3344 = vpop.permute.xlu0 %3343
      %3345 = vrot.lane.b32.xlu0 %v3342, 16
      %v3346 = vpop.permute.xlu0 %3345
      %v3349 = vrot.slane %v3196, 3
      %v3350 = vrot.slane %v3198, 2
      %v3351 = vsel %vm3245, %v3350, %v3349
      %v3352 = vrot.slane %v3200, 1
      %v3353 = vsel %vm3248, %v3352, %v3351
      %v3354 = vsel %vm3251, %v3202, %v3353
      %v3355 = vrot.slane %v3204, 7
      %v3356 = vsel %vm3254, %v3355, %v3354
      %v3357 = vrot.slane %v3206, 6
      %v3358 = vsel %vm3257, %v3357, %v3356
      %v3359 = vrot.slane %v3208, 5
      %v3360 = vsel %vm3260, %v3359, %v3358
      %v3361 = vrot.slane %v3210, 4
      %v3362 = vsel %vm3263, %v3361, %v3360
      %v3363 = vrot.slane %v3212, 3
      %v3364 = vrot.slane %v3214, 2
      %v3365 = vsel %vm3245, %v3364, %v3363
      %v3366 = vrot.slane %v3216, 1
      %v3367 = vsel %vm3248, %v3366, %v3365
      %v3368 = vsel %vm3251, %v3218, %v3367
      %v3369 = vrot.slane %v3220, 7
      %v3370 = vsel %vm3254, %v3369, %v3368
      %v3371 = vrot.slane %v3222, 6
      %v3372 = vsel %vm3257, %v3371, %v3370
      %v3373 = vrot.slane %v3224, 5
      %v3374 = vsel %vm3260, %v3373, %v3372
      %v3375 = vrot.slane %v3226, 4
      %v3376 = vsel %vm3263, %v3375, %v3374
      %3377 = vrot.lane.b32.xlu0 %v3362, 24
      %v3378 = vpop.permute.xlu0 %3377
      %3379 = vrot.lane.b32.xlu0 %v3376, 24
      %v3380 = vpop.permute.xlu0 %3379
      %v3383 = vrot.slane %v3196, 4
      %v3384 = vrot.slane %v3198, 3
      %v3385 = vsel %vm3245, %v3384, %v3383
      %v3386 = vrot.slane %v3200, 2
      %v3387 = vsel %vm3248, %v3386, %v3385
      %v3388 = vrot.slane %v3202, 1
      %v3389 = vsel %vm3251, %v3388, %v3387
      %v3390 = vsel %vm3254, %v3204, %v3389
      %v3391 = vrot.slane %v3206, 7
      %v3392 = vsel %vm3257, %v3391, %v3390
      %v3393 = vrot.slane %v3208, 6
      %v3394 = vsel %vm3260, %v3393, %v3392
      %v3395 = vrot.slane %v3210, 5
      %v3396 = vsel %vm3263, %v3395, %v3394
      %v3397 = vrot.slane %v3212, 4
      %v3398 = vrot.slane %v3214, 3
      %v3399 = vsel %vm3245, %v3398, %v3397
      %v3400 = vrot.slane %v3216, 2
      %v3401 = vsel %vm3248, %v3400, %v3399
      %v3402 = vrot.slane %v3218, 1
      %v3403 = vsel %vm3251, %v3402, %v3401
      %v3404 = vsel %vm3254, %v3220, %v3403
      %v3405 = vrot.slane %v3222, 7
      %v3406 = vsel %vm3257, %v3405, %v3404
      %v3407 = vrot.slane %v3224, 6
      %v3408 = vsel %vm3260, %v3407, %v3406
      %v3409 = vrot.slane %v3226, 5
      %v3410 = vsel %vm3263, %v3409, %v3408
      %3411 = vrot.lane.b32.xlu0 %v3396, 32
      %v3412 = vpop.permute.xlu0 %3411
      %3413 = vrot.lane.b32.xlu0 %v3410, 32
      %v3414 = vpop.permute.xlu0 %3413
      %v3417 = vrot.slane %v3196, 5
      %v3418 = vrot.slane %v3198, 4
      %v3419 = vsel %vm3245, %v3418, %v3417
      %v3420 = vrot.slane %v3200, 3
      %v3421 = vsel %vm3248, %v3420, %v3419
      %v3422 = vrot.slane %v3202, 2
      %v3423 = vsel %vm3251, %v3422, %v3421
      %v3424 = vrot.slane %v3204, 1
      %v3425 = vsel %vm3254, %v3424, %v3423
      %v3426 = vsel %vm3257, %v3206, %v3425
      %v3427 = vrot.slane %v3208, 7
      %v3428 = vsel %vm3260, %v3427, %v3426
      %v3429 = vrot.slane %v3210, 6
      %v3430 = vsel %vm3263, %v3429, %v3428
      %v3431 = vrot.slane %v3212, 5
      %v3432 = vrot.slane %v3214, 4
      %v3433 = vsel %vm3245, %v3432, %v3431
      %v3434 = vrot.slane %v3216, 3
      %v3435 = vsel %vm3248, %v3434, %v3433
      %v3436 = vrot.slane %v3218, 2
      %v3437 = vsel %vm3251, %v3436, %v3435
      %v3438 = vrot.slane %v3220, 1
      %v3439 = vsel %vm3254, %v3438, %v3437
      %v3440 = vsel %vm3257, %v3222, %v3439
      %v3441 = vrot.slane %v3224, 7
      %v3442 = vsel %vm3260, %v3441, %v3440
      %v3443 = vrot.slane %v3226, 6
      %v3444 = vsel %vm3263, %v3443, %v3442
      %3445 = vrot.lane.b32.xlu0 %v3430, 40
      %v3446 = vpop.permute.xlu0 %3445
      %3447 = vrot.lane.b32.xlu0 %v3444, 40
      %v3448 = vpop.permute.xlu0 %3447
      %v3451 = vrot.slane %v3196, 6
      %v3452 = vrot.slane %v3198, 5
      %v3453 = vsel %vm3245, %v3452, %v3451
      %v3454 = vrot.slane %v3200, 4
      %v3455 = vsel %vm3248, %v3454, %v3453
      %v3456 = vrot.slane %v3202, 3
      %v3457 = vsel %vm3251, %v3456, %v3455
      %v3458 = vrot.slane %v3204, 2
      %v3459 = vsel %vm3254, %v3458, %v3457
      %v3460 = vrot.slane %v3206, 1
      %v3461 = vsel %vm3257, %v3460, %v3459
      %v3462 = vsel %vm3260, %v3208, %v3461
      %v3463 = vrot.slane %v3210, 7
      %v3464 = vsel %vm3263, %v3463, %v3462
      %v3465 = vrot.slane %v3212, 6
      %v3466 = vrot.slane %v3214, 5
      %v3467 = vsel %vm3245, %v3466, %v3465
      %v3468 = vrot.slane %v3216, 4
      %v3469 = vsel %vm3248, %v3468, %v3467
      %v3470 = vrot.slane %v3218, 3
      %v3471 = vsel %vm3251, %v3470, %v3469
      %v3472 = vrot.slane %v3220, 2
      %v3473 = vsel %vm3254, %v3472, %v3471
      %v3474 = vrot.slane %v3222, 1
      %v3475 = vsel %vm3257, %v3474, %v3473
      %v3476 = vsel %vm3260, %v3224, %v3475
      %v3477 = vrot.slane %v3226, 7
      %v3478 = vsel %vm3263, %v3477, %v3476
      %3479 = vrot.lane.b32.xlu0 %v3464, 48
      %v3480 = vpop.permute.xlu0 %3479
      %3481 = vrot.lane.b32.xlu0 %v3478, 48
      %v3482 = vpop.permute.xlu0 %3481
      %v3485 = vrot.slane %v3196, 7
      %v3486 = vrot.slane %v3198, 6
      %v3487 = vsel %vm3245, %v3486, %v3485
      %v3488 = vrot.slane %v3200, 5
      %v3489 = vsel %vm3248, %v3488, %v3487
      %v3490 = vrot.slane %v3202, 4
      %v3491 = vsel %vm3251, %v3490, %v3489
      %v3492 = vrot.slane %v3204, 3
      %v3493 = vsel %vm3254, %v3492, %v3491
      %v3494 = vrot.slane %v3206, 2
      %v3495 = vsel %vm3257, %v3494, %v3493
      %v3496 = vrot.slane %v3208, 1
      %v3497 = vsel %vm3260, %v3496, %v3495
      %v3498 = vsel %vm3263, %v3210, %v3497
      %v3499 = vrot.slane %v3212, 7
      %v3500 = vrot.slane %v3214, 6
      %v3501 = vsel %vm3245, %v3500, %v3499
      %v3502 = vrot.slane %v3216, 5
      %v3503 = vsel %vm3248, %v3502, %v3501
      %v3504 = vrot.slane %v3218, 4
      %v3505 = vsel %vm3251, %v3504, %v3503
      %v3506 = vrot.slane %v3220, 3
      %v3507 = vsel %vm3254, %v3506, %v3505
      %v3508 = vrot.slane %v3222, 2
      %v3509 = vsel %vm3257, %v3508, %v3507
      %v3510 = vrot.slane %v3224, 1
      %v3511 = vsel %vm3260, %v3510, %v3509
      %v3512 = vsel %vm3263, %v3226, %v3511
      %3513 = vrot.lane.b32.xlu0 %v3498, 56
      %v3514 = vpop.permute.xlu0 %3513
      %3515 = vrot.lane.b32.xlu0 %v3512, 56
      %v3516 = vpop.permute.xlu0 %3515
      %v3535 = vrot.slane %v3199, 7
      %v3536 = vsel %vm3245, %v3535, %v3197
      %v3537 = vrot.slane %v3201, 6
      %v3538 = vsel %vm3248, %v3537, %v3536
      %v3539 = vrot.slane %v3203, 5
      %v3540 = vsel %vm3251, %v3539, %v3538
      %v3541 = vrot.slane %v3205, 4
      %v3542 = vsel %vm3254, %v3541, %v3540
      %v3543 = vrot.slane %v3207, 3
      %v3544 = vsel %vm3257, %v3543, %v3542
      %v3545 = vrot.slane %v3209, 2
      %v3546 = vsel %vm3260, %v3545, %v3544
      %v3547 = vrot.slane %v3211, 1
      %v3548 = vsel %vm3263, %v3547, %v3546
      %v3549 = vrot.slane %v3215, 7
      %v3550 = vsel %vm3245, %v3549, %v3213
      %v3551 = vrot.slane %v3217, 6
      %v3552 = vsel %vm3248, %v3551, %v3550
      %v3553 = vrot.slane %v3219, 5
      %v3554 = vsel %vm3251, %v3553, %v3552
      %v3555 = vrot.slane %v3221, 4
      %v3556 = vsel %vm3254, %v3555, %v3554
      %v3557 = vrot.slane %v3223, 3
      %v3558 = vsel %vm3257, %v3557, %v3556
      %v3559 = vrot.slane %v3225, 2
      %v3560 = vsel %vm3260, %v3559, %v3558
      %v3561 = vrot.slane %v3227, 1
      %v3562 = vsel %vm3263, %v3561, %v3560
      %3563 = vrot.lane.b32.xlu0 %v3548, 64
      %v3564 = vpop.permute.xlu0 %3563
      %3565 = vrot.lane.b32.xlu0 %v3562, 64
      %v3566 = vpop.permute.xlu0 %3565
      %v3569 = vrot.slane %v3197, 1
      %v3570 = vsel %vm3245, %v3199, %v3569
      %v3571 = vrot.slane %v3201, 7
      %v3572 = vsel %vm3248, %v3571, %v3570
      %v3573 = vrot.slane %v3203, 6
      %v3574 = vsel %vm3251, %v3573, %v3572
      %v3575 = vrot.slane %v3205, 5
      %v3576 = vsel %vm3254, %v3575, %v3574
      %v3577 = vrot.slane %v3207, 4
      %v3578 = vsel %vm3257, %v3577, %v3576
      %v3579 = vrot.slane %v3209, 3
      %v3580 = vsel %vm3260, %v3579, %v3578
      %v3581 = vrot.slane %v3211, 2
      %v3582 = vsel %vm3263, %v3581, %v3580
      %v3583 = vrot.slane %v3213, 1
      %v3584 = vsel %vm3245, %v3215, %v3583
      %v3585 = vrot.slane %v3217, 7
      %v3586 = vsel %vm3248, %v3585, %v3584
      %v3587 = vrot.slane %v3219, 6
      %v3588 = vsel %vm3251, %v3587, %v3586
      %v3589 = vrot.slane %v3221, 5
      %v3590 = vsel %vm3254, %v3589, %v3588
      %v3591 = vrot.slane %v3223, 4
      %v3592 = vsel %vm3257, %v3591, %v3590
      %v3593 = vrot.slane %v3225, 3
      %v3594 = vsel %vm3260, %v3593, %v3592
      %v3595 = vrot.slane %v3227, 2
      %v3596 = vsel %vm3263, %v3595, %v3594
      %3597 = vrot.lane.b32.xlu0 %v3582, 72
      %v3598 = vpop.permute.xlu0 %3597
      %3599 = vrot.lane.b32.xlu0 %v3596, 72
      %v3600 = vpop.permute.xlu0 %3599
      %v3603 = vrot.slane %v3197, 2
      %v3604 = vrot.slane %v3199, 1
      %v3605 = vsel %vm3245, %v3604, %v3603
      %v3606 = vsel %vm3248, %v3201, %v3605
      %v3607 = vrot.slane %v3203, 7
      %v3608 = vsel %vm3251, %v3607, %v3606
      %v3609 = vrot.slane %v3205, 6
      %v3610 = vsel %vm3254, %v3609, %v3608
      %v3611 = vrot.slane %v3207, 5
      %v3612 = vsel %vm3257, %v3611, %v3610
      %v3613 = vrot.slane %v3209, 4
      %v3614 = vsel %vm3260, %v3613, %v3612
      %v3615 = vrot.slane %v3211, 3
      %v3616 = vsel %vm3263, %v3615, %v3614
      %v3617 = vrot.slane %v3213, 2
      %v3618 = vrot.slane %v3215, 1
      %v3619 = vsel %vm3245, %v3618, %v3617
      %v3620 = vsel %vm3248, %v3217, %v3619
      %v3621 = vrot.slane %v3219, 7
      %v3622 = vsel %vm3251, %v3621, %v3620
      %v3623 = vrot.slane %v3221, 6
      %v3624 = vsel %vm3254, %v3623, %v3622
      %v3625 = vrot.slane %v3223, 5
      %v3626 = vsel %vm3257, %v3625, %v3624
      %v3627 = vrot.slane %v3225, 4
      %v3628 = vsel %vm3260, %v3627, %v3626
      %v3629 = vrot.slane %v3227, 3
      %v3630 = vsel %vm3263, %v3629, %v3628
      %3631 = vrot.lane.b32.xlu0 %v3616, 80
      %v3632 = vpop.permute.xlu0 %3631
      %3633 = vrot.lane.b32.xlu0 %v3630, 80
      %v3634 = vpop.permute.xlu0 %3633
      %v3637 = vrot.slane %v3197, 3
      %v3638 = vrot.slane %v3199, 2
      %v3639 = vsel %vm3245, %v3638, %v3637
      %v3640 = vrot.slane %v3201, 1
      %v3641 = vsel %vm3248, %v3640, %v3639
      %v3642 = vsel %vm3251, %v3203, %v3641
      %v3643 = vrot.slane %v3205, 7
      %v3644 = vsel %vm3254, %v3643, %v3642
      %v3645 = vrot.slane %v3207, 6
      %v3646 = vsel %vm3257, %v3645, %v3644
      %v3647 = vrot.slane %v3209, 5
      %v3648 = vsel %vm3260, %v3647, %v3646
      %v3649 = vrot.slane %v3211, 4
      %v3650 = vsel %vm3263, %v3649, %v3648
      %v3651 = vrot.slane %v3213, 3
      %v3652 = vrot.slane %v3215, 2
      %v3653 = vsel %vm3245, %v3652, %v3651
      %v3654 = vrot.slane %v3217, 1
      %v3655 = vsel %vm3248, %v3654, %v3653
      %v3656 = vsel %vm3251, %v3219, %v3655
      %v3657 = vrot.slane %v3221, 7
      %v3658 = vsel %vm3254, %v3657, %v3656
      %v3659 = vrot.slane %v3223, 6
      %v3660 = vsel %vm3257, %v3659, %v3658
      %v3661 = vrot.slane %v3225, 5
      %v3662 = vsel %vm3260, %v3661, %v3660
      %v3663 = vrot.slane %v3227, 4
      %v3664 = vsel %vm3263, %v3663, %v3662
      %3665 = vrot.lane.b32.xlu0 %v3650, 88
      %v3666 = vpop.permute.xlu0 %3665
      %3667 = vrot.lane.b32.xlu0 %v3664, 88
      %v3668 = vpop.permute.xlu0 %3667
      %v3671 = vrot.slane %v3197, 4
      %v3672 = vrot.slane %v3199, 3
      %v3673 = vsel %vm3245, %v3672, %v3671
      %v3674 = vrot.slane %v3201, 2
      %v3675 = vsel %vm3248, %v3674, %v3673
      %v3676 = vrot.slane %v3203, 1
      %v3677 = vsel %vm3251, %v3676, %v3675
      %v3678 = vsel %vm3254, %v3205, %v3677
      %v3679 = vrot.slane %v3207, 7
      %v3680 = vsel %vm3257, %v3679, %v3678
      %v3681 = vrot.slane %v3209, 6
      %v3682 = vsel %vm3260, %v3681, %v3680
      %v3683 = vrot.slane %v3211, 5
      %v3684 = vsel %vm3263, %v3683, %v3682
      %v3685 = vrot.slane %v3213, 4
      %v3686 = vrot.slane %v3215, 3
      %v3687 = vsel %vm3245, %v3686, %v3685
      %v3688 = vrot.slane %v3217, 2
      %v3689 = vsel %vm3248, %v3688, %v3687
      %v3690 = vrot.slane %v3219, 1
      %v3691 = vsel %vm3251, %v3690, %v3689
      %v3692 = vsel %vm3254, %v3221, %v3691
      %v3693 = vrot.slane %v3223, 7
      %v3694 = vsel %vm3257, %v3693, %v3692
      %v3695 = vrot.slane %v3225, 6
      %v3696 = vsel %vm3260, %v3695, %v3694
      %v3697 = vrot.slane %v3227, 5
      %v3698 = vsel %vm3263, %v3697, %v3696
      %3699 = vrot.lane.b32.xlu0 %v3684, 96
      %v3700 = vpop.permute.xlu0 %3699
      %3701 = vrot.lane.b32.xlu0 %v3698, 96
      %v3702 = vpop.permute.xlu0 %3701
      %v3705 = vrot.slane %v3197, 5
      %v3706 = vrot.slane %v3199, 4
      %v3707 = vsel %vm3245, %v3706, %v3705
      %v3708 = vrot.slane %v3201, 3
      %v3709 = vsel %vm3248, %v3708, %v3707
      %v3710 = vrot.slane %v3203, 2
      %v3711 = vsel %vm3251, %v3710, %v3709
      %v3712 = vrot.slane %v3205, 1
      %v3713 = vsel %vm3254, %v3712, %v3711
      %v3714 = vsel %vm3257, %v3207, %v3713
      %v3715 = vrot.slane %v3209, 7
      %v3716 = vsel %vm3260, %v3715, %v3714
      %v3717 = vrot.slane %v3211, 6
      %v3718 = vsel %vm3263, %v3717, %v3716
      %v3719 = vrot.slane %v3213, 5
      %v3720 = vrot.slane %v3215, 4
      %v3721 = vsel %vm3245, %v3720, %v3719
      %v3722 = vrot.slane %v3217, 3
      %v3723 = vsel %vm3248, %v3722, %v3721
      %v3724 = vrot.slane %v3219, 2
      %v3725 = vsel %vm3251, %v3724, %v3723
      %v3726 = vrot.slane %v3221, 1
      %v3727 = vsel %vm3254, %v3726, %v3725
      %v3728 = vsel %vm3257, %v3223, %v3727
      %v3729 = vrot.slane %v3225, 7
      %v3730 = vsel %vm3260, %v3729, %v3728
      %v3731 = vrot.slane %v3227, 6
      %v3732 = vsel %vm3263, %v3731, %v3730
      %3733 = vrot.lane.b32.xlu0 %v3718, 104
      %v3734 = vpop.permute.xlu0 %3733
      %3735 = vrot.lane.b32.xlu0 %v3732, 104
      %v3736 = vpop.permute.xlu0 %3735
      %v3739 = vrot.slane %v3197, 6
      %v3740 = vrot.slane %v3199, 5
      %v3741 = vsel %vm3245, %v3740, %v3739
      %v3742 = vrot.slane %v3201, 4
      %v3743 = vsel %vm3248, %v3742, %v3741
      %v3744 = vrot.slane %v3203, 3
      %v3745 = vsel %vm3251, %v3744, %v3743
      %v3746 = vrot.slane %v3205, 2
      %v3747 = vsel %vm3254, %v3746, %v3745
      %v3748 = vrot.slane %v3207, 1
      %v3749 = vsel %vm3257, %v3748, %v3747
      %v3750 = vsel %vm3260, %v3209, %v3749
      %v3751 = vrot.slane %v3211, 7
      %v3752 = vsel %vm3263, %v3751, %v3750
      %v3753 = vrot.slane %v3213, 6
      %v3754 = vrot.slane %v3215, 5
      %v3755 = vsel %vm3245, %v3754, %v3753
      %v3756 = vrot.slane %v3217, 4
      %v3757 = vsel %vm3248, %v3756, %v3755
      %v3758 = vrot.slane %v3219, 3
      %v3759 = vsel %vm3251, %v3758, %v3757
      %v3760 = vrot.slane %v3221, 2
      %v3761 = vsel %vm3254, %v3760, %v3759
      %v3762 = vrot.slane %v3223, 1
      %v3763 = vsel %vm3257, %v3762, %v3761
      %v3764 = vsel %vm3260, %v3225, %v3763
      %v3765 = vrot.slane %v3227, 7
      %v3766 = vsel %vm3263, %v3765, %v3764
      %3767 = vrot.lane.b32.xlu0 %v3752, 112
      %v3768 = vpop.permute.xlu0 %3767
      %3769 = vrot.lane.b32.xlu0 %v3766, 112
      %v3770 = vpop.permute.xlu0 %3769
      %v3773 = vrot.slane %v3197, 7
      %v3774 = vrot.slane %v3199, 6
      %v3775 = vsel %vm3245, %v3774, %v3773
      %v3776 = vrot.slane %v3201, 5
      %v3777 = vsel %vm3248, %v3776, %v3775
      %v3778 = vrot.slane %v3203, 4
      %v3779 = vsel %vm3251, %v3778, %v3777
      %v3780 = vrot.slane %v3205, 3
      %v3781 = vsel %vm3254, %v3780, %v3779
      %v3782 = vrot.slane %v3207, 2
      %v3783 = vsel %vm3257, %v3782, %v3781
      %v3784 = vrot.slane %v3209, 1
      %v3785 = vsel %vm3260, %v3784, %v3783
      %v3786 = vsel %vm3263, %v3211, %v3785
      %v3787 = vrot.slane %v3213, 7
      %v3788 = vrot.slane %v3215, 6
      %v3789 = vsel %vm3245, %v3788, %v3787
      %v3790 = vrot.slane %v3217, 5
      %v3791 = vsel %vm3248, %v3790, %v3789
      %v3792 = vrot.slane %v3219, 4
      %v3793 = vsel %vm3251, %v3792, %v3791
      %v3794 = vrot.slane %v3221, 3
      %v3795 = vsel %vm3254, %v3794, %v3793
      %v3796 = vrot.slane %v3223, 2
      %v3797 = vsel %vm3257, %v3796, %v3795
      %v3798 = vrot.slane %v3225, 1
      %v3799 = vsel %vm3260, %v3798, %v3797
      %v3800 = vsel %vm3263, %v3227, %v3799
      %3801 = vrot.lane.b32.xlu0 %v3786, 120
      %v3802 = vpop.permute.xlu0 %3801
      %3803 = vrot.lane.b32.xlu0 %v3800, 120
      %v3804 = vpop.permute.xlu0 %3803
      %v3807 = vsel %vm269, %v3264, %v3310
      %v3808 = vsel %vm269, %v3278, %v3312
      %vm3809 = vcmask 130048
      %v3810 = vsel %vm3809, %v3807, %v3344
      %v3811 = vsel %vm3809, %v3808, %v3346
      %vm3812 = vcmask 195584
      %v3813 = vsel %vm3812, %v3810, %v3378
      %v3814 = vsel %vm3812, %v3811, %v3380
      %vm3815 = vcmask 261120
      %v3816 = vsel %vm3815, %v3813, %v3412
      %v3817 = vsel %vm3815, %v3814, %v3414
      %vm3818 = vcmask 326656
      %v3819 = vsel %vm3818, %v3816, %v3446
      %v3820 = vsel %vm3818, %v3817, %v3448
      %vm3821 = vcmask 392192
      %v3822 = vsel %vm3821, %v3819, %v3480
      %v3823 = vsel %vm3821, %v3820, %v3482
      %vm3824 = vcmask 457728
      %v3825 = vsel %vm3824, %v3822, %v3514
      %v3826 = vsel %vm3824, %v3823, %v3516
      %vm3827 = vcmask 523264
      %v3828 = vsel %vm3827, %v3825, %v3564
      %v3829 = vsel %vm3827, %v3826, %v3566
      %v3830 = vsel %vm2982, %v3828, %v3598
      %v3831 = vsel %vm2982, %v3829, %v3600
      %vm3832 = vcmask 654336
      %v3833 = vsel %vm3832, %v3830, %v3632
      %v3834 = vsel %vm3832, %v3831, %v3634
      %vm3835 = vcmask 719872
      %v3836 = vsel %vm3835, %v3833, %v3666
      %v3837 = vsel %vm3835, %v3834, %v3668
      %vm3838 = vcmask 785408
      %v3839 = vsel %vm3838, %v3836, %v3700
      %v3840 = vsel %vm3838, %v3837, %v3702
      %vm3841 = vcmask 850944
      %v3842 = vsel %vm3841, %v3839, %v3734
      %v3843 = vsel %vm3841, %v3840, %v3736
      %vm3844 = vcmask 916480
      %v3845 = vsel %vm3844, %v3842, %v3768
      %v3846 = vsel %vm3844, %v3843, %v3770
      %vm3847 = vcmask 982016
      %v3848 = vsel %vm3847, %v3845, %v3802
      %v3849 = vsel %vm3847, %v3846, %v3804
      %3850 = vst [vmem:[%s224] sm:$0xff] %v3848
      %3851 = vst [vmem:[%s224 + $0x8] sm:$0xff] %v3849
      %p3852 = scmp.lt.s32.totalorder %s16, 1
      %s3853 = scalar_select %p3852, %s16, 1
      %s3854 = smul.addr %s3853, 2
      %s3855 = smul.addr %s3854, 8
      %s3856 = scalar_lea.vmem %s5, %s3855
      // Predicated region
      $region41: #{ccb_forward.1} parent=39 // pred_check
        %p3857 = pneg %p144
      $region42: #{ccb_forward.1} parent=39 // pred_check_branch
        %3859 = sbr.rel (%p3857) target = $region44
      $region43: #{ccb_forward.1} parent=39 // pred_region
        _
      $region44: #{ccb_forward.1} parent=39 // pred_fallthru
        _
    $region40: #{ccb_forward.1} parent=5 // pred_fallthru
      _
    %p3860 = scmp.le.s32.totalorder 2, %s11
    // Predicated region
    $region45: #{ccb_forward.1} parent=5 // pred_check
      %p3861 = pneg %p3860
    $region46: #{ccb_forward.1} parent=5 // pred_check_branch
      %3863 = sbr.rel (%p3861) target = $region48
    $region47: #{ccb_forward.1} parent=5 // pred_region
      %s3864 = ssub.s32 %s11, 2
      // Predicated region
      $region49: #{ccb_forward.1} parent=47 // pred_check
        %p3865 = pneg %p150
      $region50: #{ccb_forward.1} parent=47 // pred_check_branch
        %3867 = sbr.rel (%p3865) target = $region52
      $region51: #{ccb_forward.1} parent=47 // pred_region
        %p3868 = scmp.lt.s32.totalorder %s17, 1
        %s3869 = scalar_select %p3868, %s17, 1
        %s3870 = smul.addr %s3869, 2
        %s3871 = smul.addr %s3870, 8
        %s3872 = scalar_lea.vmem %s5, %s3871
      $region52: #{ccb_forward.1} parent=47 // pred_fallthru
        _
    $region48: #{ccb_forward.1} parent=5 // pred_fallthru
      _
  $region6: #{ccb_forward.1} parent=0 // loop_footer
    %s15 = sadd.s32 1, %s11
  $region7: #{ccb_forward.1} parent=0 // loop_footer_branch
    %10 = sbr.rel target = $region3
  $region8: #{ccb_forward.1} parent=0 // loop_exit
    _

</llo_original>
